<compile_context>
chip_gen: v5e
topology: v5e:2x2
jax: 0.10.0
libtpu: 0.0.40
codegen_flags: <defaults>
</compile_context>

<pallas_src>
import numpy as np

import jax
import jax.numpy as jnp
from jax.experimental import pallas as pl
from jax.experimental.pallas import tpu as pltpu


_VMEM_SPEC = pl.BlockSpec(memory_space=pltpu.MemorySpace.VMEM)

# Canonical LeNet-5 geometry (implied by the 400 -> 120 -> 84 -> 10 classifier).
_H = 32           # input spatial size, C_in = 1
_KH = 5           # conv kernel size
_HO1, _WO1H = 28, 14       # conv1 output rows, pooled width (28 // 2)
_N1 = 6 * _WO1H            # conv1 matmul N: (out_channel, x') packed on lanes = 84
_HP1 = 14                  # pooled1 spatial size
_HO2, _WO2H = 10, 5        # conv2 output rows, pooled width
_N2 = 16 * _WO2H           # conv2 matmul N = 80
_HP2 = 5                   # pooled2 spatial size
_FCPAD = 128               # lane-dense fc width (120 / 84 / 10 zero-padded)


# ---------------------------------------------------------------------------
# Fused LeNet kernel: conv1 -> pool+relu -> conv2 -> pool+relu -> fc1/fc2/fc3
# ---------------------------------------------------------------------------
def _lenet_kernel(x_ref, s1_ref, b1_ref, s2_ref, b2_ref,
                  w1_ref, bf1_ref, w2_ref, bf2_ref, w3_ref, bf3_ref,
                  out_ref, c1_scr, p1_scr, c2_scr, fc_scr):
    B = x_ref.shape[0]
    f32 = jnp.float32
    bias1 = b1_ref[...]                     # (1, 84)  conv1 bias repeated per x'
    bias2 = b2_ref[...]                     # (1, 80)  conv2 bias repeated per x'

    for b in range(B):
        # ---- conv1 (bias deferred), split by pooling x-phase px in {0,1} ----
        #   conv1_px[y, o*14 + x'] = sum_i  x[b, y+i, :] @ S1[px, i]
        for px in range(2):
            acc = jnp.dot(x_ref[b, 0:_HO1, :], s1_ref[px, 0, :, :],
                          preferred_element_type=f32)
            for i in range(1, _KH):
                acc = acc + jnp.dot(x_ref[b, i:i + _HO1, :], s1_ref[px, i, :, :],
                                    preferred_element_type=f32)
            c1_scr[px, :, :] = acc                                   # (28, 84)

        # ---- 2x2 max-pool + bias + ReLU -> pooled1 (14, 84), lanes [o*14+x']
        for yp in range(_HP1):
            m = jnp.maximum(
                jnp.maximum(c1_scr[0, 2 * yp:2 * yp + 1, :],
                            c1_scr[0, 2 * yp + 1:2 * yp + 2, :]),
                jnp.maximum(c1_scr[1, 2 * yp:2 * yp + 1, :],
                            c1_scr[1, 2 * yp + 1:2 * yp + 2, :]))
            p1_scr[yp:yp + 1, :] = jnp.maximum(m + bias1, 0.0)

        # ---- conv2: same banded trick; channel sum folded into K (84 lanes) -
        #   conv2_px[y, o*5 + x'] = sum_i  pooled1[y+i, :] @ S2[px, i]
        for px in range(2):
            acc = jnp.dot(p1_scr[0:_HO2, :], s2_ref[px, 0, :, :],
                          preferred_element_type=f32)
            for i in range(1, _KH):
                acc = acc + jnp.dot(p1_scr[i:i + _HO2, :], s2_ref[px, i, :, :],
                                    preferred_element_type=f32)
            c2_scr[px, :, :] = acc                                   # (10, 80)

        # ---- pool2 + bias + ReLU, rows land directly in the fc-input scratch
        for yp in range(_HP2):
            m = jnp.maximum(
                jnp.maximum(c2_scr[0, 2 * yp:2 * yp + 1, :],
                            c2_scr[0, 2 * yp + 1:2 * yp + 2, :]),
                jnp.maximum(c2_scr[1, 2 * yp:2 * yp + 1, :],
                            c2_scr[1, 2 * yp + 1:2 * yp + 2, :]))
            fc_scr[yp, b:b + 1, :] = jnp.maximum(m + bias2, 0.0)

    # -------------------- fc stack, all batch rows at once -------------------
    # fc1 contracts over the 5 pooled rows x 80 packed (o, x') lanes.
    a1 = jnp.dot(fc_scr[0, :, :], w1_ref[0, :, :], preferred_element_type=f32)
    for yp in range(1, _HP2):
        a1 = a1 + jnp.dot(fc_scr[yp, :, :], w1_ref[yp, :, :],
                          preferred_element_type=f32)
    h1 = jnp.maximum(a1 + bf1_ref[...], 0.0)                          # (B, 128)
    h2 = jnp.maximum(jnp.dot(h1, w2_ref[...], preferred_element_type=f32)
                     + bf2_ref[...], 0.0)                             # (B, 128)
    out_ref[...] = (jnp.dot(h2, w3_ref[...], preferred_element_type=f32)
                    + bf3_ref[...])                # (B, 128); logits in [:, :10]


# ---------------------------------------------------------------------------
# One-time host-side weight preparation (hoisted out of the forward pass)
# ---------------------------------------------------------------------------
def _banded_conv_matrices(w, in_width):
    """Fold x-window, output channels and pooling x-phase of a valid stride-1
    conv into a matmul RHS.  w: (O, C, kh, kw).  Returns S with shape
    (2, kh, C*in_width, O*(out_width//2)) such that for x-phase px and
    vertical tap i:   conv_px[y, o*Woh + x'] = sum_i rows[y+i, :] @ S[px, i],
    where rows is the channel-packed (H, C*in_width) input and conv_px[y, x']
    is the conv value at spatial position (y, 2*x'+px)."""
    O, C, kh, kw = w.shape
    woh = (in_width - kw + 1) // 2
    wn = np.asarray(w, np.float32)
    S = np.zeros((2, kh, C, in_width, O, woh), np.float32)
    for px in range(2):
        for i in range(kh):
            for j in range(kw):
                for xp in range(woh):
                    # S[px, i, c, 2*xp+px+j, o, xp] = w[o, c, i, j]
                    S[px, i, :, 2 * xp + px + j, :, xp] = wn[:, :, i, j].T
    return S.reshape(2, kh, C * in_width, O * woh)


def prepare_params(params):
    w1 = np.asarray(params["conv1_w"], np.float32)     # (6, 1, 5, 5)
    w2 = np.asarray(params["conv2_w"], np.float32)     # (16, 6, 5, 5)
    b1 = np.asarray(params["conv1_b"], np.float32)
    b2 = np.asarray(params["conv2_b"], np.float32)
    f1w = np.asarray(params["fc1_w"], np.float32)      # (120, 400)
    f2w = np.asarray(params["fc2_w"], np.float32)      # (84, 120)
    f3w = np.asarray(params["fc3_w"], np.float32)      # (10, 84)
    f1b = np.asarray(params["fc1_b"], np.float32)
    f2b = np.asarray(params["fc2_b"], np.float32)
    f3b = np.asarray(params["fc3_b"], np.float32)

    s1 = _banded_conv_matrices(w1, in_width=_H)        # (2, 5, 32, 84)
    s2 = _banded_conv_matrices(w2, in_width=_HP1)      # (2, 5, 84, 80)
    b1r = np.repeat(b1, _WO1H).reshape(1, _N1)         # bias per (o, x') lane
    b2r = np.repeat(b2, _WO2H).reshape(1, _N2)

    # fc1: permute flattened-input order from PyTorch's (o, y, x) to the
    # kernel's (y, o, x) layout, transpose to (K, N) and zero-pad N -> 128.
    t = f1w.reshape(120, 16, 5, 5).transpose(2, 1, 3, 0).reshape(_HP2, _N2, 120)
    w1p = np.zeros((_HP2, _N2, _FCPAD), np.float32); w1p[:, :, :120] = t
    bf1 = np.zeros((1, _FCPAD), np.float32);         bf1[0, :120] = f1b
    w2p = np.zeros((_FCPAD, _FCPAD), np.float32);    w2p[:120, :84] = f2w.T
    bf2 = np.zeros((1, _FCPAD), np.float32);         bf2[0, :84] = f2b
    w3p = np.zeros((_FCPAD, _FCPAD), np.float32);    w3p[:84, :10] = f3w.T
    bf3 = np.zeros((1, _FCPAD), np.float32);         bf3[0, :10] = f3b

    prepped = dict(s1=s1, b1r=b1r, s2=s2, b2r=b2r, w1p=w1p, bf1=bf1,
                   w2p=w2p, bf2=bf2, w3p=w3p, bf3=bf3)
    return {k: jnp.asarray(v) for k, v in prepped.items()}


# ---------------------------------------------------------------------------
# Forward wrapper (single pallas_call)
# ---------------------------------------------------------------------------
def lenet_forward(prepared, x):
    """x: (B, 1, 32, 32) float32 NCHW -> logits (B, 10)."""
    B = x.shape[0]
    xs = x[:, 0, :, :].astype(jnp.float32)             # C_in = 1 -> (B, 32, 32)
    out = pl.pallas_call(
        _lenet_kernel,
        out_shape=jax.ShapeDtypeStruct((B, _FCPAD), jnp.float32),
        in_specs=[_VMEM_SPEC] * 11,
        out_specs=_VMEM_SPEC,
        scratch_shapes=[
            pltpu.VMEM((2, _HO1, _N1), jnp.float32),    # conv1 full-res per x-phase
            pltpu.VMEM((_HP1, _N1), jnp.float32),       # pooled1 (channel-packed lanes)
            pltpu.VMEM((2, _HO2, _N2), jnp.float32),    # conv2 full-res per x-phase
            pltpu.VMEM((_HP2, B, _N2), jnp.float32),    # fc input, one slab per pooled row
        ],
    )(xs, prepared["s1"], prepared["b1r"], prepared["s2"], prepared["b2r"],
      prepared["w1p"], prepared["bf1"], prepared["w2p"], prepared["bf2"],
      prepared["w3p"], prepared["bf3"])
    return out[:, :10]


# ---------------------------------------------------------------------------
# Pure-JAX reference (matches the PyTorch module) + params
# ---------------------------------------------------------------------------
def lenet_reference(params, x):
    dn = ("NCHW", "OIHW", "NCHW")
    hp = jax.lax.Precision.HIGHEST
    y = jax.lax.conv_general_dilated(x, params["conv1_w"], (1, 1), "VALID",
                                     dimension_numbers=dn, precision=hp)
    y = y + params["conv1_b"].reshape(1, -1, 1, 1)
    y = jax.lax.reduce_window(y, -jnp.inf, jax.lax.max,
                              (1, 1, 2, 2), (1, 1, 2, 2), "VALID")
    y = jnp.maximum(y, 0.0)
    y = jax.lax.conv_general_dilated(y, params["conv2_w"], (1, 1), "VALID",
                                     dimension_numbers=dn, precision=hp)
    y = y + params["conv2_b"].reshape(1, -1, 1, 1)
    y = jax.lax.reduce_window(y, -jnp.inf, jax.lax.max,
                              (1, 1, 2, 2), (1, 1, 2, 2), "VALID")
    y = jnp.maximum(y, 0.0)
    y = y.reshape(y.shape[0], -1)
    y = jnp.maximum(jnp.dot(y, params["fc1_w"].T, precision=hp) + params["fc1_b"], 0.0)
    y = jnp.maximum(jnp.dot(y, params["fc2_w"].T, precision=hp) + params["fc2_b"], 0.0)
    return jnp.dot(y, params["fc3_w"].T, precision=hp) + params["fc3_b"]


def init_params(key):
    ks = jax.random.split(key, 10)
    def u(k, shape, fan_in):
        bound = 1.0 / jnp.sqrt(fan_in)
        return jax.random.uniform(k, shape, jnp.float32, -bound, bound)
    return {
        "conv1_w": u(ks[0], (6, 1, 5, 5), 25),  "conv1_b": u(ks[1], (6,), 25),
        "conv2_w": u(ks[2], (16, 6, 5, 5), 150), "conv2_b": u(ks[3], (16,), 150),
        "fc1_w": u(ks[4], (120, 400), 400),      "fc1_b": u(ks[5], (120,), 400),
        "fc2_w": u(ks[6], (84, 120), 120),       "fc2_b": u(ks[7], (84,), 120),
        "fc3_w": u(ks[8], (10, 84), 84),         "fc3_b": u(ks[9], (10,), 84),
    }


if __name__ == "__main__":
    key = jax.random.PRNGKey(0)
    pkey, xkey = jax.random.split(key)
    params = init_params(pkey)
    x = jax.random.normal(xkey, (2, 1, 32, 32), jnp.float32)   # NCHW, B=2

    prepared = prepare_params(params)          # weight prep: once, outside jit
    fwd = jax.jit(lenet_forward)
    out = jax.block_until_ready(fwd(prepared, x))

    assert out.shape == (2, 10), out.shape
    assert out.dtype == jnp.float32

    ref = jax.block_until_ready(lenet_reference(params, x))
    assert jnp.allclose(out, ref, atol=2e-2, rtol=2e-2), (
        "kernel/reference mismatch", np.abs(np.asarray(out - ref)).max())

    print("KERNEL_OK")
</pallas_src>

<mosaic_0001>
module attributes {stable_mosaic.version = 11 : i64} {
  func.func @_lenet_kernel(%arg0: memref<2x32x32xf32, #tpu.memory_space<vmem>>, %arg1: memref<2x5x32x84xf32, #tpu.memory_space<vmem>>, %arg2: memref<1x84xf32, #tpu.memory_space<vmem>>, %arg3: memref<2x5x84x80xf32, #tpu.memory_space<vmem>>, %arg4: memref<1x80xf32, #tpu.memory_space<vmem>>, %arg5: memref<5x80x128xf32, #tpu.memory_space<vmem>>, %arg6: memref<1x128xf32, #tpu.memory_space<vmem>>, %arg7: memref<128x128xf32, #tpu.memory_space<vmem>>, %arg8: memref<1x128xf32, #tpu.memory_space<vmem>>, %arg9: memref<128x128xf32, #tpu.memory_space<vmem>>, %arg10: memref<1x128xf32, #tpu.memory_space<vmem>>, %arg11: memref<2x128xf32, #tpu.memory_space<vmem>>, %arg12: memref<2x28x84xf32, #tpu.memory_space<vmem>>, %arg13: memref<14x84xf32, #tpu.memory_space<vmem>>, %arg14: memref<2x10x80xf32, #tpu.memory_space<vmem>>, %arg15: memref<5x2x80xf32, #tpu.memory_space<vmem>>) attributes {dimension_semantics = [], scalar_prefetch = 0 : i64, scratch_operands = 4 : i64, tpu.core_type = #tpu.core_type<tc>} {
    %c0 = arith.constant 0 : index
    %c0_0 = arith.constant 0 : index
    %0 = vector.load %arg2[%c0, %c0_0] : memref<1x84xf32, #tpu.memory_space<vmem>>, vector<1x84xf32>
    %c0_1 = arith.constant 0 : index
    %c0_2 = arith.constant 0 : index
    %1 = vector.load %arg4[%c0_1, %c0_2] : memref<1x80xf32, #tpu.memory_space<vmem>>, vector<1x80xf32>
    %c0_3 = arith.constant 0 : index
    %c0_4 = arith.constant 0 : index
    %c0_5 = arith.constant 0 : index
    %2 = vector.load %arg0[%c0_3, %c0_4, %c0_5] : memref<2x32x32xf32, #tpu.memory_space<vmem>>, vector<1x28x32xf32>
    %3 = vector.shape_cast %2 : vector<1x28x32xf32> to vector<28x32xf32>
    %c0_6 = arith.constant 0 : index
    %c0_7 = arith.constant 0 : index
    %c0_8 = arith.constant 0 : index
    %c0_9 = arith.constant 0 : index
    %4 = vector.load %arg1[%c0_6, %c0_7, %c0_8, %c0_9] : memref<2x5x32x84xf32, #tpu.memory_space<vmem>>, vector<1x1x32x84xf32>
    %5 = vector.shape_cast %4 : vector<1x1x32x84xf32> to vector<32x84xf32>
    %cst = arith.constant dense<0.000000e+00> : vector<28x84xf32>
    %6 = tpu.matmul %3, %5, %cst {dimension_numbers = #tpu.dot_dimension_numbers<[1], [0], [0], [1], [0, 0, 1, 1], [], []>} : vector<28x32xf32>, vector<32x84xf32>, vector<28x84xf32> -> vector<28x84xf32>
    %c0_10 = arith.constant 0 : index
    %c1 = arith.constant 1 : index
    %c0_11 = arith.constant 0 : index
    %7 = vector.load %arg0[%c0_10, %c1, %c0_11] : memref<2x32x32xf32, #tpu.memory_space<vmem>>, vector<1x28x32xf32>
    %8 = vector.shape_cast %7 : vector<1x28x32xf32> to vector<28x32xf32>
    %c0_12 = arith.constant 0 : index
    %c1_13 = arith.constant 1 : index
    %c0_14 = arith.constant 0 : index
    %c0_15 = arith.constant 0 : index
    %9 = vector.load %arg1[%c0_12, %c1_13, %c0_14, %c0_15] : memref<2x5x32x84xf32, #tpu.memory_space<vmem>>, vector<1x1x32x84xf32>
    %10 = vector.shape_cast %9 : vector<1x1x32x84xf32> to vector<32x84xf32>
    %cst_16 = arith.constant dense<0.000000e+00> : vector<28x84xf32>
    %11 = tpu.matmul %8, %10, %cst_16 {dimension_numbers = #tpu.dot_dimension_numbers<[1], [0], [0], [1], [0, 0, 1, 1], [], []>} : vector<28x32xf32>, vector<32x84xf32>, vector<28x84xf32> -> vector<28x84xf32>
    %12 = arith.addf %6, %11 : vector<28x84xf32>
    %c0_17 = arith.constant 0 : index
    %c2 = arith.constant 2 : index
    %c0_18 = arith.constant 0 : index
    %13 = vector.load %arg0[%c0_17, %c2, %c0_18] : memref<2x32x32xf32, #tpu.memory_space<vmem>>, vector<1x28x32xf32>
    %14 = vector.shape_cast %13 : vector<1x28x32xf32> to vector<28x32xf32>
    %c0_19 = arith.constant 0 : index
    %c2_20 = arith.constant 2 : index
    %c0_21 = arith.constant 0 : index
    %c0_22 = arith.constant 0 : index
    %15 = vector.load %arg1[%c0_19, %c2_20, %c0_21, %c0_22] : memref<2x5x32x84xf32, #tpu.memory_space<vmem>>, vector<1x1x32x84xf32>
    %16 = vector.shape_cast %15 : vector<1x1x32x84xf32> to vector<32x84xf32>
    %cst_23 = arith.constant dense<0.000000e+00> : vector<28x84xf32>
    %17 = tpu.matmul %14, %16, %cst_23 {dimension_numbers = #tpu.dot_dimension_numbers<[1], [0], [0], [1], [0, 0, 1, 1], [], []>} : vector<28x32xf32>, vector<32x84xf32>, vector<28x84xf32> -> vector<28x84xf32>
    %18 = arith.addf %12, %17 : vector<28x84xf32>
    %c0_24 = arith.constant 0 : index
    %c3 = arith.constant 3 : index
    %c0_25 = arith.constant 0 : index
    %19 = vector.load %arg0[%c0_24, %c3, %c0_25] : memref<2x32x32xf32, #tpu.memory_space<vmem>>, vector<1x28x32xf32>
    %20 = vector.shape_cast %19 : vector<1x28x32xf32> to vector<28x32xf32>
    %c0_26 = arith.constant 0 : index
    %c3_27 = arith.constant 3 : index
    %c0_28 = arith.constant 0 : index
    %c0_29 = arith.constant 0 : index
    %21 = vector.load %arg1[%c0_26, %c3_27, %c0_28, %c0_29] : memref<2x5x32x84xf32, #tpu.memory_space<vmem>>, vector<1x1x32x84xf32>
    %22 = vector.shape_cast %21 : vector<1x1x32x84xf32> to vector<32x84xf32>
    %cst_30 = arith.constant dense<0.000000e+00> : vector<28x84xf32>
    %23 = tpu.matmul %20, %22, %cst_30 {dimension_numbers = #tpu.dot_dimension_numbers<[1], [0], [0], [1], [0, 0, 1, 1], [], []>} : vector<28x32xf32>, vector<32x84xf32>, vector<28x84xf32> -> vector<28x84xf32>
    %24 = arith.addf %18, %23 : vector<28x84xf32>
    %c0_31 = arith.constant 0 : index
    %c4 = arith.constant 4 : index
    %c0_32 = arith.constant 0 : index
    %25 = vector.load %arg0[%c0_31, %c4, %c0_32] : memref<2x32x32xf32, #tpu.memory_space<vmem>>, vector<1x28x32xf32>
    %26 = vector.shape_cast %25 : vector<1x28x32xf32> to vector<28x32xf32>
    %c0_33 = arith.constant 0 : index
    %c4_34 = arith.constant 4 : index
    %c0_35 = arith.constant 0 : index
    %c0_36 = arith.constant 0 : index
    %27 = vector.load %arg1[%c0_33, %c4_34, %c0_35, %c0_36] : memref<2x5x32x84xf32, #tpu.memory_space<vmem>>, vector<1x1x32x84xf32>
    %28 = vector.shape_cast %27 : vector<1x1x32x84xf32> to vector<32x84xf32>
    %cst_37 = arith.constant dense<0.000000e+00> : vector<28x84xf32>
    %29 = tpu.matmul %26, %28, %cst_37 {dimension_numbers = #tpu.dot_dimension_numbers<[1], [0], [0], [1], [0, 0, 1, 1], [], []>} : vector<28x32xf32>, vector<32x84xf32>, vector<28x84xf32> -> vector<28x84xf32>
    %30 = arith.addf %24, %29 : vector<28x84xf32>
    %c0_38 = arith.constant 0 : index
    %c0_39 = arith.constant 0 : index
    %c0_40 = arith.constant 0 : index
    %31 = vector.load %arg12[%c0_38, %c0_39, %c0_40] : memref<2x28x84xf32, #tpu.memory_space<vmem>>, vector<1x28x84xf32>
    %32 = vector.shape_cast %31 : vector<1x28x84xf32> to vector<28x84xf32>
    %33 = vector.shape_cast %30 : vector<28x84xf32> to vector<1x28x84xf32>
    tpu.vector_store %arg12[%c0_38, %c0_39, %c0_40], %33 {strides = array<i32>} : memref<2x28x84xf32, #tpu.memory_space<vmem>>, vector<1x28x84xf32>,
    %c0_41 = arith.constant 0 : index
    %c0_42 = arith.constant 0 : index
    %c0_43 = arith.constant 0 : index
    %34 = vector.load %arg0[%c0_41, %c0_42, %c0_43] : memref<2x32x32xf32, #tpu.memory_space<vmem>>, vector<1x28x32xf32>
    %35 = vector.shape_cast %34 : vector<1x28x32xf32> to vector<28x32xf32>
    %c1_44 = arith.constant 1 : index
    %c0_45 = arith.constant 0 : index
    %c0_46 = arith.constant 0 : index
    %c0_47 = arith.constant 0 : index
    %36 = vector.load %arg1[%c1_44, %c0_45, %c0_46, %c0_47] : memref<2x5x32x84xf32, #tpu.memory_space<vmem>>, vector<1x1x32x84xf32>
    %37 = vector.shape_cast %36 : vector<1x1x32x84xf32> to vector<32x84xf32>
    %cst_48 = arith.constant dense<0.000000e+00> : vector<28x84xf32>
    %38 = tpu.matmul %35, %37, %cst_48 {dimension_numbers = #tpu.dot_dimension_numbers<[1], [0], [0], [1], [0, 0, 1, 1], [], []>} : vector<28x32xf32>, vector<32x84xf32>, vector<28x84xf32> -> vector<28x84xf32>
    %c0_49 = arith.constant 0 : index
    %c1_50 = arith.constant 1 : index
    %c0_51 = arith.constant 0 : index
    %39 = vector.load %arg0[%c0_49, %c1_50, %c0_51] : memref<2x32x32xf32, #tpu.memory_space<vmem>>, vector<1x28x32xf32>
    %40 = vector.shape_cast %39 : vector<1x28x32xf32> to vector<28x32xf32>
    %c1_52 = arith.constant 1 : index
    %c1_53 = arith.constant 1 : index
    %c0_54 = arith.constant 0 : index
    %c0_55 = arith.constant 0 : index
    %41 = vector.load %arg1[%c1_52, %c1_53, %c0_54, %c0_55] : memref<2x5x32x84xf32, #tpu.memory_space<vmem>>, vector<1x1x32x84xf32>
    %42 = vector.shape_cast %41 : vector<1x1x32x84xf32> to vector<32x84xf32>
    %cst_56 = arith.constant dense<0.000000e+00> : vector<28x84xf32>
    %43 = tpu.matmul %40, %42, %cst_56 {dimension_numbers = #tpu.dot_dimension_numbers<[1], [0], [0], [1], [0, 0, 1, 1], [], []>} : vector<28x32xf32>, vector<32x84xf32>, vector<28x84xf32> -> vector<28x84xf32>
    %44 = arith.addf %38, %43 : vector<28x84xf32>
    %c0_57 = arith.constant 0 : index
    %c2_58 = arith.constant 2 : index
    %c0_59 = arith.constant 0 : index
    %45 = vector.load %arg0[%c0_57, %c2_58, %c0_59] : memref<2x32x32xf32, #tpu.memory_space<vmem>>, vector<1x28x32xf32>
    %46 = vector.shape_cast %45 : vector<1x28x32xf32> to vector<28x32xf32>
    %c1_60 = arith.constant 1 : index
    %c2_61 = arith.constant 2 : index
    %c0_62 = arith.constant 0 : index
    %c0_63 = arith.constant 0 : index
    %47 = vector.load %arg1[%c1_60, %c2_61, %c0_62, %c0_63] : memref<2x5x32x84xf32, #tpu.memory_space<vmem>>, vector<1x1x32x84xf32>
    %48 = vector.shape_cast %47 : vector<1x1x32x84xf32> to vector<32x84xf32>
    %cst_64 = arith.constant dense<0.000000e+00> : vector<28x84xf32>
    %49 = tpu.matmul %46, %48, %cst_64 {dimension_numbers = #tpu.dot_dimension_numbers<[1], [0], [0], [1], [0, 0, 1, 1], [], []>} : vector<28x32xf32>, vector<32x84xf32>, vector<28x84xf32> -> vector<28x84xf32>
    %50 = arith.addf %44, %49 : vector<28x84xf32>
    %c0_65 = arith.constant 0 : index
    %c3_66 = arith.constant 3 : index
    %c0_67 = arith.constant 0 : index
    %51 = vector.load %arg0[%c0_65, %c3_66, %c0_67] : memref<2x32x32xf32, #tpu.memory_space<vmem>>, vector<1x28x32xf32>
    %52 = vector.shape_cast %51 : vector<1x28x32xf32> to vector<28x32xf32>
    %c1_68 = arith.constant 1 : index
    %c3_69 = arith.constant 3 : index
    %c0_70 = arith.constant 0 : index
    %c0_71 = arith.constant 0 : index
    %53 = vector.load %arg1[%c1_68, %c3_69, %c0_70, %c0_71] : memref<2x5x32x84xf32, #tpu.memory_space<vmem>>, vector<1x1x32x84xf32>
    %54 = vector.shape_cast %53 : vector<1x1x32x84xf32> to vector<32x84xf32>
    %cst_72 = arith.constant dense<0.000000e+00> : vector<28x84xf32>
    %55 = tpu.matmul %52, %54, %cst_72 {dimension_numbers = #tpu.dot_dimension_numbers<[1], [0], [0], [1], [0, 0, 1, 1], [], []>} : vector<28x32xf32>, vector<32x84xf32>, vector<28x84xf32> -> vector<28x84xf32>
    %56 = arith.addf %50, %55 : vector<28x84xf32>
    %c0_73 = arith.constant 0 : index
    %c4_74 = arith.constant 4 : index
    %c0_75 = arith.constant 0 : index
    %57 = vector.load %arg0[%c0_73, %c4_74, %c0_75] : memref<2x32x32xf32, #tpu.memory_space<vmem>>, vector<1x28x32xf32>
    %58 = vector.shape_cast %57 : vector<1x28x32xf32> to vector<28x32xf32>
    %c1_76 = arith.constant 1 : index
    %c4_77 = arith.constant 4 : index
    %c0_78 = arith.constant 0 : index
    %c0_79 = arith.constant 0 : index
    %59 = vector.load %arg1[%c1_76, %c4_77, %c0_78, %c0_79] : memref<2x5x32x84xf32, #tpu.memory_space<vmem>>, vector<1x1x32x84xf32>
    %60 = vector.shape_cast %59 : vector<1x1x32x84xf32> to vector<32x84xf32>
    %cst_80 = arith.constant dense<0.000000e+00> : vector<28x84xf32>
    %61 = tpu.matmul %58, %60, %cst_80 {dimension_numbers = #tpu.dot_dimension_numbers<[1], [0], [0], [1], [0, 0, 1, 1], [], []>} : vector<28x32xf32>, vector<32x84xf32>, vector<28x84xf32> -> vector<28x84xf32>
    %62 = arith.addf %56, %61 : vector<28x84xf32>
    %c1_81 = arith.constant 1 : index
    %c0_82 = arith.constant 0 : index
    %c0_83 = arith.constant 0 : index
    %63 = vector.load %arg12[%c1_81, %c0_82, %c0_83] : memref<2x28x84xf32, #tpu.memory_space<vmem>>, vector<1x28x84xf32>
    %64 = vector.shape_cast %63 : vector<1x28x84xf32> to vector<28x84xf32>
    %65 = vector.shape_cast %62 : vector<28x84xf32> to vector<1x28x84xf32>
    tpu.vector_store %arg12[%c1_81, %c0_82, %c0_83], %65 {strides = array<i32>} : memref<2x28x84xf32, #tpu.memory_space<vmem>>, vector<1x28x84xf32>,
    %c0_84 = arith.constant 0 : index
    %c0_85 = arith.constant 0 : index
    %c0_86 = arith.constant 0 : index
    %66 = vector.load %arg12[%c0_84, %c0_85, %c0_86] : memref<2x28x84xf32, #tpu.memory_space<vmem>>, vector<1x1x84xf32>
    %67 = vector.shape_cast %66 : vector<1x1x84xf32> to vector<1x84xf32>
    %c0_87 = arith.constant 0 : index
    %c1_88 = arith.constant 1 : index
    %c0_89 = arith.constant 0 : index
    %68 = vector.load %arg12[%c0_87, %c1_88, %c0_89] : memref<2x28x84xf32, #tpu.memory_space<vmem>>, vector<1x1x84xf32>
    %69 = vector.shape_cast %68 : vector<1x1x84xf32> to vector<1x84xf32>
    %70 = arith.maximumf %67, %69 : vector<1x84xf32>
    %c1_90 = arith.constant 1 : index
    %c0_91 = arith.constant 0 : index
    %c0_92 = arith.constant 0 : index
    %71 = vector.load %arg12[%c1_90, %c0_91, %c0_92] : memref<2x28x84xf32, #tpu.memory_space<vmem>>, vector<1x1x84xf32>
    %72 = vector.shape_cast %71 : vector<1x1x84xf32> to vector<1x84xf32>
    %c1_93 = arith.constant 1 : index
    %c1_94 = arith.constant 1 : index
    %c0_95 = arith.constant 0 : index
    %73 = vector.load %arg12[%c1_93, %c1_94, %c0_95] : memref<2x28x84xf32, #tpu.memory_space<vmem>>, vector<1x1x84xf32>
    %74 = vector.shape_cast %73 : vector<1x1x84xf32> to vector<1x84xf32>
    %75 = arith.maximumf %72, %74 : vector<1x84xf32>
    %76 = arith.maximumf %70, %75 : vector<1x84xf32>
    %77 = arith.addf %76, %0 : vector<1x84xf32>
    %cst_96 = arith.constant 0.000000e+00 : f32
    %78 = vector.broadcast %cst_96 : f32 to vector<1x84xf32>
    %79 = arith.maximumf %77, %78 : vector<1x84xf32>
    %c0_97 = arith.constant 0 : index
    %c0_98 = arith.constant 0 : index
    %80 = vector.load %arg13[%c0_97, %c0_98] : memref<14x84xf32, #tpu.memory_space<vmem>>, vector<1x84xf32>
    tpu.vector_store %arg13[%c0_97, %c0_98], %79 {strides = array<i32>} : memref<14x84xf32, #tpu.memory_space<vmem>>, vector<1x84xf32>,
    %c0_99 = arith.constant 0 : index
    %c2_100 = arith.constant 2 : index
    %c0_101 = arith.constant 0 : index
    %81 = vector.load %arg12[%c0_99, %c2_100, %c0_101] : memref<2x28x84xf32, #tpu.memory_space<vmem>>, vector<1x1x84xf32>
    %82 = vector.shape_cast %81 : vector<1x1x84xf32> to vector<1x84xf32>
    %c0_102 = arith.constant 0 : index
    %c3_103 = arith.constant 3 : index
    %c0_104 = arith.constant 0 : index
    %83 = vector.load %arg12[%c0_102, %c3_103, %c0_104] : memref<2x28x84xf32, #tpu.memory_space<vmem>>, vector<1x1x84xf32>
    %84 = vector.shape_cast %83 : vector<1x1x84xf32> to vector<1x84xf32>
    %85 = arith.maximumf %82, %84 : vector<1x84xf32>
    %c1_105 = arith.constant 1 : index
    %c2_106 = arith.constant 2 : index
    %c0_107 = arith.constant 0 : index
    %86 = vector.load %arg12[%c1_105, %c2_106, %c0_107] : memref<2x28x84xf32, #tpu.memory_space<vmem>>, vector<1x1x84xf32>
    %87 = vector.shape_cast %86 : vector<1x1x84xf32> to vector<1x84xf32>
    %c1_108 = arith.constant 1 : index
    %c3_109 = arith.constant 3 : index
    %c0_110 = arith.constant 0 : index
    %88 = vector.load %arg12[%c1_108, %c3_109, %c0_110] : memref<2x28x84xf32, #tpu.memory_space<vmem>>, vector<1x1x84xf32>
    %89 = vector.shape_cast %88 : vector<1x1x84xf32> to vector<1x84xf32>
    %90 = arith.maximumf %87, %89 : vector<1x84xf32>
    %91 = arith.maximumf %85, %90 : vector<1x84xf32>
    %92 = arith.addf %91, %0 : vector<1x84xf32>
    %cst_111 = arith.constant 0.000000e+00 : f32
    %93 = vector.broadcast %cst_111 : f32 to vector<1x84xf32>
    %94 = arith.maximumf %92, %93 : vector<1x84xf32>
    %c1_112 = arith.constant 1 : index
    %c0_113 = arith.constant 0 : index
    %95 = vector.load %arg13[%c1_112, %c0_113] : memref<14x84xf32, #tpu.memory_space<vmem>>, vector<1x84xf32>
    tpu.vector_store %arg13[%c1_112, %c0_113], %94 {strides = array<i32>} : memref<14x84xf32, #tpu.memory_space<vmem>>, vector<1x84xf32>,
    %c0_114 = arith.constant 0 : index
    %c4_115 = arith.constant 4 : index
    %c0_116 = arith.constant 0 : index
    %96 = vector.load %arg12[%c0_114, %c4_115, %c0_116] : memref<2x28x84xf32, #tpu.memory_space<vmem>>, vector<1x1x84xf32>
    %97 = vector.shape_cast %96 : vector<1x1x84xf32> to vector<1x84xf32>
    %c0_117 = arith.constant 0 : index
    %c5 = arith.constant 5 : index
    %c0_118 = arith.constant 0 : index
    %98 = vector.load %arg12[%c0_117, %c5, %c0_118] : memref<2x28x84xf32, #tpu.memory_space<vmem>>, vector<1x1x84xf32>
    %99 = vector.shape_cast %98 : vector<1x1x84xf32> to vector<1x84xf32>
    %100 = arith.maximumf %97, %99 : vector<1x84xf32>
    %c1_119 = arith.constant 1 : index
    %c4_120 = arith.constant 4 : index
    %c0_121 = arith.constant 0 : index
    %101 = vector.load %arg12[%c1_119, %c4_120, %c0_121] : memref<2x28x84xf32, #tpu.memory_space<vmem>>, vector<1x1x84xf32>
    %102 = vector.shape_cast %101 : vector<1x1x84xf32> to vector<1x84xf32>
    %c1_122 = arith.constant 1 : index
    %c5_123 = arith.constant 5 : index
    %c0_124 = arith.constant 0 : index
    %103 = vector.load %arg12[%c1_122, %c5_123, %c0_124] : memref<2x28x84xf32, #tpu.memory_space<vmem>>, vector<1x1x84xf32>
    %104 = vector.shape_cast %103 : vector<1x1x84xf32> to vector<1x84xf32>
    %105 = arith.maximumf %102, %104 : vector<1x84xf32>
    %106 = arith.maximumf %100, %105 : vector<1x84xf32>
    %107 = arith.addf %106, %0 : vector<1x84xf32>
    %cst_125 = arith.constant 0.000000e+00 : f32
    %108 = vector.broadcast %cst_125 : f32 to vector<1x84xf32>
    %109 = arith.maximumf %107, %108 : vector<1x84xf32>
    %c2_126 = arith.constant 2 : index
    %c0_127 = arith.constant 0 : index
    %110 = vector.load %arg13[%c2_126, %c0_127] : memref<14x84xf32, #tpu.memory_space<vmem>>, vector<1x84xf32>
    tpu.vector_store %arg13[%c2_126, %c0_127], %109 {strides = array<i32>} : memref<14x84xf32, #tpu.memory_space<vmem>>, vector<1x84xf32>,
    %c0_128 = arith.constant 0 : index
    %c6 = arith.constant 6 : index
    %c0_129 = arith.constant 0 : index
    %111 = vector.load %arg12[%c0_128, %c6, %c0_129] : memref<2x28x84xf32, #tpu.memory_space<vmem>>, vector<1x1x84xf32>
    %112 = vector.shape_cast %111 : vector<1x1x84xf32> to vector<1x84xf32>
    %c0_130 = arith.constant 0 : index
    %c7 = arith.constant 7 : index
    %c0_131 = arith.constant 0 : index
    %113 = vector.load %arg12[%c0_130, %c7, %c0_131] : memref<2x28x84xf32, #tpu.memory_space<vmem>>, vector<1x1x84xf32>
    %114 = vector.shape_cast %113 : vector<1x1x84xf32> to vector<1x84xf32>
    %115 = arith.maximumf %112, %114 : vector<1x84xf32>
    %c1_132 = arith.constant 1 : index
    %c6_133 = arith.constant 6 : index
    %c0_134 = arith.constant 0 : index
    %116 = vector.load %arg12[%c1_132, %c6_133, %c0_134] : memref<2x28x84xf32, #tpu.memory_space<vmem>>, vector<1x1x84xf32>
    %117 = vector.shape_cast %116 : vector<1x1x84xf32> to vector<1x84xf32>
    %c1_135 = arith.constant 1 : index
    %c7_136 = arith.constant 7 : index
    %c0_137 = arith.constant 0 : index
    %118 = vector.load %arg12[%c1_135, %c7_136, %c0_137] : memref<2x28x84xf32, #tpu.memory_space<vmem>>, vector<1x1x84xf32>
    %119 = vector.shape_cast %118 : vector<1x1x84xf32> to vector<1x84xf32>
    %120 = arith.maximumf %117, %119 : vector<1x84xf32>
    %121 = arith.maximumf %115, %120 : vector<1x84xf32>
    %122 = arith.addf %121, %0 : vector<1x84xf32>
    %cst_138 = arith.constant 0.000000e+00 : f32
    %123 = vector.broadcast %cst_138 : f32 to vector<1x84xf32>
    %124 = arith.maximumf %122, %123 : vector<1x84xf32>
    %c3_139 = arith.constant 3 : index
    %c0_140 = arith.constant 0 : index
    %125 = vector.load %arg13[%c3_139, %c0_140] : memref<14x84xf32, #tpu.memory_space<vmem>>, vector<1x84xf32>
    tpu.vector_store %arg13[%c3_139, %c0_140], %124 {strides = array<i32>} : memref<14x84xf32, #tpu.memory_space<vmem>>, vector<1x84xf32>,
    %c0_141 = arith.constant 0 : index
    %c8 = arith.constant 8 : index
    %c0_142 = arith.constant 0 : index
    %126 = vector.load %arg12[%c0_141, %c8, %c0_142] : memref<2x28x84xf32, #tpu.memory_space<vmem>>, vector<1x1x84xf32>
    %127 = vector.shape_cast %126 : vector<1x1x84xf32> to vector<1x84xf32>
    %c0_143 = arith.constant 0 : index
    %c9 = arith.constant 9 : index
    %c0_144 = arith.constant 0 : index
    %128 = vector.load %arg12[%c0_143, %c9, %c0_144] : memref<2x28x84xf32, #tpu.memory_space<vmem>>, vector<1x1x84xf32>
    %129 = vector.shape_cast %128 : vector<1x1x84xf32> to vector<1x84xf32>
    %130 = arith.maximumf %127, %129 : vector<1x84xf32>
    %c1_145 = arith.constant 1 : index
    %c8_146 = arith.constant 8 : index
    %c0_147 = arith.constant 0 : index
    %131 = vector.load %arg12[%c1_145, %c8_146, %c0_147] : memref<2x28x84xf32, #tpu.memory_space<vmem>>, vector<1x1x84xf32>
    %132 = vector.shape_cast %131 : vector<1x1x84xf32> to vector<1x84xf32>
    %c1_148 = arith.constant 1 : index
    %c9_149 = arith.constant 9 : index
    %c0_150 = arith.constant 0 : index
    %133 = vector.load %arg12[%c1_148, %c9_149, %c0_150] : memref<2x28x84xf32, #tpu.memory_space<vmem>>, vector<1x1x84xf32>
    %134 = vector.shape_cast %133 : vector<1x1x84xf32> to vector<1x84xf32>
    %135 = arith.maximumf %132, %134 : vector<1x84xf32>
    %136 = arith.maximumf %130, %135 : vector<1x84xf32>
    %137 = arith.addf %136, %0 : vector<1x84xf32>
    %cst_151 = arith.constant 0.000000e+00 : f32
    %138 = vector.broadcast %cst_151 : f32 to vector<1x84xf32>
    %139 = arith.maximumf %137, %138 : vector<1x84xf32>
    %c4_152 = arith.constant 4 : index
    %c0_153 = arith.constant 0 : index
    %140 = vector.load %arg13[%c4_152, %c0_153] : memref<14x84xf32, #tpu.memory_space<vmem>>, vector<1x84xf32>
    tpu.vector_store %arg13[%c4_152, %c0_153], %139 {strides = array<i32>} : memref<14x84xf32, #tpu.memory_space<vmem>>, vector<1x84xf32>,
    %c0_154 = arith.constant 0 : index
    %c10 = arith.constant 10 : index
    %c0_155 = arith.constant 0 : index
    %141 = vector.load %arg12[%c0_154, %c10, %c0_155] : memref<2x28x84xf32, #tpu.memory_space<vmem>>, vector<1x1x84xf32>
    %142 = vector.shape_cast %141 : vector<1x1x84xf32> to vector<1x84xf32>
    %c0_156 = arith.constant 0 : index
    %c11 = arith.constant 11 : index
    %c0_157 = arith.constant 0 : index
    %143 = vector.load %arg12[%c0_156, %c11, %c0_157] : memref<2x28x84xf32, #tpu.memory_space<vmem>>, vector<1x1x84xf32>
    %144 = vector.shape_cast %143 : vector<1x1x84xf32> to vector<1x84xf32>
    %145 = arith.maximumf %142, %144 : vector<1x84xf32>
    %c1_158 = arith.constant 1 : index
    %c10_159 = arith.constant 10 : index
    %c0_160 = arith.constant 0 : index
    %146 = vector.load %arg12[%c1_158, %c10_159, %c0_160] : memref<2x28x84xf32, #tpu.memory_space<vmem>>, vector<1x1x84xf32>
    %147 = vector.shape_cast %146 : vector<1x1x84xf32> to vector<1x84xf32>
    %c1_161 = arith.constant 1 : index
    %c11_162 = arith.constant 11 : index
    %c0_163 = arith.constant 0 : index
    %148 = vector.load %arg12[%c1_161, %c11_162, %c0_163] : memref<2x28x84xf32, #tpu.memory_space<vmem>>, vector<1x1x84xf32>
    %149 = vector.shape_cast %148 : vector<1x1x84xf32> to vector<1x84xf32>
    %150 = arith.maximumf %147, %149 : vector<1x84xf32>
    %151 = arith.maximumf %145, %150 : vector<1x84xf32>
    %152 = arith.addf %151, %0 : vector<1x84xf32>
    %cst_164 = arith.constant 0.000000e+00 : f32
    %153 = vector.broadcast %cst_164 : f32 to vector<1x84xf32>
    %154 = arith.maximumf %152, %153 : vector<1x84xf32>
    %c5_165 = arith.constant 5 : index
    %c0_166 = arith.constant 0 : index
    %155 = vector.load %arg13[%c5_165, %c0_166] : memref<14x84xf32, #tpu.memory_space<vmem>>, vector<1x84xf32>
    tpu.vector_store %arg13[%c5_165, %c0_166], %154 {strides = array<i32>} : memref<14x84xf32, #tpu.memory_space<vmem>>, vector<1x84xf32>,
    %c0_167 = arith.constant 0 : index
    %c12 = arith.constant 12 : index
    %c0_168 = arith.constant 0 : index
    %156 = vector.load %arg12[%c0_167, %c12, %c0_168] : memref<2x28x84xf32, #tpu.memory_space<vmem>>, vector<1x1x84xf32>
    %157 = vector.shape_cast %156 : vector<1x1x84xf32> to vector<1x84xf32>
    %c0_169 = arith.constant 0 : index
    %c13 = arith.constant 13 : index
    %c0_170 = arith.constant 0 : index
    %158 = vector.load %arg12[%c0_169, %c13, %c0_170] : memref<2x28x84xf32, #tpu.memory_space<vmem>>, vector<1x1x84xf32>
    %159 = vector.shape_cast %158 : vector<1x1x84xf32> to vector<1x84xf32>
    %160 = arith.maximumf %157, %159 : vector<1x84xf32>
    %c1_171 = arith.constant 1 : index
    %c12_172 = arith.constant 12 : index
    %c0_173 = arith.constant 0 : index
    %161 = vector.load %arg12[%c1_171, %c12_172, %c0_173] : memref<2x28x84xf32, #tpu.memory_space<vmem>>, vector<1x1x84xf32>
    %162 = vector.shape_cast %161 : vector<1x1x84xf32> to vector<1x84xf32>
    %c1_174 = arith.constant 1 : index
    %c13_175 = arith.constant 13 : index
    %c0_176 = arith.constant 0 : index
    %163 = vector.load %arg12[%c1_174, %c13_175, %c0_176] : memref<2x28x84xf32, #tpu.memory_space<vmem>>, vector<1x1x84xf32>
    %164 = vector.shape_cast %163 : vector<1x1x84xf32> to vector<1x84xf32>
    %165 = arith.maximumf %162, %164 : vector<1x84xf32>
    %166 = arith.maximumf %160, %165 : vector<1x84xf32>
    %167 = arith.addf %166, %0 : vector<1x84xf32>
    %cst_177 = arith.constant 0.000000e+00 : f32
    %168 = vector.broadcast %cst_177 : f32 to vector<1x84xf32>
    %169 = arith.maximumf %167, %168 : vector<1x84xf32>
    %c6_178 = arith.constant 6 : index
    %c0_179 = arith.constant 0 : index
    %170 = vector.load %arg13[%c6_178, %c0_179] : memref<14x84xf32, #tpu.memory_space<vmem>>, vector<1x84xf32>
    tpu.vector_store %arg13[%c6_178, %c0_179], %169 {strides = array<i32>} : memref<14x84xf32, #tpu.memory_space<vmem>>, vector<1x84xf32>,
    %c0_180 = arith.constant 0 : index
    %c14 = arith.constant 14 : index
    %c0_181 = arith.constant 0 : index
    %171 = vector.load %arg12[%c0_180, %c14, %c0_181] : memref<2x28x84xf32, #tpu.memory_space<vmem>>, vector<1x1x84xf32>
    %172 = vector.shape_cast %171 : vector<1x1x84xf32> to vector<1x84xf32>
    %c0_182 = arith.constant 0 : index
    %c15 = arith.constant 15 : index
    %c0_183 = arith.constant 0 : index
    %173 = vector.load %arg12[%c0_182, %c15, %c0_183] : memref<2x28x84xf32, #tpu.memory_space<vmem>>, vector<1x1x84xf32>
    %174 = vector.shape_cast %173 : vector<1x1x84xf32> to vector<1x84xf32>
    %175 = arith.maximumf %172, %174 : vector<1x84xf32>
    %c1_184 = arith.constant 1 : index
    %c14_185 = arith.constant 14 : index
    %c0_186 = arith.constant 0 : index
    %176 = vector.load %arg12[%c1_184, %c14_185, %c0_186] : memref<2x28x84xf32, #tpu.memory_space<vmem>>, vector<1x1x84xf32>
    %177 = vector.shape_cast %176 : vector<1x1x84xf32> to vector<1x84xf32>
    %c1_187 = arith.constant 1 : index
    %c15_188 = arith.constant 15 : index
    %c0_189 = arith.constant 0 : index
    %178 = vector.load %arg12[%c1_187, %c15_188, %c0_189] : memref<2x28x84xf32, #tpu.memory_space<vmem>>, vector<1x1x84xf32>
    %179 = vector.shape_cast %178 : vector<1x1x84xf32> to vector<1x84xf32>
    %180 = arith.maximumf %177, %179 : vector<1x84xf32>
    %181 = arith.maximumf %175, %180 : vector<1x84xf32>
    %182 = arith.addf %181, %0 : vector<1x84xf32>
    %cst_190 = arith.constant 0.000000e+00 : f32
    %183 = vector.broadcast %cst_190 : f32 to vector<1x84xf32>
    %184 = arith.maximumf %182, %183 : vector<1x84xf32>
    %c7_191 = arith.constant 7 : index
    %c0_192 = arith.constant 0 : index
    %185 = vector.load %arg13[%c7_191, %c0_192] : memref<14x84xf32, #tpu.memory_space<vmem>>, vector<1x84xf32>
    tpu.vector_store %arg13[%c7_191, %c0_192], %184 {strides = array<i32>} : memref<14x84xf32, #tpu.memory_space<vmem>>, vector<1x84xf32>,
    %c0_193 = arith.constant 0 : index
    %c16 = arith.constant 16 : index
    %c0_194 = arith.constant 0 : index
    %186 = vector.load %arg12[%c0_193, %c16, %c0_194] : memref<2x28x84xf32, #tpu.memory_space<vmem>>, vector<1x1x84xf32>
    %187 = vector.shape_cast %186 : vector<1x1x84xf32> to vector<1x84xf32>
    %c0_195 = arith.constant 0 : index
    %c17 = arith.constant 17 : index
    %c0_196 = arith.constant 0 : index
    %188 = vector.load %arg12[%c0_195, %c17, %c0_196] : memref<2x28x84xf32, #tpu.memory_space<vmem>>, vector<1x1x84xf32>
    %189 = vector.shape_cast %188 : vector<1x1x84xf32> to vector<1x84xf32>
    %190 = arith.maximumf %187, %189 : vector<1x84xf32>
    %c1_197 = arith.constant 1 : index
    %c16_198 = arith.constant 16 : index
    %c0_199 = arith.constant 0 : index
    %191 = vector.load %arg12[%c1_197, %c16_198, %c0_199] : memref<2x28x84xf32, #tpu.memory_space<vmem>>, vector<1x1x84xf32>
    %192 = vector.shape_cast %191 : vector<1x1x84xf32> to vector<1x84xf32>
    %c1_200 = arith.constant 1 : index
    %c17_201 = arith.constant 17 : index
    %c0_202 = arith.constant 0 : index
    %193 = vector.load %arg12[%c1_200, %c17_201, %c0_202] : memref<2x28x84xf32, #tpu.memory_space<vmem>>, vector<1x1x84xf32>
    %194 = vector.shape_cast %193 : vector<1x1x84xf32> to vector<1x84xf32>
    %195 = arith.maximumf %192, %194 : vector<1x84xf32>
    %196 = arith.maximumf %190, %195 : vector<1x84xf32>
    %197 = arith.addf %196, %0 : vector<1x84xf32>
    %cst_203 = arith.constant 0.000000e+00 : f32
    %198 = vector.broadcast %cst_203 : f32 to vector<1x84xf32>
    %199 = arith.maximumf %197, %198 : vector<1x84xf32>
    %c8_204 = arith.constant 8 : index
    %c0_205 = arith.constant 0 : index
    %200 = vector.load %arg13[%c8_204, %c0_205] : memref<14x84xf32, #tpu.memory_space<vmem>>, vector<1x84xf32>
    tpu.vector_store %arg13[%c8_204, %c0_205], %199 {strides = array<i32>} : memref<14x84xf32, #tpu.memory_space<vmem>>, vector<1x84xf32>,
    %c0_206 = arith.constant 0 : index
    %c18 = arith.constant 18 : index
    %c0_207 = arith.constant 0 : index
    %201 = vector.load %arg12[%c0_206, %c18, %c0_207] : memref<2x28x84xf32, #tpu.memory_space<vmem>>, vector<1x1x84xf32>
    %202 = vector.shape_cast %201 : vector<1x1x84xf32> to vector<1x84xf32>
    %c0_208 = arith.constant 0 : index
    %c19 = arith.constant 19 : index
    %c0_209 = arith.constant 0 : index
    %203 = vector.load %arg12[%c0_208, %c19, %c0_209] : memref<2x28x84xf32, #tpu.memory_space<vmem>>, vector<1x1x84xf32>
    %204 = vector.shape_cast %203 : vector<1x1x84xf32> to vector<1x84xf32>
    %205 = arith.maximumf %202, %204 : vector<1x84xf32>
    %c1_210 = arith.constant 1 : index
    %c18_211 = arith.constant 18 : index
    %c0_212 = arith.constant 0 : index
    %206 = vector.load %arg12[%c1_210, %c18_211, %c0_212] : memref<2x28x84xf32, #tpu.memory_space<vmem>>, vector<1x1x84xf32>
    %207 = vector.shape_cast %206 : vector<1x1x84xf32> to vector<1x84xf32>
    %c1_213 = arith.constant 1 : index
    %c19_214 = arith.constant 19 : index
    %c0_215 = arith.constant 0 : index
    %208 = vector.load %arg12[%c1_213, %c19_214, %c0_215] : memref<2x28x84xf32, #tpu.memory_space<vmem>>, vector<1x1x84xf32>
    %209 = vector.shape_cast %208 : vector<1x1x84xf32> to vector<1x84xf32>
    %210 = arith.maximumf %207, %209 : vector<1x84xf32>
    %211 = arith.maximumf %205, %210 : vector<1x84xf32>
    %212 = arith.addf %211, %0 : vector<1x84xf32>
    %cst_216 = arith.constant 0.000000e+00 : f32
    %213 = vector.broadcast %cst_216 : f32 to vector<1x84xf32>
    %214 = arith.maximumf %212, %213 : vector<1x84xf32>
    %c9_217 = arith.constant 9 : index
    %c0_218 = arith.constant 0 : index
    %215 = vector.load %arg13[%c9_217, %c0_218] : memref<14x84xf32, #tpu.memory_space<vmem>>, vector<1x84xf32>
    tpu.vector_store %arg13[%c9_217, %c0_218], %214 {strides = array<i32>} : memref<14x84xf32, #tpu.memory_space<vmem>>, vector<1x84xf32>,
    %c0_219 = arith.constant 0 : index
    %c20 = arith.constant 20 : index
    %c0_220 = arith.constant 0 : index
    %216 = vector.load %arg12[%c0_219, %c20, %c0_220] : memref<2x28x84xf32, #tpu.memory_space<vmem>>, vector<1x1x84xf32>
    %217 = vector.shape_cast %216 : vector<1x1x84xf32> to vector<1x84xf32>
    %c0_221 = arith.constant 0 : index
    %c21 = arith.constant 21 : index
    %c0_222 = arith.constant 0 : index
    %218 = vector.load %arg12[%c0_221, %c21, %c0_222] : memref<2x28x84xf32, #tpu.memory_space<vmem>>, vector<1x1x84xf32>
    %219 = vector.shape_cast %218 : vector<1x1x84xf32> to vector<1x84xf32>
    %220 = arith.maximumf %217, %219 : vector<1x84xf32>
    %c1_223 = arith.constant 1 : index
    %c20_224 = arith.constant 20 : index
    %c0_225 = arith.constant 0 : index
    %221 = vector.load %arg12[%c1_223, %c20_224, %c0_225] : memref<2x28x84xf32, #tpu.memory_space<vmem>>, vector<1x1x84xf32>
    %222 = vector.shape_cast %221 : vector<1x1x84xf32> to vector<1x84xf32>
    %c1_226 = arith.constant 1 : index
    %c21_227 = arith.constant 21 : index
    %c0_228 = arith.constant 0 : index
    %223 = vector.load %arg12[%c1_226, %c21_227, %c0_228] : memref<2x28x84xf32, #tpu.memory_space<vmem>>, vector<1x1x84xf32>
    %224 = vector.shape_cast %223 : vector<1x1x84xf32> to vector<1x84xf32>
    %225 = arith.maximumf %222, %224 : vector<1x84xf32>
    %226 = arith.maximumf %220, %225 : vector<1x84xf32>
    %227 = arith.addf %226, %0 : vector<1x84xf32>
    %cst_229 = arith.constant 0.000000e+00 : f32
    %228 = vector.broadcast %cst_229 : f32 to vector<1x84xf32>
    %229 = arith.maximumf %227, %228 : vector<1x84xf32>
    %c10_230 = arith.constant 10 : index
    %c0_231 = arith.constant 0 : index
    %230 = vector.load %arg13[%c10_230, %c0_231] : memref<14x84xf32, #tpu.memory_space<vmem>>, vector<1x84xf32>
    tpu.vector_store %arg13[%c10_230, %c0_231], %229 {strides = array<i32>} : memref<14x84xf32, #tpu.memory_space<vmem>>, vector<1x84xf32>,
    %c0_232 = arith.constant 0 : index
    %c22 = arith.constant 22 : index
    %c0_233 = arith.constant 0 : index
    %231 = vector.load %arg12[%c0_232, %c22, %c0_233] : memref<2x28x84xf32, #tpu.memory_space<vmem>>, vector<1x1x84xf32>
    %232 = vector.shape_cast %231 : vector<1x1x84xf32> to vector<1x84xf32>
    %c0_234 = arith.constant 0 : index
    %c23 = arith.constant 23 : index
    %c0_235 = arith.constant 0 : index
    %233 = vector.load %arg12[%c0_234, %c23, %c0_235] : memref<2x28x84xf32, #tpu.memory_space<vmem>>, vector<1x1x84xf32>
    %234 = vector.shape_cast %233 : vector<1x1x84xf32> to vector<1x84xf32>
    %235 = arith.maximumf %232, %234 : vector<1x84xf32>
    %c1_236 = arith.constant 1 : index
    %c22_237 = arith.constant 22 : index
    %c0_238 = arith.constant 0 : index
    %236 = vector.load %arg12[%c1_236, %c22_237, %c0_238] : memref<2x28x84xf32, #tpu.memory_space<vmem>>, vector<1x1x84xf32>
    %237 = vector.shape_cast %236 : vector<1x1x84xf32> to vector<1x84xf32>
    %c1_239 = arith.constant 1 : index
    %c23_240 = arith.constant 23 : index
    %c0_241 = arith.constant 0 : index
    %238 = vector.load %arg12[%c1_239, %c23_240, %c0_241] : memref<2x28x84xf32, #tpu.memory_space<vmem>>, vector<1x1x84xf32>
    %239 = vector.shape_cast %238 : vector<1x1x84xf32> to vector<1x84xf32>
    %240 = arith.maximumf %237, %239 : vector<1x84xf32>
    %241 = arith.maximumf %235, %240 : vector<1x84xf32>
    %242 = arith.addf %241, %0 : vector<1x84xf32>
    %cst_242 = arith.constant 0.000000e+00 : f32
    %243 = vector.broadcast %cst_242 : f32 to vector<1x84xf32>
    %244 = arith.maximumf %242, %243 : vector<1x84xf32>
    %c11_243 = arith.constant 11 : index
    %c0_244 = arith.constant 0 : index
    %245 = vector.load %arg13[%c11_243, %c0_244] : memref<14x84xf32, #tpu.memory_space<vmem>>, vector<1x84xf32>
    tpu.vector_store %arg13[%c11_243, %c0_244], %244 {strides = array<i32>} : memref<14x84xf32, #tpu.memory_space<vmem>>, vector<1x84xf32>,
    %c0_245 = arith.constant 0 : index
    %c24 = arith.constant 24 : index
    %c0_246 = arith.constant 0 : index
    %246 = vector.load %arg12[%c0_245, %c24, %c0_246] : memref<2x28x84xf32, #tpu.memory_space<vmem>>, vector<1x1x84xf32>
    %247 = vector.shape_cast %246 : vector<1x1x84xf32> to vector<1x84xf32>
    %c0_247 = arith.constant 0 : index
    %c25 = arith.constant 25 : index
    %c0_248 = arith.constant 0 : index
    %248 = vector.load %arg12[%c0_247, %c25, %c0_248] : memref<2x28x84xf32, #tpu.memory_space<vmem>>, vector<1x1x84xf32>
    %249 = vector.shape_cast %248 : vector<1x1x84xf32> to vector<1x84xf32>
    %250 = arith.maximumf %247, %249 : vector<1x84xf32>
    %c1_249 = arith.constant 1 : index
    %c24_250 = arith.constant 24 : index
    %c0_251 = arith.constant 0 : index
    %251 = vector.load %arg12[%c1_249, %c24_250, %c0_251] : memref<2x28x84xf32, #tpu.memory_space<vmem>>, vector<1x1x84xf32>
    %252 = vector.shape_cast %251 : vector<1x1x84xf32> to vector<1x84xf32>
    %c1_252 = arith.constant 1 : index
    %c25_253 = arith.constant 25 : index
    %c0_254 = arith.constant 0 : index
    %253 = vector.load %arg12[%c1_252, %c25_253, %c0_254] : memref<2x28x84xf32, #tpu.memory_space<vmem>>, vector<1x1x84xf32>
    %254 = vector.shape_cast %253 : vector<1x1x84xf32> to vector<1x84xf32>
    %255 = arith.maximumf %252, %254 : vector<1x84xf32>
    %256 = arith.maximumf %250, %255 : vector<1x84xf32>
    %257 = arith.addf %256, %0 : vector<1x84xf32>
    %cst_255 = arith.constant 0.000000e+00 : f32
    %258 = vector.broadcast %cst_255 : f32 to vector<1x84xf32>
    %259 = arith.maximumf %257, %258 : vector<1x84xf32>
    %c12_256 = arith.constant 12 : index
    %c0_257 = arith.constant 0 : index
    %260 = vector.load %arg13[%c12_256, %c0_257] : memref<14x84xf32, #tpu.memory_space<vmem>>, vector<1x84xf32>
    tpu.vector_store %arg13[%c12_256, %c0_257], %259 {strides = array<i32>} : memref<14x84xf32, #tpu.memory_space<vmem>>, vector<1x84xf32>,
    %c0_258 = arith.constant 0 : index
    %c26 = arith.constant 26 : index
    %c0_259 = arith.constant 0 : index
    %261 = vector.load %arg12[%c0_258, %c26, %c0_259] : memref<2x28x84xf32, #tpu.memory_space<vmem>>, vector<1x1x84xf32>
    %262 = vector.shape_cast %261 : vector<1x1x84xf32> to vector<1x84xf32>
    %c0_260 = arith.constant 0 : index
    %c27 = arith.constant 27 : index
    %c0_261 = arith.constant 0 : index
    %263 = vector.load %arg12[%c0_260, %c27, %c0_261] : memref<2x28x84xf32, #tpu.memory_space<vmem>>, vector<1x1x84xf32>
    %264 = vector.shape_cast %263 : vector<1x1x84xf32> to vector<1x84xf32>
    %265 = arith.maximumf %262, %264 : vector<1x84xf32>
    %c1_262 = arith.constant 1 : index
    %c26_263 = arith.constant 26 : index
    %c0_264 = arith.constant 0 : index
    %266 = vector.load %arg12[%c1_262, %c26_263, %c0_264] : memref<2x28x84xf32, #tpu.memory_space<vmem>>, vector<1x1x84xf32>
    %267 = vector.shape_cast %266 : vector<1x1x84xf32> to vector<1x84xf32>
    %c1_265 = arith.constant 1 : index
    %c27_266 = arith.constant 27 : index
    %c0_267 = arith.constant 0 : index
    %268 = vector.load %arg12[%c1_265, %c27_266, %c0_267] : memref<2x28x84xf32, #tpu.memory_space<vmem>>, vector<1x1x84xf32>
    %269 = vector.shape_cast %268 : vector<1x1x84xf32> to vector<1x84xf32>
    %270 = arith.maximumf %267, %269 : vector<1x84xf32>
    %271 = arith.maximumf %265, %270 : vector<1x84xf32>
    %272 = arith.addf %271, %0 : vector<1x84xf32>
    %cst_268 = arith.constant 0.000000e+00 : f32
    %273 = vector.broadcast %cst_268 : f32 to vector<1x84xf32>
    %274 = arith.maximumf %272, %273 : vector<1x84xf32>
    %c13_269 = arith.constant 13 : index
    %c0_270 = arith.constant 0 : index
    %275 = vector.load %arg13[%c13_269, %c0_270] : memref<14x84xf32, #tpu.memory_space<vmem>>, vector<1x84xf32>
    tpu.vector_store %arg13[%c13_269, %c0_270], %274 {strides = array<i32>} : memref<14x84xf32, #tpu.memory_space<vmem>>, vector<1x84xf32>,
    %c0_271 = arith.constant 0 : index
    %c0_272 = arith.constant 0 : index
    %276 = vector.load %arg13[%c0_271, %c0_272] : memref<14x84xf32, #tpu.memory_space<vmem>>, vector<10x84xf32>
    %c0_273 = arith.constant 0 : index
    %c0_274 = arith.constant 0 : index
    %c0_275 = arith.constant 0 : index
    %c0_276 = arith.constant 0 : index
    %277 = vector.load %arg3[%c0_273, %c0_274, %c0_275, %c0_276] : memref<2x5x84x80xf32, #tpu.memory_space<vmem>>, vector<1x1x84x80xf32>
    %278 = vector.shape_cast %277 : vector<1x1x84x80xf32> to vector<84x80xf32>
    %cst_277 = arith.constant dense<0.000000e+00> : vector<10x80xf32>
    %279 = tpu.matmul %276, %278, %cst_277 {dimension_numbers = #tpu.dot_dimension_numbers<[1], [0], [0], [1], [0, 0, 1, 1], [], []>} : vector<10x84xf32>, vector<84x80xf32>, vector<10x80xf32> -> vector<10x80xf32>
    %c1_278 = arith.constant 1 : index
    %c0_279 = arith.constant 0 : index
    %280 = vector.load %arg13[%c1_278, %c0_279] : memref<14x84xf32, #tpu.memory_space<vmem>>, vector<10x84xf32>
    %c0_280 = arith.constant 0 : index
    %c1_281 = arith.constant 1 : index
    %c0_282 = arith.constant 0 : index
    %c0_283 = arith.constant 0 : index
    %281 = vector.load %arg3[%c0_280, %c1_281, %c0_282, %c0_283] : memref<2x5x84x80xf32, #tpu.memory_space<vmem>>, vector<1x1x84x80xf32>
    %282 = vector.shape_cast %281 : vector<1x1x84x80xf32> to vector<84x80xf32>
    %cst_284 = arith.constant dense<0.000000e+00> : vector<10x80xf32>
    %283 = tpu.matmul %280, %282, %cst_284 {dimension_numbers = #tpu.dot_dimension_numbers<[1], [0], [0], [1], [0, 0, 1, 1], [], []>} : vector<10x84xf32>, vector<84x80xf32>, vector<10x80xf32> -> vector<10x80xf32>
    %284 = arith.addf %279, %283 : vector<10x80xf32>
    %c2_285 = arith.constant 2 : index
    %c0_286 = arith.constant 0 : index
    %285 = vector.load %arg13[%c2_285, %c0_286] : memref<14x84xf32, #tpu.memory_space<vmem>>, vector<10x84xf32>
    %c0_287 = arith.constant 0 : index
    %c2_288 = arith.constant 2 : index
    %c0_289 = arith.constant 0 : index
    %c0_290 = arith.constant 0 : index
    %286 = vector.load %arg3[%c0_287, %c2_288, %c0_289, %c0_290] : memref<2x5x84x80xf32, #tpu.memory_space<vmem>>, vector<1x1x84x80xf32>
    %287 = vector.shape_cast %286 : vector<1x1x84x80xf32> to vector<84x80xf32>
    %cst_291 = arith.constant dense<0.000000e+00> : vector<10x80xf32>
    %288 = tpu.matmul %285, %287, %cst_291 {dimension_numbers = #tpu.dot_dimension_numbers<[1], [0], [0], [1], [0, 0, 1, 1], [], []>} : vector<10x84xf32>, vector<84x80xf32>, vector<10x80xf32> -> vector<10x80xf32>
    %289 = arith.addf %284, %288 : vector<10x80xf32>
    %c3_292 = arith.constant 3 : index
    %c0_293 = arith.constant 0 : index
    %290 = vector.load %arg13[%c3_292, %c0_293] : memref<14x84xf32, #tpu.memory_space<vmem>>, vector<10x84xf32>
    %c0_294 = arith.constant 0 : index
    %c3_295 = arith.constant 3 : index
    %c0_296 = arith.constant 0 : index
    %c0_297 = arith.constant 0 : index
    %291 = vector.load %arg3[%c0_294, %c3_295, %c0_296, %c0_297] : memref<2x5x84x80xf32, #tpu.memory_space<vmem>>, vector<1x1x84x80xf32>
    %292 = vector.shape_cast %291 : vector<1x1x84x80xf32> to vector<84x80xf32>
    %cst_298 = arith.constant dense<0.000000e+00> : vector<10x80xf32>
    %293 = tpu.matmul %290, %292, %cst_298 {dimension_numbers = #tpu.dot_dimension_numbers<[1], [0], [0], [1], [0, 0, 1, 1], [], []>} : vector<10x84xf32>, vector<84x80xf32>, vector<10x80xf32> -> vector<10x80xf32>
    %294 = arith.addf %289, %293 : vector<10x80xf32>
    %c4_299 = arith.constant 4 : index
    %c0_300 = arith.constant 0 : index
    %295 = vector.load %arg13[%c4_299, %c0_300] : memref<14x84xf32, #tpu.memory_space<vmem>>, vector<10x84xf32>
    %c0_301 = arith.constant 0 : index
    %c4_302 = arith.constant 4 : index
    %c0_303 = arith.constant 0 : index
    %c0_304 = arith.constant 0 : index
    %296 = vector.load %arg3[%c0_301, %c4_302, %c0_303, %c0_304] : memref<2x5x84x80xf32, #tpu.memory_space<vmem>>, vector<1x1x84x80xf32>
    %297 = vector.shape_cast %296 : vector<1x1x84x80xf32> to vector<84x80xf32>
    %cst_305 = arith.constant dense<0.000000e+00> : vector<10x80xf32>
    %298 = tpu.matmul %295, %297, %cst_305 {dimension_numbers = #tpu.dot_dimension_numbers<[1], [0], [0], [1], [0, 0, 1, 1], [], []>} : vector<10x84xf32>, vector<84x80xf32>, vector<10x80xf32> -> vector<10x80xf32>
    %299 = arith.addf %294, %298 : vector<10x80xf32>
    %c0_306 = arith.constant 0 : index
    %c0_307 = arith.constant 0 : index
    %c0_308 = arith.constant 0 : index
    %300 = vector.load %arg14[%c0_306, %c0_307, %c0_308] : memref<2x10x80xf32, #tpu.memory_space<vmem>>, vector<1x10x80xf32>
    %301 = vector.shape_cast %300 : vector<1x10x80xf32> to vector<10x80xf32>
    %302 = vector.shape_cast %299 : vector<10x80xf32> to vector<1x10x80xf32>
    tpu.vector_store %arg14[%c0_306, %c0_307, %c0_308], %302 {strides = array<i32>} : memref<2x10x80xf32, #tpu.memory_space<vmem>>, vector<1x10x80xf32>,
    %c0_309 = arith.constant 0 : index
    %c0_310 = arith.constant 0 : index
    %303 = vector.load %arg13[%c0_309, %c0_310] : memref<14x84xf32, #tpu.memory_space<vmem>>, vector<10x84xf32>
    %c1_311 = arith.constant 1 : index
    %c0_312 = arith.constant 0 : index
    %c0_313 = arith.constant 0 : index
    %c0_314 = arith.constant 0 : index
    %304 = vector.load %arg3[%c1_311, %c0_312, %c0_313, %c0_314] : memref<2x5x84x80xf32, #tpu.memory_space<vmem>>, vector<1x1x84x80xf32>
    %305 = vector.shape_cast %304 : vector<1x1x84x80xf32> to vector<84x80xf32>
    %cst_315 = arith.constant dense<0.000000e+00> : vector<10x80xf32>
    %306 = tpu.matmul %303, %305, %cst_315 {dimension_numbers = #tpu.dot_dimension_numbers<[1], [0], [0], [1], [0, 0, 1, 1], [], []>} : vector<10x84xf32>, vector<84x80xf32>, vector<10x80xf32> -> vector<10x80xf32>
    %c1_316 = arith.constant 1 : index
    %c0_317 = arith.constant 0 : index
    %307 = vector.load %arg13[%c1_316, %c0_317] : memref<14x84xf32, #tpu.memory_space<vmem>>, vector<10x84xf32>
    %c1_318 = arith.constant 1 : index
    %c1_319 = arith.constant 1 : index
    %c0_320 = arith.constant 0 : index
    %c0_321 = arith.constant 0 : index
    %308 = vector.load %arg3[%c1_318, %c1_319, %c0_320, %c0_321] : memref<2x5x84x80xf32, #tpu.memory_space<vmem>>, vector<1x1x84x80xf32>
    %309 = vector.shape_cast %308 : vector<1x1x84x80xf32> to vector<84x80xf32>
    %cst_322 = arith.constant dense<0.000000e+00> : vector<10x80xf32>
    %310 = tpu.matmul %307, %309, %cst_322 {dimension_numbers = #tpu.dot_dimension_numbers<[1], [0], [0], [1], [0, 0, 1, 1], [], []>} : vector<10x84xf32>, vector<84x80xf32>, vector<10x80xf32> -> vector<10x80xf32>
    %311 = arith.addf %306, %310 : vector<10x80xf32>
    %c2_323 = arith.constant 2 : index
    %c0_324 = arith.constant 0 : index
    %312 = vector.load %arg13[%c2_323, %c0_324] : memref<14x84xf32, #tpu.memory_space<vmem>>, vector<10x84xf32>
    %c1_325 = arith.constant 1 : index
    %c2_326 = arith.constant 2 : index
    %c0_327 = arith.constant 0 : index
    %c0_328 = arith.constant 0 : index
    %313 = vector.load %arg3[%c1_325, %c2_326, %c0_327, %c0_328] : memref<2x5x84x80xf32, #tpu.memory_space<vmem>>, vector<1x1x84x80xf32>
    %314 = vector.shape_cast %313 : vector<1x1x84x80xf32> to vector<84x80xf32>
    %cst_329 = arith.constant dense<0.000000e+00> : vector<10x80xf32>
    %315 = tpu.matmul %312, %314, %cst_329 {dimension_numbers = #tpu.dot_dimension_numbers<[1], [0], [0], [1], [0, 0, 1, 1], [], []>} : vector<10x84xf32>, vector<84x80xf32>, vector<10x80xf32> -> vector<10x80xf32>
    %316 = arith.addf %311, %315 : vector<10x80xf32>
    %c3_330 = arith.constant 3 : index
    %c0_331 = arith.constant 0 : index
    %317 = vector.load %arg13[%c3_330, %c0_331] : memref<14x84xf32, #tpu.memory_space<vmem>>, vector<10x84xf32>
    %c1_332 = arith.constant 1 : index
    %c3_333 = arith.constant 3 : index
    %c0_334 = arith.constant 0 : index
    %c0_335 = arith.constant 0 : index
    %318 = vector.load %arg3[%c1_332, %c3_333, %c0_334, %c0_335] : memref<2x5x84x80xf32, #tpu.memory_space<vmem>>, vector<1x1x84x80xf32>
    %319 = vector.shape_cast %318 : vector<1x1x84x80xf32> to vector<84x80xf32>
    %cst_336 = arith.constant dense<0.000000e+00> : vector<10x80xf32>
    %320 = tpu.matmul %317, %319, %cst_336 {dimension_numbers = #tpu.dot_dimension_numbers<[1], [0], [0], [1], [0, 0, 1, 1], [], []>} : vector<10x84xf32>, vector<84x80xf32>, vector<10x80xf32> -> vector<10x80xf32>
    %321 = arith.addf %316, %320 : vector<10x80xf32>
    %c4_337 = arith.constant 4 : index
    %c0_338 = arith.constant 0 : index
    %322 = vector.load %arg13[%c4_337, %c0_338] : memref<14x84xf32, #tpu.memory_space<vmem>>, vector<10x84xf32>
    %c1_339 = arith.constant 1 : index
    %c4_340 = arith.constant 4 : index
    %c0_341 = arith.constant 0 : index
    %c0_342 = arith.constant 0 : index
    %323 = vector.load %arg3[%c1_339, %c4_340, %c0_341, %c0_342] : memref<2x5x84x80xf32, #tpu.memory_space<vmem>>, vector<1x1x84x80xf32>
    %324 = vector.shape_cast %323 : vector<1x1x84x80xf32> to vector<84x80xf32>
    %cst_343 = arith.constant dense<0.000000e+00> : vector<10x80xf32>
    %325 = tpu.matmul %322, %324, %cst_343 {dimension_numbers = #tpu.dot_dimension_numbers<[1], [0], [0], [1], [0, 0, 1, 1], [], []>} : vector<10x84xf32>, vector<84x80xf32>, vector<10x80xf32> -> vector<10x80xf32>
    %326 = arith.addf %321, %325 : vector<10x80xf32>
    %c1_344 = arith.constant 1 : index
    %c0_345 = arith.constant 0 : index
    %c0_346 = arith.constant 0 : index
    %327 = vector.load %arg14[%c1_344, %c0_345, %c0_346] : memref<2x10x80xf32, #tpu.memory_space<vmem>>, vector<1x10x80xf32>
    %328 = vector.shape_cast %327 : vector<1x10x80xf32> to vector<10x80xf32>
    %329 = vector.shape_cast %326 : vector<10x80xf32> to vector<1x10x80xf32>
    tpu.vector_store %arg14[%c1_344, %c0_345, %c0_346], %329 {strides = array<i32>} : memref<2x10x80xf32, #tpu.memory_space<vmem>>, vector<1x10x80xf32>,
    %c0_347 = arith.constant 0 : index
    %c0_348 = arith.constant 0 : index
    %c0_349 = arith.constant 0 : index
    %330 = vector.load %arg14[%c0_347, %c0_348, %c0_349] : memref<2x10x80xf32, #tpu.memory_space<vmem>>, vector<1x1x80xf32>
    %331 = vector.shape_cast %330 : vector<1x1x80xf32> to vector<1x80xf32>
    %c0_350 = arith.constant 0 : index
    %c1_351 = arith.constant 1 : index
    %c0_352 = arith.constant 0 : index
    %332 = vector.load %arg14[%c0_350, %c1_351, %c0_352] : memref<2x10x80xf32, #tpu.memory_space<vmem>>, vector<1x1x80xf32>
    %333 = vector.shape_cast %332 : vector<1x1x80xf32> to vector<1x80xf32>
    %334 = arith.maximumf %331, %333 : vector<1x80xf32>
    %c1_353 = arith.constant 1 : index
    %c0_354 = arith.constant 0 : index
    %c0_355 = arith.constant 0 : index
    %335 = vector.load %arg14[%c1_353, %c0_354, %c0_355] : memref<2x10x80xf32, #tpu.memory_space<vmem>>, vector<1x1x80xf32>
    %336 = vector.shape_cast %335 : vector<1x1x80xf32> to vector<1x80xf32>
    %c1_356 = arith.constant 1 : index
    %c1_357 = arith.constant 1 : index
    %c0_358 = arith.constant 0 : index
    %337 = vector.load %arg14[%c1_356, %c1_357, %c0_358] : memref<2x10x80xf32, #tpu.memory_space<vmem>>, vector<1x1x80xf32>
    %338 = vector.shape_cast %337 : vector<1x1x80xf32> to vector<1x80xf32>
    %339 = arith.maximumf %336, %338 : vector<1x80xf32>
    %340 = arith.maximumf %334, %339 : vector<1x80xf32>
    %341 = arith.addf %340, %1 : vector<1x80xf32>
    %cst_359 = arith.constant 0.000000e+00 : f32
    %342 = vector.broadcast %cst_359 : f32 to vector<1x80xf32>
    %343 = arith.maximumf %341, %342 : vector<1x80xf32>
    %c0_360 = arith.constant 0 : index
    %c0_361 = arith.constant 0 : index
    %c0_362 = arith.constant 0 : index
    %344 = vector.load %arg15[%c0_360, %c0_361, %c0_362] : memref<5x2x80xf32, #tpu.memory_space<vmem>>, vector<1x1x80xf32>
    %345 = vector.shape_cast %344 : vector<1x1x80xf32> to vector<1x80xf32>
    %346 = vector.shape_cast %343 : vector<1x80xf32> to vector<1x1x80xf32>
    tpu.vector_store %arg15[%c0_360, %c0_361, %c0_362], %346 {strides = array<i32>} : memref<5x2x80xf32, #tpu.memory_space<vmem>>, vector<1x1x80xf32>,
    %c0_363 = arith.constant 0 : index
    %c2_364 = arith.constant 2 : index
    %c0_365 = arith.constant 0 : index
    %347 = vector.load %arg14[%c0_363, %c2_364, %c0_365] : memref<2x10x80xf32, #tpu.memory_space<vmem>>, vector<1x1x80xf32>
    %348 = vector.shape_cast %347 : vector<1x1x80xf32> to vector<1x80xf32>
    %c0_366 = arith.constant 0 : index
    %c3_367 = arith.constant 3 : index
    %c0_368 = arith.constant 0 : index
    %349 = vector.load %arg14[%c0_366, %c3_367, %c0_368] : memref<2x10x80xf32, #tpu.memory_space<vmem>>, vector<1x1x80xf32>
    %350 = vector.shape_cast %349 : vector<1x1x80xf32> to vector<1x80xf32>
    %351 = arith.maximumf %348, %350 : vector<1x80xf32>
    %c1_369 = arith.constant 1 : index
    %c2_370 = arith.constant 2 : index
    %c0_371 = arith.constant 0 : index
    %352 = vector.load %arg14[%c1_369, %c2_370, %c0_371] : memref<2x10x80xf32, #tpu.memory_space<vmem>>, vector<1x1x80xf32>
    %353 = vector.shape_cast %352 : vector<1x1x80xf32> to vector<1x80xf32>
    %c1_372 = arith.constant 1 : index
    %c3_373 = arith.constant 3 : index
    %c0_374 = arith.constant 0 : index
    %354 = vector.load %arg14[%c1_372, %c3_373, %c0_374] : memref<2x10x80xf32, #tpu.memory_space<vmem>>, vector<1x1x80xf32>
    %355 = vector.shape_cast %354 : vector<1x1x80xf32> to vector<1x80xf32>
    %356 = arith.maximumf %353, %355 : vector<1x80xf32>
    %357 = arith.maximumf %351, %356 : vector<1x80xf32>
    %358 = arith.addf %357, %1 : vector<1x80xf32>
    %cst_375 = arith.constant 0.000000e+00 : f32
    %359 = vector.broadcast %cst_375 : f32 to vector<1x80xf32>
    %360 = arith.maximumf %358, %359 : vector<1x80xf32>
    %c1_376 = arith.constant 1 : index
    %c0_377 = arith.constant 0 : index
    %c0_378 = arith.constant 0 : index
    %361 = vector.load %arg15[%c1_376, %c0_377, %c0_378] : memref<5x2x80xf32, #tpu.memory_space<vmem>>, vector<1x1x80xf32>
    %362 = vector.shape_cast %361 : vector<1x1x80xf32> to vector<1x80xf32>
    %363 = vector.shape_cast %360 : vector<1x80xf32> to vector<1x1x80xf32>
    tpu.vector_store %arg15[%c1_376, %c0_377, %c0_378], %363 {strides = array<i32>} : memref<5x2x80xf32, #tpu.memory_space<vmem>>, vector<1x1x80xf32>,
    %c0_379 = arith.constant 0 : index
    %c4_380 = arith.constant 4 : index
    %c0_381 = arith.constant 0 : index
    %364 = vector.load %arg14[%c0_379, %c4_380, %c0_381] : memref<2x10x80xf32, #tpu.memory_space<vmem>>, vector<1x1x80xf32>
    %365 = vector.shape_cast %364 : vector<1x1x80xf32> to vector<1x80xf32>
    %c0_382 = arith.constant 0 : index
    %c5_383 = arith.constant 5 : index
    %c0_384 = arith.constant 0 : index
    %366 = vector.load %arg14[%c0_382, %c5_383, %c0_384] : memref<2x10x80xf32, #tpu.memory_space<vmem>>, vector<1x1x80xf32>
    %367 = vector.shape_cast %366 : vector<1x1x80xf32> to vector<1x80xf32>
    %368 = arith.maximumf %365, %367 : vector<1x80xf32>
    %c1_385 = arith.constant 1 : index
    %c4_386 = arith.constant 4 : index
    %c0_387 = arith.constant 0 : index
    %369 = vector.load %arg14[%c1_385, %c4_386, %c0_387] : memref<2x10x80xf32, #tpu.memory_space<vmem>>, vector<1x1x80xf32>
    %370 = vector.shape_cast %369 : vector<1x1x80xf32> to vector<1x80xf32>
    %c1_388 = arith.constant 1 : index
    %c5_389 = arith.constant 5 : index
    %c0_390 = arith.constant 0 : index
    %371 = vector.load %arg14[%c1_388, %c5_389, %c0_390] : memref<2x10x80xf32, #tpu.memory_space<vmem>>, vector<1x1x80xf32>
    %372 = vector.shape_cast %371 : vector<1x1x80xf32> to vector<1x80xf32>
    %373 = arith.maximumf %370, %372 : vector<1x80xf32>
    %374 = arith.maximumf %368, %373 : vector<1x80xf32>
    %375 = arith.addf %374, %1 : vector<1x80xf32>
    %cst_391 = arith.constant 0.000000e+00 : f32
    %376 = vector.broadcast %cst_391 : f32 to vector<1x80xf32>
    %377 = arith.maximumf %375, %376 : vector<1x80xf32>
    %c2_392 = arith.constant 2 : index
    %c0_393 = arith.constant 0 : index
    %c0_394 = arith.constant 0 : index
    %378 = vector.load %arg15[%c2_392, %c0_393, %c0_394] : memref<5x2x80xf32, #tpu.memory_space<vmem>>, vector<1x1x80xf32>
    %379 = vector.shape_cast %378 : vector<1x1x80xf32> to vector<1x80xf32>
    %380 = vector.shape_cast %377 : vector<1x80xf32> to vector<1x1x80xf32>
    tpu.vector_store %arg15[%c2_392, %c0_393, %c0_394], %380 {strides = array<i32>} : memref<5x2x80xf32, #tpu.memory_space<vmem>>, vector<1x1x80xf32>,
    %c0_395 = arith.constant 0 : index
    %c6_396 = arith.constant 6 : index
    %c0_397 = arith.constant 0 : index
    %381 = vector.load %arg14[%c0_395, %c6_396, %c0_397] : memref<2x10x80xf32, #tpu.memory_space<vmem>>, vector<1x1x80xf32>
    %382 = vector.shape_cast %381 : vector<1x1x80xf32> to vector<1x80xf32>
    %c0_398 = arith.constant 0 : index
    %c7_399 = arith.constant 7 : index
    %c0_400 = arith.constant 0 : index
    %383 = vector.load %arg14[%c0_398, %c7_399, %c0_400] : memref<2x10x80xf32, #tpu.memory_space<vmem>>, vector<1x1x80xf32>
    %384 = vector.shape_cast %383 : vector<1x1x80xf32> to vector<1x80xf32>
    %385 = arith.maximumf %382, %384 : vector<1x80xf32>
    %c1_401 = arith.constant 1 : index
    %c6_402 = arith.constant 6 : index
    %c0_403 = arith.constant 0 : index
    %386 = vector.load %arg14[%c1_401, %c6_402, %c0_403] : memref<2x10x80xf32, #tpu.memory_space<vmem>>, vector<1x1x80xf32>
    %387 = vector.shape_cast %386 : vector<1x1x80xf32> to vector<1x80xf32>
    %c1_404 = arith.constant 1 : index
    %c7_405 = arith.constant 7 : index
    %c0_406 = arith.constant 0 : index
    %388 = vector.load %arg14[%c1_404, %c7_405, %c0_406] : memref<2x10x80xf32, #tpu.memory_space<vmem>>, vector<1x1x80xf32>
    %389 = vector.shape_cast %388 : vector<1x1x80xf32> to vector<1x80xf32>
    %390 = arith.maximumf %387, %389 : vector<1x80xf32>
    %391 = arith.maximumf %385, %390 : vector<1x80xf32>
    %392 = arith.addf %391, %1 : vector<1x80xf32>
    %cst_407 = arith.constant 0.000000e+00 : f32
    %393 = vector.broadcast %cst_407 : f32 to vector<1x80xf32>
    %394 = arith.maximumf %392, %393 : vector<1x80xf32>
    %c3_408 = arith.constant 3 : index
    %c0_409 = arith.constant 0 : index
    %c0_410 = arith.constant 0 : index
    %395 = vector.load %arg15[%c3_408, %c0_409, %c0_410] : memref<5x2x80xf32, #tpu.memory_space<vmem>>, vector<1x1x80xf32>
    %396 = vector.shape_cast %395 : vector<1x1x80xf32> to vector<1x80xf32>
    %397 = vector.shape_cast %394 : vector<1x80xf32> to vector<1x1x80xf32>
    tpu.vector_store %arg15[%c3_408, %c0_409, %c0_410], %397 {strides = array<i32>} : memref<5x2x80xf32, #tpu.memory_space<vmem>>, vector<1x1x80xf32>,
    %c0_411 = arith.constant 0 : index
    %c8_412 = arith.constant 8 : index
    %c0_413 = arith.constant 0 : index
    %398 = vector.load %arg14[%c0_411, %c8_412, %c0_413] : memref<2x10x80xf32, #tpu.memory_space<vmem>>, vector<1x1x80xf32>
    %399 = vector.shape_cast %398 : vector<1x1x80xf32> to vector<1x80xf32>
    %c0_414 = arith.constant 0 : index
    %c9_415 = arith.constant 9 : index
    %c0_416 = arith.constant 0 : index
    %400 = vector.load %arg14[%c0_414, %c9_415, %c0_416] : memref<2x10x80xf32, #tpu.memory_space<vmem>>, vector<1x1x80xf32>
    %401 = vector.shape_cast %400 : vector<1x1x80xf32> to vector<1x80xf32>
    %402 = arith.maximumf %399, %401 : vector<1x80xf32>
    %c1_417 = arith.constant 1 : index
    %c8_418 = arith.constant 8 : index
    %c0_419 = arith.constant 0 : index
    %403 = vector.load %arg14[%c1_417, %c8_418, %c0_419] : memref<2x10x80xf32, #tpu.memory_space<vmem>>, vector<1x1x80xf32>
    %404 = vector.shape_cast %403 : vector<1x1x80xf32> to vector<1x80xf32>
    %c1_420 = arith.constant 1 : index
    %c9_421 = arith.constant 9 : index
    %c0_422 = arith.constant 0 : index
    %405 = vector.load %arg14[%c1_420, %c9_421, %c0_422] : memref<2x10x80xf32, #tpu.memory_space<vmem>>, vector<1x1x80xf32>
    %406 = vector.shape_cast %405 : vector<1x1x80xf32> to vector<1x80xf32>
    %407 = arith.maximumf %404, %406 : vector<1x80xf32>
    %408 = arith.maximumf %402, %407 : vector<1x80xf32>
    %409 = arith.addf %408, %1 : vector<1x80xf32>
    %cst_423 = arith.constant 0.000000e+00 : f32
    %410 = vector.broadcast %cst_423 : f32 to vector<1x80xf32>
    %411 = arith.maximumf %409, %410 : vector<1x80xf32>
    %c4_424 = arith.constant 4 : index
    %c0_425 = arith.constant 0 : index
    %c0_426 = arith.constant 0 : index
    %412 = vector.load %arg15[%c4_424, %c0_425, %c0_426] : memref<5x2x80xf32, #tpu.memory_space<vmem>>, vector<1x1x80xf32>
    %413 = vector.shape_cast %412 : vector<1x1x80xf32> to vector<1x80xf32>
    %414 = vector.shape_cast %411 : vector<1x80xf32> to vector<1x1x80xf32>
    tpu.vector_store %arg15[%c4_424, %c0_425, %c0_426], %414 {strides = array<i32>} : memref<5x2x80xf32, #tpu.memory_space<vmem>>, vector<1x1x80xf32>,
    %c1_427 = arith.constant 1 : index
    %c0_428 = arith.constant 0 : index
    %c0_429 = arith.constant 0 : index
    %415 = vector.load %arg0[%c1_427, %c0_428, %c0_429] : memref<2x32x32xf32, #tpu.memory_space<vmem>>, vector<1x28x32xf32>
    %416 = vector.shape_cast %415 : vector<1x28x32xf32> to vector<28x32xf32>
    %c0_430 = arith.constant 0 : index
    %c0_431 = arith.constant 0 : index
    %c0_432 = arith.constant 0 : index
    %c0_433 = arith.constant 0 : index
    %417 = vector.load %arg1[%c0_430, %c0_431, %c0_432, %c0_433] : memref<2x5x32x84xf32, #tpu.memory_space<vmem>>, vector<1x1x32x84xf32>
    %418 = vector.shape_cast %417 : vector<1x1x32x84xf32> to vector<32x84xf32>
    %cst_434 = arith.constant dense<0.000000e+00> : vector<28x84xf32>
    %419 = tpu.matmul %416, %418, %cst_434 {dimension_numbers = #tpu.dot_dimension_numbers<[1], [0], [0], [1], [0, 0, 1, 1], [], []>} : vector<28x32xf32>, vector<32x84xf32>, vector<28x84xf32> -> vector<28x84xf32>
    %c1_435 = arith.constant 1 : index
    %c1_436 = arith.constant 1 : index
    %c0_437 = arith.constant 0 : index
    %420 = vector.load %arg0[%c1_435, %c1_436, %c0_437] : memref<2x32x32xf32, #tpu.memory_space<vmem>>, vector<1x28x32xf32>
    %421 = vector.shape_cast %420 : vector<1x28x32xf32> to vector<28x32xf32>
    %c0_438 = arith.constant 0 : index
    %c1_439 = arith.constant 1 : index
    %c0_440 = arith.constant 0 : index
    %c0_441 = arith.constant 0 : index
    %422 = vector.load %arg1[%c0_438, %c1_439, %c0_440, %c0_441] : memref<2x5x32x84xf32, #tpu.memory_space<vmem>>, vector<1x1x32x84xf32>
    %423 = vector.shape_cast %422 : vector<1x1x32x84xf32> to vector<32x84xf32>
    %cst_442 = arith.constant dense<0.000000e+00> : vector<28x84xf32>
    %424 = tpu.matmul %421, %423, %cst_442 {dimension_numbers = #tpu.dot_dimension_numbers<[1], [0], [0], [1], [0, 0, 1, 1], [], []>} : vector<28x32xf32>, vector<32x84xf32>, vector<28x84xf32> -> vector<28x84xf32>
    %425 = arith.addf %419, %424 : vector<28x84xf32>
    %c1_443 = arith.constant 1 : index
    %c2_444 = arith.constant 2 : index
    %c0_445 = arith.constant 0 : index
    %426 = vector.load %arg0[%c1_443, %c2_444, %c0_445] : memref<2x32x32xf32, #tpu.memory_space<vmem>>, vector<1x28x32xf32>
    %427 = vector.shape_cast %426 : vector<1x28x32xf32> to vector<28x32xf32>
    %c0_446 = arith.constant 0 : index
    %c2_447 = arith.constant 2 : index
    %c0_448 = arith.constant 0 : index
    %c0_449 = arith.constant 0 : index
    %428 = vector.load %arg1[%c0_446, %c2_447, %c0_448, %c0_449] : memref<2x5x32x84xf32, #tpu.memory_space<vmem>>, vector<1x1x32x84xf32>
    %429 = vector.shape_cast %428 : vector<1x1x32x84xf32> to vector<32x84xf32>
    %cst_450 = arith.constant dense<0.000000e+00> : vector<28x84xf32>
    %430 = tpu.matmul %427, %429, %cst_450 {dimension_numbers = #tpu.dot_dimension_numbers<[1], [0], [0], [1], [0, 0, 1, 1], [], []>} : vector<28x32xf32>, vector<32x84xf32>, vector<28x84xf32> -> vector<28x84xf32>
    %431 = arith.addf %425, %430 : vector<28x84xf32>
    %c1_451 = arith.constant 1 : index
    %c3_452 = arith.constant 3 : index
    %c0_453 = arith.constant 0 : index
    %432 = vector.load %arg0[%c1_451, %c3_452, %c0_453] : memref<2x32x32xf32, #tpu.memory_space<vmem>>, vector<1x28x32xf32>
    %433 = vector.shape_cast %432 : vector<1x28x32xf32> to vector<28x32xf32>
    %c0_454 = arith.constant 0 : index
    %c3_455 = arith.constant 3 : index
    %c0_456 = arith.constant 0 : index
    %c0_457 = arith.constant 0 : index
    %434 = vector.load %arg1[%c0_454, %c3_455, %c0_456, %c0_457] : memref<2x5x32x84xf32, #tpu.memory_space<vmem>>, vector<1x1x32x84xf32>
    %435 = vector.shape_cast %434 : vector<1x1x32x84xf32> to vector<32x84xf32>
    %cst_458 = arith.constant dense<0.000000e+00> : vector<28x84xf32>
    %436 = tpu.matmul %433, %435, %cst_458 {dimension_numbers = #tpu.dot_dimension_numbers<[1], [0], [0], [1], [0, 0, 1, 1], [], []>} : vector<28x32xf32>, vector<32x84xf32>, vector<28x84xf32> -> vector<28x84xf32>
    %437 = arith.addf %431, %436 : vector<28x84xf32>
    %c1_459 = arith.constant 1 : index
    %c4_460 = arith.constant 4 : index
    %c0_461 = arith.constant 0 : index
    %438 = vector.load %arg0[%c1_459, %c4_460, %c0_461] : memref<2x32x32xf32, #tpu.memory_space<vmem>>, vector<1x28x32xf32>
    %439 = vector.shape_cast %438 : vector<1x28x32xf32> to vector<28x32xf32>
    %c0_462 = arith.constant 0 : index
    %c4_463 = arith.constant 4 : index
    %c0_464 = arith.constant 0 : index
    %c0_465 = arith.constant 0 : index
    %440 = vector.load %arg1[%c0_462, %c4_463, %c0_464, %c0_465] : memref<2x5x32x84xf32, #tpu.memory_space<vmem>>, vector<1x1x32x84xf32>
    %441 = vector.shape_cast %440 : vector<1x1x32x84xf32> to vector<32x84xf32>
    %cst_466 = arith.constant dense<0.000000e+00> : vector<28x84xf32>
    %442 = tpu.matmul %439, %441, %cst_466 {dimension_numbers = #tpu.dot_dimension_numbers<[1], [0], [0], [1], [0, 0, 1, 1], [], []>} : vector<28x32xf32>, vector<32x84xf32>, vector<28x84xf32> -> vector<28x84xf32>
    %443 = arith.addf %437, %442 : vector<28x84xf32>
    %c0_467 = arith.constant 0 : index
    %c0_468 = arith.constant 0 : index
    %c0_469 = arith.constant 0 : index
    %444 = vector.load %arg12[%c0_467, %c0_468, %c0_469] : memref<2x28x84xf32, #tpu.memory_space<vmem>>, vector<1x28x84xf32>
    %445 = vector.shape_cast %444 : vector<1x28x84xf32> to vector<28x84xf32>
    %446 = vector.shape_cast %443 : vector<28x84xf32> to vector<1x28x84xf32>
    tpu.vector_store %arg12[%c0_467, %c0_468, %c0_469], %446 {strides = array<i32>} : memref<2x28x84xf32, #tpu.memory_space<vmem>>, vector<1x28x84xf32>,
    %c1_470 = arith.constant 1 : index
    %c0_471 = arith.constant 0 : index
    %c0_472 = arith.constant 0 : index
    %447 = vector.load %arg0[%c1_470, %c0_471, %c0_472] : memref<2x32x32xf32, #tpu.memory_space<vmem>>, vector<1x28x32xf32>
    %448 = vector.shape_cast %447 : vector<1x28x32xf32> to vector<28x32xf32>
    %c1_473 = arith.constant 1 : index
    %c0_474 = arith.constant 0 : index
    %c0_475 = arith.constant 0 : index
    %c0_476 = arith.constant 0 : index
    %449 = vector.load %arg1[%c1_473, %c0_474, %c0_475, %c0_476] : memref<2x5x32x84xf32, #tpu.memory_space<vmem>>, vector<1x1x32x84xf32>
    %450 = vector.shape_cast %449 : vector<1x1x32x84xf32> to vector<32x84xf32>
    %cst_477 = arith.constant dense<0.000000e+00> : vector<28x84xf32>
    %451 = tpu.matmul %448, %450, %cst_477 {dimension_numbers = #tpu.dot_dimension_numbers<[1], [0], [0], [1], [0, 0, 1, 1], [], []>} : vector<28x32xf32>, vector<32x84xf32>, vector<28x84xf32> -> vector<28x84xf32>
    %c1_478 = arith.constant 1 : index
    %c1_479 = arith.constant 1 : index
    %c0_480 = arith.constant 0 : index
    %452 = vector.load %arg0[%c1_478, %c1_479, %c0_480] : memref<2x32x32xf32, #tpu.memory_space<vmem>>, vector<1x28x32xf32>
    %453 = vector.shape_cast %452 : vector<1x28x32xf32> to vector<28x32xf32>
    %c1_481 = arith.constant 1 : index
    %c1_482 = arith.constant 1 : index
    %c0_483 = arith.constant 0 : index
    %c0_484 = arith.constant 0 : index
    %454 = vector.load %arg1[%c1_481, %c1_482, %c0_483, %c0_484] : memref<2x5x32x84xf32, #tpu.memory_space<vmem>>, vector<1x1x32x84xf32>
    %455 = vector.shape_cast %454 : vector<1x1x32x84xf32> to vector<32x84xf32>
    %cst_485 = arith.constant dense<0.000000e+00> : vector<28x84xf32>
    %456 = tpu.matmul %453, %455, %cst_485 {dimension_numbers = #tpu.dot_dimension_numbers<[1], [0], [0], [1], [0, 0, 1, 1], [], []>} : vector<28x32xf32>, vector<32x84xf32>, vector<28x84xf32> -> vector<28x84xf32>
    %457 = arith.addf %451, %456 : vector<28x84xf32>
    %c1_486 = arith.constant 1 : index
    %c2_487 = arith.constant 2 : index
    %c0_488 = arith.constant 0 : index
    %458 = vector.load %arg0[%c1_486, %c2_487, %c0_488] : memref<2x32x32xf32, #tpu.memory_space<vmem>>, vector<1x28x32xf32>
    %459 = vector.shape_cast %458 : vector<1x28x32xf32> to vector<28x32xf32>
    %c1_489 = arith.constant 1 : index
    %c2_490 = arith.constant 2 : index
    %c0_491 = arith.constant 0 : index
    %c0_492 = arith.constant 0 : index
    %460 = vector.load %arg1[%c1_489, %c2_490, %c0_491, %c0_492] : memref<2x5x32x84xf32, #tpu.memory_space<vmem>>, vector<1x1x32x84xf32>
    %461 = vector.shape_cast %460 : vector<1x1x32x84xf32> to vector<32x84xf32>
    %cst_493 = arith.constant dense<0.000000e+00> : vector<28x84xf32>
    %462 = tpu.matmul %459, %461, %cst_493 {dimension_numbers = #tpu.dot_dimension_numbers<[1], [0], [0], [1], [0, 0, 1, 1], [], []>} : vector<28x32xf32>, vector<32x84xf32>, vector<28x84xf32> -> vector<28x84xf32>
    %463 = arith.addf %457, %462 : vector<28x84xf32>
    %c1_494 = arith.constant 1 : index
    %c3_495 = arith.constant 3 : index
    %c0_496 = arith.constant 0 : index
    %464 = vector.load %arg0[%c1_494, %c3_495, %c0_496] : memref<2x32x32xf32, #tpu.memory_space<vmem>>, vector<1x28x32xf32>
    %465 = vector.shape_cast %464 : vector<1x28x32xf32> to vector<28x32xf32>
    %c1_497 = arith.constant 1 : index
    %c3_498 = arith.constant 3 : index
    %c0_499 = arith.constant 0 : index
    %c0_500 = arith.constant 0 : index
    %466 = vector.load %arg1[%c1_497, %c3_498, %c0_499, %c0_500] : memref<2x5x32x84xf32, #tpu.memory_space<vmem>>, vector<1x1x32x84xf32>
    %467 = vector.shape_cast %466 : vector<1x1x32x84xf32> to vector<32x84xf32>
    %cst_501 = arith.constant dense<0.000000e+00> : vector<28x84xf32>
    %468 = tpu.matmul %465, %467, %cst_501 {dimension_numbers = #tpu.dot_dimension_numbers<[1], [0], [0], [1], [0, 0, 1, 1], [], []>} : vector<28x32xf32>, vector<32x84xf32>, vector<28x84xf32> -> vector<28x84xf32>
    %469 = arith.addf %463, %468 : vector<28x84xf32>
    %c1_502 = arith.constant 1 : index
    %c4_503 = arith.constant 4 : index
    %c0_504 = arith.constant 0 : index
    %470 = vector.load %arg0[%c1_502, %c4_503, %c0_504] : memref<2x32x32xf32, #tpu.memory_space<vmem>>, vector<1x28x32xf32>
    %471 = vector.shape_cast %470 : vector<1x28x32xf32> to vector<28x32xf32>
    %c1_505 = arith.constant 1 : index
    %c4_506 = arith.constant 4 : index
    %c0_507 = arith.constant 0 : index
    %c0_508 = arith.constant 0 : index
    %472 = vector.load %arg1[%c1_505, %c4_506, %c0_507, %c0_508] : memref<2x5x32x84xf32, #tpu.memory_space<vmem>>, vector<1x1x32x84xf32>
    %473 = vector.shape_cast %472 : vector<1x1x32x84xf32> to vector<32x84xf32>
    %cst_509 = arith.constant dense<0.000000e+00> : vector<28x84xf32>
    %474 = tpu.matmul %471, %473, %cst_509 {dimension_numbers = #tpu.dot_dimension_numbers<[1], [0], [0], [1], [0, 0, 1, 1], [], []>} : vector<28x32xf32>, vector<32x84xf32>, vector<28x84xf32> -> vector<28x84xf32>
    %475 = arith.addf %469, %474 : vector<28x84xf32>
    %c1_510 = arith.constant 1 : index
    %c0_511 = arith.constant 0 : index
    %c0_512 = arith.constant 0 : index
    %476 = vector.load %arg12[%c1_510, %c0_511, %c0_512] : memref<2x28x84xf32, #tpu.memory_space<vmem>>, vector<1x28x84xf32>
    %477 = vector.shape_cast %476 : vector<1x28x84xf32> to vector<28x84xf32>
    %478 = vector.shape_cast %475 : vector<28x84xf32> to vector<1x28x84xf32>
    tpu.vector_store %arg12[%c1_510, %c0_511, %c0_512], %478 {strides = array<i32>} : memref<2x28x84xf32, #tpu.memory_space<vmem>>, vector<1x28x84xf32>,
    %c0_513 = arith.constant 0 : index
    %c0_514 = arith.constant 0 : index
    %c0_515 = arith.constant 0 : index
    %479 = vector.load %arg12[%c0_513, %c0_514, %c0_515] : memref<2x28x84xf32, #tpu.memory_space<vmem>>, vector<1x1x84xf32>
    %480 = vector.shape_cast %479 : vector<1x1x84xf32> to vector<1x84xf32>
    %c0_516 = arith.constant 0 : index
    %c1_517 = arith.constant 1 : index
    %c0_518 = arith.constant 0 : index
    %481 = vector.load %arg12[%c0_516, %c1_517, %c0_518] : memref<2x28x84xf32, #tpu.memory_space<vmem>>, vector<1x1x84xf32>
    %482 = vector.shape_cast %481 : vector<1x1x84xf32> to vector<1x84xf32>
    %483 = arith.maximumf %480, %482 : vector<1x84xf32>
    %c1_519 = arith.constant 1 : index
    %c0_520 = arith.constant 0 : index
    %c0_521 = arith.constant 0 : index
    %484 = vector.load %arg12[%c1_519, %c0_520, %c0_521] : memref<2x28x84xf32, #tpu.memory_space<vmem>>, vector<1x1x84xf32>
    %485 = vector.shape_cast %484 : vector<1x1x84xf32> to vector<1x84xf32>
    %c1_522 = arith.constant 1 : index
    %c1_523 = arith.constant 1 : index
    %c0_524 = arith.constant 0 : index
    %486 = vector.load %arg12[%c1_522, %c1_523, %c0_524] : memref<2x28x84xf32, #tpu.memory_space<vmem>>, vector<1x1x84xf32>
    %487 = vector.shape_cast %486 : vector<1x1x84xf32> to vector<1x84xf32>
    %488 = arith.maximumf %485, %487 : vector<1x84xf32>
    %489 = arith.maximumf %483, %488 : vector<1x84xf32>
    %490 = arith.addf %489, %0 : vector<1x84xf32>
    %cst_525 = arith.constant 0.000000e+00 : f32
    %491 = vector.broadcast %cst_525 : f32 to vector<1x84xf32>
    %492 = arith.maximumf %490, %491 : vector<1x84xf32>
    %c0_526 = arith.constant 0 : index
    %c0_527 = arith.constant 0 : index
    %493 = vector.load %arg13[%c0_526, %c0_527] : memref<14x84xf32, #tpu.memory_space<vmem>>, vector<1x84xf32>
    tpu.vector_store %arg13[%c0_526, %c0_527], %492 {strides = array<i32>} : memref<14x84xf32, #tpu.memory_space<vmem>>, vector<1x84xf32>,
    %c0_528 = arith.constant 0 : index
    %c2_529 = arith.constant 2 : index
    %c0_530 = arith.constant 0 : index
    %494 = vector.load %arg12[%c0_528, %c2_529, %c0_530] : memref<2x28x84xf32, #tpu.memory_space<vmem>>, vector<1x1x84xf32>
    %495 = vector.shape_cast %494 : vector<1x1x84xf32> to vector<1x84xf32>
    %c0_531 = arith.constant 0 : index
    %c3_532 = arith.constant 3 : index
    %c0_533 = arith.constant 0 : index
    %496 = vector.load %arg12[%c0_531, %c3_532, %c0_533] : memref<2x28x84xf32, #tpu.memory_space<vmem>>, vector<1x1x84xf32>
    %497 = vector.shape_cast %496 : vector<1x1x84xf32> to vector<1x84xf32>
    %498 = arith.maximumf %495, %497 : vector<1x84xf32>
    %c1_534 = arith.constant 1 : index
    %c2_535 = arith.constant 2 : index
    %c0_536 = arith.constant 0 : index
    %499 = vector.load %arg12[%c1_534, %c2_535, %c0_536] : memref<2x28x84xf32, #tpu.memory_space<vmem>>, vector<1x1x84xf32>
    %500 = vector.shape_cast %499 : vector<1x1x84xf32> to vector<1x84xf32>
    %c1_537 = arith.constant 1 : index
    %c3_538 = arith.constant 3 : index
    %c0_539 = arith.constant 0 : index
    %501 = vector.load %arg12[%c1_537, %c3_538, %c0_539] : memref<2x28x84xf32, #tpu.memory_space<vmem>>, vector<1x1x84xf32>
    %502 = vector.shape_cast %501 : vector<1x1x84xf32> to vector<1x84xf32>
    %503 = arith.maximumf %500, %502 : vector<1x84xf32>
    %504 = arith.maximumf %498, %503 : vector<1x84xf32>
    %505 = arith.addf %504, %0 : vector<1x84xf32>
    %cst_540 = arith.constant 0.000000e+00 : f32
    %506 = vector.broadcast %cst_540 : f32 to vector<1x84xf32>
    %507 = arith.maximumf %505, %506 : vector<1x84xf32>
    %c1_541 = arith.constant 1 : index
    %c0_542 = arith.constant 0 : index
    %508 = vector.load %arg13[%c1_541, %c0_542] : memref<14x84xf32, #tpu.memory_space<vmem>>, vector<1x84xf32>
    tpu.vector_store %arg13[%c1_541, %c0_542], %507 {strides = array<i32>} : memref<14x84xf32, #tpu.memory_space<vmem>>, vector<1x84xf32>,
    %c0_543 = arith.constant 0 : index
    %c4_544 = arith.constant 4 : index
    %c0_545 = arith.constant 0 : index
    %509 = vector.load %arg12[%c0_543, %c4_544, %c0_545] : memref<2x28x84xf32, #tpu.memory_space<vmem>>, vector<1x1x84xf32>
    %510 = vector.shape_cast %509 : vector<1x1x84xf32> to vector<1x84xf32>
    %c0_546 = arith.constant 0 : index
    %c5_547 = arith.constant 5 : index
    %c0_548 = arith.constant 0 : index
    %511 = vector.load %arg12[%c0_546, %c5_547, %c0_548] : memref<2x28x84xf32, #tpu.memory_space<vmem>>, vector<1x1x84xf32>
    %512 = vector.shape_cast %511 : vector<1x1x84xf32> to vector<1x84xf32>
    %513 = arith.maximumf %510, %512 : vector<1x84xf32>
    %c1_549 = arith.constant 1 : index
    %c4_550 = arith.constant 4 : index
    %c0_551 = arith.constant 0 : index
    %514 = vector.load %arg12[%c1_549, %c4_550, %c0_551] : memref<2x28x84xf32, #tpu.memory_space<vmem>>, vector<1x1x84xf32>
    %515 = vector.shape_cast %514 : vector<1x1x84xf32> to vector<1x84xf32>
    %c1_552 = arith.constant 1 : index
    %c5_553 = arith.constant 5 : index
    %c0_554 = arith.constant 0 : index
    %516 = vector.load %arg12[%c1_552, %c5_553, %c0_554] : memref<2x28x84xf32, #tpu.memory_space<vmem>>, vector<1x1x84xf32>
    %517 = vector.shape_cast %516 : vector<1x1x84xf32> to vector<1x84xf32>
    %518 = arith.maximumf %515, %517 : vector<1x84xf32>
    %519 = arith.maximumf %513, %518 : vector<1x84xf32>
    %520 = arith.addf %519, %0 : vector<1x84xf32>
    %cst_555 = arith.constant 0.000000e+00 : f32
    %521 = vector.broadcast %cst_555 : f32 to vector<1x84xf32>
    %522 = arith.maximumf %520, %521 : vector<1x84xf32>
    %c2_556 = arith.constant 2 : index
    %c0_557 = arith.constant 0 : index
    %523 = vector.load %arg13[%c2_556, %c0_557] : memref<14x84xf32, #tpu.memory_space<vmem>>, vector<1x84xf32>
    tpu.vector_store %arg13[%c2_556, %c0_557], %522 {strides = array<i32>} : memref<14x84xf32, #tpu.memory_space<vmem>>, vector<1x84xf32>,
    %c0_558 = arith.constant 0 : index
    %c6_559 = arith.constant 6 : index
    %c0_560 = arith.constant 0 : index
    %524 = vector.load %arg12[%c0_558, %c6_559, %c0_560] : memref<2x28x84xf32, #tpu.memory_space<vmem>>, vector<1x1x84xf32>
    %525 = vector.shape_cast %524 : vector<1x1x84xf32> to vector<1x84xf32>
    %c0_561 = arith.constant 0 : index
    %c7_562 = arith.constant 7 : index
    %c0_563 = arith.constant 0 : index
    %526 = vector.load %arg12[%c0_561, %c7_562, %c0_563] : memref<2x28x84xf32, #tpu.memory_space<vmem>>, vector<1x1x84xf32>
    %527 = vector.shape_cast %526 : vector<1x1x84xf32> to vector<1x84xf32>
    %528 = arith.maximumf %525, %527 : vector<1x84xf32>
    %c1_564 = arith.constant 1 : index
    %c6_565 = arith.constant 6 : index
    %c0_566 = arith.constant 0 : index
    %529 = vector.load %arg12[%c1_564, %c6_565, %c0_566] : memref<2x28x84xf32, #tpu.memory_space<vmem>>, vector<1x1x84xf32>
    %530 = vector.shape_cast %529 : vector<1x1x84xf32> to vector<1x84xf32>
    %c1_567 = arith.constant 1 : index
    %c7_568 = arith.constant 7 : index
    %c0_569 = arith.constant 0 : index
    %531 = vector.load %arg12[%c1_567, %c7_568, %c0_569] : memref<2x28x84xf32, #tpu.memory_space<vmem>>, vector<1x1x84xf32>
    %532 = vector.shape_cast %531 : vector<1x1x84xf32> to vector<1x84xf32>
    %533 = arith.maximumf %530, %532 : vector<1x84xf32>
    %534 = arith.maximumf %528, %533 : vector<1x84xf32>
    %535 = arith.addf %534, %0 : vector<1x84xf32>
    %cst_570 = arith.constant 0.000000e+00 : f32
    %536 = vector.broadcast %cst_570 : f32 to vector<1x84xf32>
    %537 = arith.maximumf %535, %536 : vector<1x84xf32>
    %c3_571 = arith.constant 3 : index
    %c0_572 = arith.constant 0 : index
    %538 = vector.load %arg13[%c3_571, %c0_572] : memref<14x84xf32, #tpu.memory_space<vmem>>, vector<1x84xf32>
    tpu.vector_store %arg13[%c3_571, %c0_572], %537 {strides = array<i32>} : memref<14x84xf32, #tpu.memory_space<vmem>>, vector<1x84xf32>,
    %c0_573 = arith.constant 0 : index
    %c8_574 = arith.constant 8 : index
    %c0_575 = arith.constant 0 : index
    %539 = vector.load %arg12[%c0_573, %c8_574, %c0_575] : memref<2x28x84xf32, #tpu.memory_space<vmem>>, vector<1x1x84xf32>
    %540 = vector.shape_cast %539 : vector<1x1x84xf32> to vector<1x84xf32>
    %c0_576 = arith.constant 0 : index
    %c9_577 = arith.constant 9 : index
    %c0_578 = arith.constant 0 : index
    %541 = vector.load %arg12[%c0_576, %c9_577, %c0_578] : memref<2x28x84xf32, #tpu.memory_space<vmem>>, vector<1x1x84xf32>
    %542 = vector.shape_cast %541 : vector<1x1x84xf32> to vector<1x84xf32>
    %543 = arith.maximumf %540, %542 : vector<1x84xf32>
    %c1_579 = arith.constant 1 : index
    %c8_580 = arith.constant 8 : index
    %c0_581 = arith.constant 0 : index
    %544 = vector.load %arg12[%c1_579, %c8_580, %c0_581] : memref<2x28x84xf32, #tpu.memory_space<vmem>>, vector<1x1x84xf32>
    %545 = vector.shape_cast %544 : vector<1x1x84xf32> to vector<1x84xf32>
    %c1_582 = arith.constant 1 : index
    %c9_583 = arith.constant 9 : index
    %c0_584 = arith.constant 0 : index
    %546 = vector.load %arg12[%c1_582, %c9_583, %c0_584] : memref<2x28x84xf32, #tpu.memory_space<vmem>>, vector<1x1x84xf32>
    %547 = vector.shape_cast %546 : vector<1x1x84xf32> to vector<1x84xf32>
    %548 = arith.maximumf %545, %547 : vector<1x84xf32>
    %549 = arith.maximumf %543, %548 : vector<1x84xf32>
    %550 = arith.addf %549, %0 : vector<1x84xf32>
    %cst_585 = arith.constant 0.000000e+00 : f32
    %551 = vector.broadcast %cst_585 : f32 to vector<1x84xf32>
    %552 = arith.maximumf %550, %551 : vector<1x84xf32>
    %c4_586 = arith.constant 4 : index
    %c0_587 = arith.constant 0 : index
    %553 = vector.load %arg13[%c4_586, %c0_587] : memref<14x84xf32, #tpu.memory_space<vmem>>, vector<1x84xf32>
    tpu.vector_store %arg13[%c4_586, %c0_587], %552 {strides = array<i32>} : memref<14x84xf32, #tpu.memory_space<vmem>>, vector<1x84xf32>,
    %c0_588 = arith.constant 0 : index
    %c10_589 = arith.constant 10 : index
    %c0_590 = arith.constant 0 : index
    %554 = vector.load %arg12[%c0_588, %c10_589, %c0_590] : memref<2x28x84xf32, #tpu.memory_space<vmem>>, vector<1x1x84xf32>
    %555 = vector.shape_cast %554 : vector<1x1x84xf32> to vector<1x84xf32>
    %c0_591 = arith.constant 0 : index
    %c11_592 = arith.constant 11 : index
    %c0_593 = arith.constant 0 : index
    %556 = vector.load %arg12[%c0_591, %c11_592, %c0_593] : memref<2x28x84xf32, #tpu.memory_space<vmem>>, vector<1x1x84xf32>
    %557 = vector.shape_cast %556 : vector<1x1x84xf32> to vector<1x84xf32>
    %558 = arith.maximumf %555, %557 : vector<1x84xf32>
    %c1_594 = arith.constant 1 : index
    %c10_595 = arith.constant 10 : index
    %c0_596 = arith.constant 0 : index
    %559 = vector.load %arg12[%c1_594, %c10_595, %c0_596] : memref<2x28x84xf32, #tpu.memory_space<vmem>>, vector<1x1x84xf32>
    %560 = vector.shape_cast %559 : vector<1x1x84xf32> to vector<1x84xf32>
    %c1_597 = arith.constant 1 : index
    %c11_598 = arith.constant 11 : index
    %c0_599 = arith.constant 0 : index
    %561 = vector.load %arg12[%c1_597, %c11_598, %c0_599] : memref<2x28x84xf32, #tpu.memory_space<vmem>>, vector<1x1x84xf32>
    %562 = vector.shape_cast %561 : vector<1x1x84xf32> to vector<1x84xf32>
    %563 = arith.maximumf %560, %562 : vector<1x84xf32>
    %564 = arith.maximumf %558, %563 : vector<1x84xf32>
    %565 = arith.addf %564, %0 : vector<1x84xf32>
    %cst_600 = arith.constant 0.000000e+00 : f32
    %566 = vector.broadcast %cst_600 : f32 to vector<1x84xf32>
    %567 = arith.maximumf %565, %566 : vector<1x84xf32>
    %c5_601 = arith.constant 5 : index
    %c0_602 = arith.constant 0 : index
    %568 = vector.load %arg13[%c5_601, %c0_602] : memref<14x84xf32, #tpu.memory_space<vmem>>, vector<1x84xf32>
    tpu.vector_store %arg13[%c5_601, %c0_602], %567 {strides = array<i32>} : memref<14x84xf32, #tpu.memory_space<vmem>>, vector<1x84xf32>,
    %c0_603 = arith.constant 0 : index
    %c12_604 = arith.constant 12 : index
    %c0_605 = arith.constant 0 : index
    %569 = vector.load %arg12[%c0_603, %c12_604, %c0_605] : memref<2x28x84xf32, #tpu.memory_space<vmem>>, vector<1x1x84xf32>
    %570 = vector.shape_cast %569 : vector<1x1x84xf32> to vector<1x84xf32>
    %c0_606 = arith.constant 0 : index
    %c13_607 = arith.constant 13 : index
    %c0_608 = arith.constant 0 : index
    %571 = vector.load %arg12[%c0_606, %c13_607, %c0_608] : memref<2x28x84xf32, #tpu.memory_space<vmem>>, vector<1x1x84xf32>
    %572 = vector.shape_cast %571 : vector<1x1x84xf32> to vector<1x84xf32>
    %573 = arith.maximumf %570, %572 : vector<1x84xf32>
    %c1_609 = arith.constant 1 : index
    %c12_610 = arith.constant 12 : index
    %c0_611 = arith.constant 0 : index
    %574 = vector.load %arg12[%c1_609, %c12_610, %c0_611] : memref<2x28x84xf32, #tpu.memory_space<vmem>>, vector<1x1x84xf32>
    %575 = vector.shape_cast %574 : vector<1x1x84xf32> to vector<1x84xf32>
    %c1_612 = arith.constant 1 : index
    %c13_613 = arith.constant 13 : index
    %c0_614 = arith.constant 0 : index
    %576 = vector.load %arg12[%c1_612, %c13_613, %c0_614] : memref<2x28x84xf32, #tpu.memory_space<vmem>>, vector<1x1x84xf32>
    %577 = vector.shape_cast %576 : vector<1x1x84xf32> to vector<1x84xf32>
    %578 = arith.maximumf %575, %577 : vector<1x84xf32>
    %579 = arith.maximumf %573, %578 : vector<1x84xf32>
    %580 = arith.addf %579, %0 : vector<1x84xf32>
    %cst_615 = arith.constant 0.000000e+00 : f32
    %581 = vector.broadcast %cst_615 : f32 to vector<1x84xf32>
    %582 = arith.maximumf %580, %581 : vector<1x84xf32>
    %c6_616 = arith.constant 6 : index
    %c0_617 = arith.constant 0 : index
    %583 = vector.load %arg13[%c6_616, %c0_617] : memref<14x84xf32, #tpu.memory_space<vmem>>, vector<1x84xf32>
    tpu.vector_store %arg13[%c6_616, %c0_617], %582 {strides = array<i32>} : memref<14x84xf32, #tpu.memory_space<vmem>>, vector<1x84xf32>,
    %c0_618 = arith.constant 0 : index
    %c14_619 = arith.constant 14 : index
    %c0_620 = arith.constant 0 : index
    %584 = vector.load %arg12[%c0_618, %c14_619, %c0_620] : memref<2x28x84xf32, #tpu.memory_space<vmem>>, vector<1x1x84xf32>
    %585 = vector.shape_cast %584 : vector<1x1x84xf32> to vector<1x84xf32>
    %c0_621 = arith.constant 0 : index
    %c15_622 = arith.constant 15 : index
    %c0_623 = arith.constant 0 : index
    %586 = vector.load %arg12[%c0_621, %c15_622, %c0_623] : memref<2x28x84xf32, #tpu.memory_space<vmem>>, vector<1x1x84xf32>
    %587 = vector.shape_cast %586 : vector<1x1x84xf32> to vector<1x84xf32>
    %588 = arith.maximumf %585, %587 : vector<1x84xf32>
    %c1_624 = arith.constant 1 : index
    %c14_625 = arith.constant 14 : index
    %c0_626 = arith.constant 0 : index
    %589 = vector.load %arg12[%c1_624, %c14_625, %c0_626] : memref<2x28x84xf32, #tpu.memory_space<vmem>>, vector<1x1x84xf32>
    %590 = vector.shape_cast %589 : vector<1x1x84xf32> to vector<1x84xf32>
    %c1_627 = arith.constant 1 : index
    %c15_628 = arith.constant 15 : index
    %c0_629 = arith.constant 0 : index
    %591 = vector.load %arg12[%c1_627, %c15_628, %c0_629] : memref<2x28x84xf32, #tpu.memory_space<vmem>>, vector<1x1x84xf32>
    %592 = vector.shape_cast %591 : vector<1x1x84xf32> to vector<1x84xf32>
    %593 = arith.maximumf %590, %592 : vector<1x84xf32>
    %594 = arith.maximumf %588, %593 : vector<1x84xf32>
    %595 = arith.addf %594, %0 : vector<1x84xf32>
    %cst_630 = arith.constant 0.000000e+00 : f32
    %596 = vector.broadcast %cst_630 : f32 to vector<1x84xf32>
    %597 = arith.maximumf %595, %596 : vector<1x84xf32>
    %c7_631 = arith.constant 7 : index
    %c0_632 = arith.constant 0 : index
    %598 = vector.load %arg13[%c7_631, %c0_632] : memref<14x84xf32, #tpu.memory_space<vmem>>, vector<1x84xf32>
    tpu.vector_store %arg13[%c7_631, %c0_632], %597 {strides = array<i32>} : memref<14x84xf32, #tpu.memory_space<vmem>>, vector<1x84xf32>,
    %c0_633 = arith.constant 0 : index
    %c16_634 = arith.constant 16 : index
    %c0_635 = arith.constant 0 : index
    %599 = vector.load %arg12[%c0_633, %c16_634, %c0_635] : memref<2x28x84xf32, #tpu.memory_space<vmem>>, vector<1x1x84xf32>
    %600 = vector.shape_cast %599 : vector<1x1x84xf32> to vector<1x84xf32>
    %c0_636 = arith.constant 0 : index
    %c17_637 = arith.constant 17 : index
    %c0_638 = arith.constant 0 : index
    %601 = vector.load %arg12[%c0_636, %c17_637, %c0_638] : memref<2x28x84xf32, #tpu.memory_space<vmem>>, vector<1x1x84xf32>
    %602 = vector.shape_cast %601 : vector<1x1x84xf32> to vector<1x84xf32>
    %603 = arith.maximumf %600, %602 : vector<1x84xf32>
    %c1_639 = arith.constant 1 : index
    %c16_640 = arith.constant 16 : index
    %c0_641 = arith.constant 0 : index
    %604 = vector.load %arg12[%c1_639, %c16_640, %c0_641] : memref<2x28x84xf32, #tpu.memory_space<vmem>>, vector<1x1x84xf32>
    %605 = vector.shape_cast %604 : vector<1x1x84xf32> to vector<1x84xf32>
    %c1_642 = arith.constant 1 : index
    %c17_643 = arith.constant 17 : index
    %c0_644 = arith.constant 0 : index
    %606 = vector.load %arg12[%c1_642, %c17_643, %c0_644] : memref<2x28x84xf32, #tpu.memory_space<vmem>>, vector<1x1x84xf32>
    %607 = vector.shape_cast %606 : vector<1x1x84xf32> to vector<1x84xf32>
    %608 = arith.maximumf %605, %607 : vector<1x84xf32>
    %609 = arith.maximumf %603, %608 : vector<1x84xf32>
    %610 = arith.addf %609, %0 : vector<1x84xf32>
    %cst_645 = arith.constant 0.000000e+00 : f32
    %611 = vector.broadcast %cst_645 : f32 to vector<1x84xf32>
    %612 = arith.maximumf %610, %611 : vector<1x84xf32>
    %c8_646 = arith.constant 8 : index
    %c0_647 = arith.constant 0 : index
    %613 = vector.load %arg13[%c8_646, %c0_647] : memref<14x84xf32, #tpu.memory_space<vmem>>, vector<1x84xf32>
    tpu.vector_store %arg13[%c8_646, %c0_647], %612 {strides = array<i32>} : memref<14x84xf32, #tpu.memory_space<vmem>>, vector<1x84xf32>,
    %c0_648 = arith.constant 0 : index
    %c18_649 = arith.constant 18 : index
    %c0_650 = arith.constant 0 : index
    %614 = vector.load %arg12[%c0_648, %c18_649, %c0_650] : memref<2x28x84xf32, #tpu.memory_space<vmem>>, vector<1x1x84xf32>
    %615 = vector.shape_cast %614 : vector<1x1x84xf32> to vector<1x84xf32>
    %c0_651 = arith.constant 0 : index
    %c19_652 = arith.constant 19 : index
    %c0_653 = arith.constant 0 : index
    %616 = vector.load %arg12[%c0_651, %c19_652, %c0_653] : memref<2x28x84xf32, #tpu.memory_space<vmem>>, vector<1x1x84xf32>
    %617 = vector.shape_cast %616 : vector<1x1x84xf32> to vector<1x84xf32>
    %618 = arith.maximumf %615, %617 : vector<1x84xf32>
    %c1_654 = arith.constant 1 : index
    %c18_655 = arith.constant 18 : index
    %c0_656 = arith.constant 0 : index
    %619 = vector.load %arg12[%c1_654, %c18_655, %c0_656] : memref<2x28x84xf32, #tpu.memory_space<vmem>>, vector<1x1x84xf32>
    %620 = vector.shape_cast %619 : vector<1x1x84xf32> to vector<1x84xf32>
    %c1_657 = arith.constant 1 : index
    %c19_658 = arith.constant 19 : index
    %c0_659 = arith.constant 0 : index
    %621 = vector.load %arg12[%c1_657, %c19_658, %c0_659] : memref<2x28x84xf32, #tpu.memory_space<vmem>>, vector<1x1x84xf32>
    %622 = vector.shape_cast %621 : vector<1x1x84xf32> to vector<1x84xf32>
    %623 = arith.maximumf %620, %622 : vector<1x84xf32>
    %624 = arith.maximumf %618, %623 : vector<1x84xf32>
    %625 = arith.addf %624, %0 : vector<1x84xf32>
    %cst_660 = arith.constant 0.000000e+00 : f32
    %626 = vector.broadcast %cst_660 : f32 to vector<1x84xf32>
    %627 = arith.maximumf %625, %626 : vector<1x84xf32>
    %c9_661 = arith.constant 9 : index
    %c0_662 = arith.constant 0 : index
    %628 = vector.load %arg13[%c9_661, %c0_662] : memref<14x84xf32, #tpu.memory_space<vmem>>, vector<1x84xf32>
    tpu.vector_store %arg13[%c9_661, %c0_662], %627 {strides = array<i32>} : memref<14x84xf32, #tpu.memory_space<vmem>>, vector<1x84xf32>,
    %c0_663 = arith.constant 0 : index
    %c20_664 = arith.constant 20 : index
    %c0_665 = arith.constant 0 : index
    %629 = vector.load %arg12[%c0_663, %c20_664, %c0_665] : memref<2x28x84xf32, #tpu.memory_space<vmem>>, vector<1x1x84xf32>
    %630 = vector.shape_cast %629 : vector<1x1x84xf32> to vector<1x84xf32>
    %c0_666 = arith.constant 0 : index
    %c21_667 = arith.constant 21 : index
    %c0_668 = arith.constant 0 : index
    %631 = vector.load %arg12[%c0_666, %c21_667, %c0_668] : memref<2x28x84xf32, #tpu.memory_space<vmem>>, vector<1x1x84xf32>
    %632 = vector.shape_cast %631 : vector<1x1x84xf32> to vector<1x84xf32>
    %633 = arith.maximumf %630, %632 : vector<1x84xf32>
    %c1_669 = arith.constant 1 : index
    %c20_670 = arith.constant 20 : index
    %c0_671 = arith.constant 0 : index
    %634 = vector.load %arg12[%c1_669, %c20_670, %c0_671] : memref<2x28x84xf32, #tpu.memory_space<vmem>>, vector<1x1x84xf32>
    %635 = vector.shape_cast %634 : vector<1x1x84xf32> to vector<1x84xf32>
    %c1_672 = arith.constant 1 : index
    %c21_673 = arith.constant 21 : index
    %c0_674 = arith.constant 0 : index
    %636 = vector.load %arg12[%c1_672, %c21_673, %c0_674] : memref<2x28x84xf32, #tpu.memory_space<vmem>>, vector<1x1x84xf32>
    %637 = vector.shape_cast %636 : vector<1x1x84xf32> to vector<1x84xf32>
    %638 = arith.maximumf %635, %637 : vector<1x84xf32>
    %639 = arith.maximumf %633, %638 : vector<1x84xf32>
    %640 = arith.addf %639, %0 : vector<1x84xf32>
    %cst_675 = arith.constant 0.000000e+00 : f32
    %641 = vector.broadcast %cst_675 : f32 to vector<1x84xf32>
    %642 = arith.maximumf %640, %641 : vector<1x84xf32>
    %c10_676 = arith.constant 10 : index
    %c0_677 = arith.constant 0 : index
    %643 = vector.load %arg13[%c10_676, %c0_677] : memref<14x84xf32, #tpu.memory_space<vmem>>, vector<1x84xf32>
    tpu.vector_store %arg13[%c10_676, %c0_677], %642 {strides = array<i32>} : memref<14x84xf32, #tpu.memory_space<vmem>>, vector<1x84xf32>,
    %c0_678 = arith.constant 0 : index
    %c22_679 = arith.constant 22 : index
    %c0_680 = arith.constant 0 : index
    %644 = vector.load %arg12[%c0_678, %c22_679, %c0_680] : memref<2x28x84xf32, #tpu.memory_space<vmem>>, vector<1x1x84xf32>
    %645 = vector.shape_cast %644 : vector<1x1x84xf32> to vector<1x84xf32>
    %c0_681 = arith.constant 0 : index
    %c23_682 = arith.constant 23 : index
    %c0_683 = arith.constant 0 : index
    %646 = vector.load %arg12[%c0_681, %c23_682, %c0_683] : memref<2x28x84xf32, #tpu.memory_space<vmem>>, vector<1x1x84xf32>
    %647 = vector.shape_cast %646 : vector<1x1x84xf32> to vector<1x84xf32>
    %648 = arith.maximumf %645, %647 : vector<1x84xf32>
    %c1_684 = arith.constant 1 : index
    %c22_685 = arith.constant 22 : index
    %c0_686 = arith.constant 0 : index
    %649 = vector.load %arg12[%c1_684, %c22_685, %c0_686] : memref<2x28x84xf32, #tpu.memory_space<vmem>>, vector<1x1x84xf32>
    %650 = vector.shape_cast %649 : vector<1x1x84xf32> to vector<1x84xf32>
    %c1_687 = arith.constant 1 : index
    %c23_688 = arith.constant 23 : index
    %c0_689 = arith.constant 0 : index
    %651 = vector.load %arg12[%c1_687, %c23_688, %c0_689] : memref<2x28x84xf32, #tpu.memory_space<vmem>>, vector<1x1x84xf32>
    %652 = vector.shape_cast %651 : vector<1x1x84xf32> to vector<1x84xf32>
    %653 = arith.maximumf %650, %652 : vector<1x84xf32>
    %654 = arith.maximumf %648, %653 : vector<1x84xf32>
    %655 = arith.addf %654, %0 : vector<1x84xf32>
    %cst_690 = arith.constant 0.000000e+00 : f32
    %656 = vector.broadcast %cst_690 : f32 to vector<1x84xf32>
    %657 = arith.maximumf %655, %656 : vector<1x84xf32>
    %c11_691 = arith.constant 11 : index
    %c0_692 = arith.constant 0 : index
    %658 = vector.load %arg13[%c11_691, %c0_692] : memref<14x84xf32, #tpu.memory_space<vmem>>, vector<1x84xf32>
    tpu.vector_store %arg13[%c11_691, %c0_692], %657 {strides = array<i32>} : memref<14x84xf32, #tpu.memory_space<vmem>>, vector<1x84xf32>,
    %c0_693 = arith.constant 0 : index
    %c24_694 = arith.constant 24 : index
    %c0_695 = arith.constant 0 : index
    %659 = vector.load %arg12[%c0_693, %c24_694, %c0_695] : memref<2x28x84xf32, #tpu.memory_space<vmem>>, vector<1x1x84xf32>
    %660 = vector.shape_cast %659 : vector<1x1x84xf32> to vector<1x84xf32>
    %c0_696 = arith.constant 0 : index
    %c25_697 = arith.constant 25 : index
    %c0_698 = arith.constant 0 : index
    %661 = vector.load %arg12[%c0_696, %c25_697, %c0_698] : memref<2x28x84xf32, #tpu.memory_space<vmem>>, vector<1x1x84xf32>
    %662 = vector.shape_cast %661 : vector<1x1x84xf32> to vector<1x84xf32>
    %663 = arith.maximumf %660, %662 : vector<1x84xf32>
    %c1_699 = arith.constant 1 : index
    %c24_700 = arith.constant 24 : index
    %c0_701 = arith.constant 0 : index
    %664 = vector.load %arg12[%c1_699, %c24_700, %c0_701] : memref<2x28x84xf32, #tpu.memory_space<vmem>>, vector<1x1x84xf32>
    %665 = vector.shape_cast %664 : vector<1x1x84xf32> to vector<1x84xf32>
    %c1_702 = arith.constant 1 : index
    %c25_703 = arith.constant 25 : index
    %c0_704 = arith.constant 0 : index
    %666 = vector.load %arg12[%c1_702, %c25_703, %c0_704] : memref<2x28x84xf32, #tpu.memory_space<vmem>>, vector<1x1x84xf32>
    %667 = vector.shape_cast %666 : vector<1x1x84xf32> to vector<1x84xf32>
    %668 = arith.maximumf %665, %667 : vector<1x84xf32>
    %669 = arith.maximumf %663, %668 : vector<1x84xf32>
    %670 = arith.addf %669, %0 : vector<1x84xf32>
    %cst_705 = arith.constant 0.000000e+00 : f32
    %671 = vector.broadcast %cst_705 : f32 to vector<1x84xf32>
    %672 = arith.maximumf %670, %671 : vector<1x84xf32>
    %c12_706 = arith.constant 12 : index
    %c0_707 = arith.constant 0 : index
    %673 = vector.load %arg13[%c12_706, %c0_707] : memref<14x84xf32, #tpu.memory_space<vmem>>, vector<1x84xf32>
    tpu.vector_store %arg13[%c12_706, %c0_707], %672 {strides = array<i32>} : memref<14x84xf32, #tpu.memory_space<vmem>>, vector<1x84xf32>,
    %c0_708 = arith.constant 0 : index
    %c26_709 = arith.constant 26 : index
    %c0_710 = arith.constant 0 : index
    %674 = vector.load %arg12[%c0_708, %c26_709, %c0_710] : memref<2x28x84xf32, #tpu.memory_space<vmem>>, vector<1x1x84xf32>
    %675 = vector.shape_cast %674 : vector<1x1x84xf32> to vector<1x84xf32>
    %c0_711 = arith.constant 0 : index
    %c27_712 = arith.constant 27 : index
    %c0_713 = arith.constant 0 : index
    %676 = vector.load %arg12[%c0_711, %c27_712, %c0_713] : memref<2x28x84xf32, #tpu.memory_space<vmem>>, vector<1x1x84xf32>
    %677 = vector.shape_cast %676 : vector<1x1x84xf32> to vector<1x84xf32>
    %678 = arith.maximumf %675, %677 : vector<1x84xf32>
    %c1_714 = arith.constant 1 : index
    %c26_715 = arith.constant 26 : index
    %c0_716 = arith.constant 0 : index
    %679 = vector.load %arg12[%c1_714, %c26_715, %c0_716] : memref<2x28x84xf32, #tpu.memory_space<vmem>>, vector<1x1x84xf32>
    %680 = vector.shape_cast %679 : vector<1x1x84xf32> to vector<1x84xf32>
    %c1_717 = arith.constant 1 : index
    %c27_718 = arith.constant 27 : index
    %c0_719 = arith.constant 0 : index
    %681 = vector.load %arg12[%c1_717, %c27_718, %c0_719] : memref<2x28x84xf32, #tpu.memory_space<vmem>>, vector<1x1x84xf32>
    %682 = vector.shape_cast %681 : vector<1x1x84xf32> to vector<1x84xf32>
    %683 = arith.maximumf %680, %682 : vector<1x84xf32>
    %684 = arith.maximumf %678, %683 : vector<1x84xf32>
    %685 = arith.addf %684, %0 : vector<1x84xf32>
    %cst_720 = arith.constant 0.000000e+00 : f32
    %686 = vector.broadcast %cst_720 : f32 to vector<1x84xf32>
    %687 = arith.maximumf %685, %686 : vector<1x84xf32>
    %c13_721 = arith.constant 13 : index
    %c0_722 = arith.constant 0 : index
    %688 = vector.load %arg13[%c13_721, %c0_722] : memref<14x84xf32, #tpu.memory_space<vmem>>, vector<1x84xf32>
    tpu.vector_store %arg13[%c13_721, %c0_722], %687 {strides = array<i32>} : memref<14x84xf32, #tpu.memory_space<vmem>>, vector<1x84xf32>,
    %c0_723 = arith.constant 0 : index
    %c0_724 = arith.constant 0 : index
    %689 = vector.load %arg13[%c0_723, %c0_724] : memref<14x84xf32, #tpu.memory_space<vmem>>, vector<10x84xf32>
    %c0_725 = arith.constant 0 : index
    %c0_726 = arith.constant 0 : index
    %c0_727 = arith.constant 0 : index
    %c0_728 = arith.constant 0 : index
    %690 = vector.load %arg3[%c0_725, %c0_726, %c0_727, %c0_728] : memref<2x5x84x80xf32, #tpu.memory_space<vmem>>, vector<1x1x84x80xf32>
    %691 = vector.shape_cast %690 : vector<1x1x84x80xf32> to vector<84x80xf32>
    %cst_729 = arith.constant dense<0.000000e+00> : vector<10x80xf32>
    %692 = tpu.matmul %689, %691, %cst_729 {dimension_numbers = #tpu.dot_dimension_numbers<[1], [0], [0], [1], [0, 0, 1, 1], [], []>} : vector<10x84xf32>, vector<84x80xf32>, vector<10x80xf32> -> vector<10x80xf32>
    %c1_730 = arith.constant 1 : index
    %c0_731 = arith.constant 0 : index
    %693 = vector.load %arg13[%c1_730, %c0_731] : memref<14x84xf32, #tpu.memory_space<vmem>>, vector<10x84xf32>
    %c0_732 = arith.constant 0 : index
    %c1_733 = arith.constant 1 : index
    %c0_734 = arith.constant 0 : index
    %c0_735 = arith.constant 0 : index
    %694 = vector.load %arg3[%c0_732, %c1_733, %c0_734, %c0_735] : memref<2x5x84x80xf32, #tpu.memory_space<vmem>>, vector<1x1x84x80xf32>
    %695 = vector.shape_cast %694 : vector<1x1x84x80xf32> to vector<84x80xf32>
    %cst_736 = arith.constant dense<0.000000e+00> : vector<10x80xf32>
    %696 = tpu.matmul %693, %695, %cst_736 {dimension_numbers = #tpu.dot_dimension_numbers<[1], [0], [0], [1], [0, 0, 1, 1], [], []>} : vector<10x84xf32>, vector<84x80xf32>, vector<10x80xf32> -> vector<10x80xf32>
    %697 = arith.addf %692, %696 : vector<10x80xf32>
    %c2_737 = arith.constant 2 : index
    %c0_738 = arith.constant 0 : index
    %698 = vector.load %arg13[%c2_737, %c0_738] : memref<14x84xf32, #tpu.memory_space<vmem>>, vector<10x84xf32>
    %c0_739 = arith.constant 0 : index
    %c2_740 = arith.constant 2 : index
    %c0_741 = arith.constant 0 : index
    %c0_742 = arith.constant 0 : index
    %699 = vector.load %arg3[%c0_739, %c2_740, %c0_741, %c0_742] : memref<2x5x84x80xf32, #tpu.memory_space<vmem>>, vector<1x1x84x80xf32>
    %700 = vector.shape_cast %699 : vector<1x1x84x80xf32> to vector<84x80xf32>
    %cst_743 = arith.constant dense<0.000000e+00> : vector<10x80xf32>
    %701 = tpu.matmul %698, %700, %cst_743 {dimension_numbers = #tpu.dot_dimension_numbers<[1], [0], [0], [1], [0, 0, 1, 1], [], []>} : vector<10x84xf32>, vector<84x80xf32>, vector<10x80xf32> -> vector<10x80xf32>
    %702 = arith.addf %697, %701 : vector<10x80xf32>
    %c3_744 = arith.constant 3 : index
    %c0_745 = arith.constant 0 : index
    %703 = vector.load %arg13[%c3_744, %c0_745] : memref<14x84xf32, #tpu.memory_space<vmem>>, vector<10x84xf32>
    %c0_746 = arith.constant 0 : index
    %c3_747 = arith.constant 3 : index
    %c0_748 = arith.constant 0 : index
    %c0_749 = arith.constant 0 : index
    %704 = vector.load %arg3[%c0_746, %c3_747, %c0_748, %c0_749] : memref<2x5x84x80xf32, #tpu.memory_space<vmem>>, vector<1x1x84x80xf32>
    %705 = vector.shape_cast %704 : vector<1x1x84x80xf32> to vector<84x80xf32>
    %cst_750 = arith.constant dense<0.000000e+00> : vector<10x80xf32>
    %706 = tpu.matmul %703, %705, %cst_750 {dimension_numbers = #tpu.dot_dimension_numbers<[1], [0], [0], [1], [0, 0, 1, 1], [], []>} : vector<10x84xf32>, vector<84x80xf32>, vector<10x80xf32> -> vector<10x80xf32>
    %707 = arith.addf %702, %706 : vector<10x80xf32>
    %c4_751 = arith.constant 4 : index
    %c0_752 = arith.constant 0 : index
    %708 = vector.load %arg13[%c4_751, %c0_752] : memref<14x84xf32, #tpu.memory_space<vmem>>, vector<10x84xf32>
    %c0_753 = arith.constant 0 : index
    %c4_754 = arith.constant 4 : index
    %c0_755 = arith.constant 0 : index
    %c0_756 = arith.constant 0 : index
    %709 = vector.load %arg3[%c0_753, %c4_754, %c0_755, %c0_756] : memref<2x5x84x80xf32, #tpu.memory_space<vmem>>, vector<1x1x84x80xf32>
    %710 = vector.shape_cast %709 : vector<1x1x84x80xf32> to vector<84x80xf32>
    %cst_757 = arith.constant dense<0.000000e+00> : vector<10x80xf32>
    %711 = tpu.matmul %708, %710, %cst_757 {dimension_numbers = #tpu.dot_dimension_numbers<[1], [0], [0], [1], [0, 0, 1, 1], [], []>} : vector<10x84xf32>, vector<84x80xf32>, vector<10x80xf32> -> vector<10x80xf32>
    %712 = arith.addf %707, %711 : vector<10x80xf32>
    %c0_758 = arith.constant 0 : index
    %c0_759 = arith.constant 0 : index
    %c0_760 = arith.constant 0 : index
    %713 = vector.load %arg14[%c0_758, %c0_759, %c0_760] : memref<2x10x80xf32, #tpu.memory_space<vmem>>, vector<1x10x80xf32>
    %714 = vector.shape_cast %713 : vector<1x10x80xf32> to vector<10x80xf32>
    %715 = vector.shape_cast %712 : vector<10x80xf32> to vector<1x10x80xf32>
    tpu.vector_store %arg14[%c0_758, %c0_759, %c0_760], %715 {strides = array<i32>} : memref<2x10x80xf32, #tpu.memory_space<vmem>>, vector<1x10x80xf32>,
    %c0_761 = arith.constant 0 : index
    %c0_762 = arith.constant 0 : index
    %716 = vector.load %arg13[%c0_761, %c0_762] : memref<14x84xf32, #tpu.memory_space<vmem>>, vector<10x84xf32>
    %c1_763 = arith.constant 1 : index
    %c0_764 = arith.constant 0 : index
    %c0_765 = arith.constant 0 : index
    %c0_766 = arith.constant 0 : index
    %717 = vector.load %arg3[%c1_763, %c0_764, %c0_765, %c0_766] : memref<2x5x84x80xf32, #tpu.memory_space<vmem>>, vector<1x1x84x80xf32>
    %718 = vector.shape_cast %717 : vector<1x1x84x80xf32> to vector<84x80xf32>
    %cst_767 = arith.constant dense<0.000000e+00> : vector<10x80xf32>
    %719 = tpu.matmul %716, %718, %cst_767 {dimension_numbers = #tpu.dot_dimension_numbers<[1], [0], [0], [1], [0, 0, 1, 1], [], []>} : vector<10x84xf32>, vector<84x80xf32>, vector<10x80xf32> -> vector<10x80xf32>
    %c1_768 = arith.constant 1 : index
    %c0_769 = arith.constant 0 : index
    %720 = vector.load %arg13[%c1_768, %c0_769] : memref<14x84xf32, #tpu.memory_space<vmem>>, vector<10x84xf32>
    %c1_770 = arith.constant 1 : index
    %c1_771 = arith.constant 1 : index
    %c0_772 = arith.constant 0 : index
    %c0_773 = arith.constant 0 : index
    %721 = vector.load %arg3[%c1_770, %c1_771, %c0_772, %c0_773] : memref<2x5x84x80xf32, #tpu.memory_space<vmem>>, vector<1x1x84x80xf32>
    %722 = vector.shape_cast %721 : vector<1x1x84x80xf32> to vector<84x80xf32>
    %cst_774 = arith.constant dense<0.000000e+00> : vector<10x80xf32>
    %723 = tpu.matmul %720, %722, %cst_774 {dimension_numbers = #tpu.dot_dimension_numbers<[1], [0], [0], [1], [0, 0, 1, 1], [], []>} : vector<10x84xf32>, vector<84x80xf32>, vector<10x80xf32> -> vector<10x80xf32>
    %724 = arith.addf %719, %723 : vector<10x80xf32>
    %c2_775 = arith.constant 2 : index
    %c0_776 = arith.constant 0 : index
    %725 = vector.load %arg13[%c2_775, %c0_776] : memref<14x84xf32, #tpu.memory_space<vmem>>, vector<10x84xf32>
    %c1_777 = arith.constant 1 : index
    %c2_778 = arith.constant 2 : index
    %c0_779 = arith.constant 0 : index
    %c0_780 = arith.constant 0 : index
    %726 = vector.load %arg3[%c1_777, %c2_778, %c0_779, %c0_780] : memref<2x5x84x80xf32, #tpu.memory_space<vmem>>, vector<1x1x84x80xf32>
    %727 = vector.shape_cast %726 : vector<1x1x84x80xf32> to vector<84x80xf32>
    %cst_781 = arith.constant dense<0.000000e+00> : vector<10x80xf32>
    %728 = tpu.matmul %725, %727, %cst_781 {dimension_numbers = #tpu.dot_dimension_numbers<[1], [0], [0], [1], [0, 0, 1, 1], [], []>} : vector<10x84xf32>, vector<84x80xf32>, vector<10x80xf32> -> vector<10x80xf32>
    %729 = arith.addf %724, %728 : vector<10x80xf32>
    %c3_782 = arith.constant 3 : index
    %c0_783 = arith.constant 0 : index
    %730 = vector.load %arg13[%c3_782, %c0_783] : memref<14x84xf32, #tpu.memory_space<vmem>>, vector<10x84xf32>
    %c1_784 = arith.constant 1 : index
    %c3_785 = arith.constant 3 : index
    %c0_786 = arith.constant 0 : index
    %c0_787 = arith.constant 0 : index
    %731 = vector.load %arg3[%c1_784, %c3_785, %c0_786, %c0_787] : memref<2x5x84x80xf32, #tpu.memory_space<vmem>>, vector<1x1x84x80xf32>
    %732 = vector.shape_cast %731 : vector<1x1x84x80xf32> to vector<84x80xf32>
    %cst_788 = arith.constant dense<0.000000e+00> : vector<10x80xf32>
    %733 = tpu.matmul %730, %732, %cst_788 {dimension_numbers = #tpu.dot_dimension_numbers<[1], [0], [0], [1], [0, 0, 1, 1], [], []>} : vector<10x84xf32>, vector<84x80xf32>, vector<10x80xf32> -> vector<10x80xf32>
    %734 = arith.addf %729, %733 : vector<10x80xf32>
    %c4_789 = arith.constant 4 : index
    %c0_790 = arith.constant 0 : index
    %735 = vector.load %arg13[%c4_789, %c0_790] : memref<14x84xf32, #tpu.memory_space<vmem>>, vector<10x84xf32>
    %c1_791 = arith.constant 1 : index
    %c4_792 = arith.constant 4 : index
    %c0_793 = arith.constant 0 : index
    %c0_794 = arith.constant 0 : index
    %736 = vector.load %arg3[%c1_791, %c4_792, %c0_793, %c0_794] : memref<2x5x84x80xf32, #tpu.memory_space<vmem>>, vector<1x1x84x80xf32>
    %737 = vector.shape_cast %736 : vector<1x1x84x80xf32> to vector<84x80xf32>
    %cst_795 = arith.constant dense<0.000000e+00> : vector<10x80xf32>
    %738 = tpu.matmul %735, %737, %cst_795 {dimension_numbers = #tpu.dot_dimension_numbers<[1], [0], [0], [1], [0, 0, 1, 1], [], []>} : vector<10x84xf32>, vector<84x80xf32>, vector<10x80xf32> -> vector<10x80xf32>
    %739 = arith.addf %734, %738 : vector<10x80xf32>
    %c1_796 = arith.constant 1 : index
    %c0_797 = arith.constant 0 : index
    %c0_798 = arith.constant 0 : index
    %740 = vector.load %arg14[%c1_796, %c0_797, %c0_798] : memref<2x10x80xf32, #tpu.memory_space<vmem>>, vector<1x10x80xf32>
    %741 = vector.shape_cast %740 : vector<1x10x80xf32> to vector<10x80xf32>
    %742 = vector.shape_cast %739 : vector<10x80xf32> to vector<1x10x80xf32>
    tpu.vector_store %arg14[%c1_796, %c0_797, %c0_798], %742 {strides = array<i32>} : memref<2x10x80xf32, #tpu.memory_space<vmem>>, vector<1x10x80xf32>,
    %c0_799 = arith.constant 0 : index
    %c0_800 = arith.constant 0 : index
    %c0_801 = arith.constant 0 : index
    %743 = vector.load %arg14[%c0_799, %c0_800, %c0_801] : memref<2x10x80xf32, #tpu.memory_space<vmem>>, vector<1x1x80xf32>
    %744 = vector.shape_cast %743 : vector<1x1x80xf32> to vector<1x80xf32>
    %c0_802 = arith.constant 0 : index
    %c1_803 = arith.constant 1 : index
    %c0_804 = arith.constant 0 : index
    %745 = vector.load %arg14[%c0_802, %c1_803, %c0_804] : memref<2x10x80xf32, #tpu.memory_space<vmem>>, vector<1x1x80xf32>
    %746 = vector.shape_cast %745 : vector<1x1x80xf32> to vector<1x80xf32>
    %747 = arith.maximumf %744, %746 : vector<1x80xf32>
    %c1_805 = arith.constant 1 : index
    %c0_806 = arith.constant 0 : index
    %c0_807 = arith.constant 0 : index
    %748 = vector.load %arg14[%c1_805, %c0_806, %c0_807] : memref<2x10x80xf32, #tpu.memory_space<vmem>>, vector<1x1x80xf32>
    %749 = vector.shape_cast %748 : vector<1x1x80xf32> to vector<1x80xf32>
    %c1_808 = arith.constant 1 : index
    %c1_809 = arith.constant 1 : index
    %c0_810 = arith.constant 0 : index
    %750 = vector.load %arg14[%c1_808, %c1_809, %c0_810] : memref<2x10x80xf32, #tpu.memory_space<vmem>>, vector<1x1x80xf32>
    %751 = vector.shape_cast %750 : vector<1x1x80xf32> to vector<1x80xf32>
    %752 = arith.maximumf %749, %751 : vector<1x80xf32>
    %753 = arith.maximumf %747, %752 : vector<1x80xf32>
    %754 = arith.addf %753, %1 : vector<1x80xf32>
    %cst_811 = arith.constant 0.000000e+00 : f32
    %755 = vector.broadcast %cst_811 : f32 to vector<1x80xf32>
    %756 = arith.maximumf %754, %755 : vector<1x80xf32>
    %c0_812 = arith.constant 0 : index
    %c1_813 = arith.constant 1 : index
    %c0_814 = arith.constant 0 : index
    %757 = vector.load %arg15[%c0_812, %c1_813, %c0_814] : memref<5x2x80xf32, #tpu.memory_space<vmem>>, vector<1x1x80xf32>
    %758 = vector.shape_cast %757 : vector<1x1x80xf32> to vector<1x80xf32>
    %759 = vector.shape_cast %756 : vector<1x80xf32> to vector<1x1x80xf32>
    tpu.vector_store %arg15[%c0_812, %c1_813, %c0_814], %759 {strides = array<i32>} : memref<5x2x80xf32, #tpu.memory_space<vmem>>, vector<1x1x80xf32>,
    %c0_815 = arith.constant 0 : index
    %c2_816 = arith.constant 2 : index
    %c0_817 = arith.constant 0 : index
    %760 = vector.load %arg14[%c0_815, %c2_816, %c0_817] : memref<2x10x80xf32, #tpu.memory_space<vmem>>, vector<1x1x80xf32>
    %761 = vector.shape_cast %760 : vector<1x1x80xf32> to vector<1x80xf32>
    %c0_818 = arith.constant 0 : index
    %c3_819 = arith.constant 3 : index
    %c0_820 = arith.constant 0 : index
    %762 = vector.load %arg14[%c0_818, %c3_819, %c0_820] : memref<2x10x80xf32, #tpu.memory_space<vmem>>, vector<1x1x80xf32>
    %763 = vector.shape_cast %762 : vector<1x1x80xf32> to vector<1x80xf32>
    %764 = arith.maximumf %761, %763 : vector<1x80xf32>
    %c1_821 = arith.constant 1 : index
    %c2_822 = arith.constant 2 : index
    %c0_823 = arith.constant 0 : index
    %765 = vector.load %arg14[%c1_821, %c2_822, %c0_823] : memref<2x10x80xf32, #tpu.memory_space<vmem>>, vector<1x1x80xf32>
    %766 = vector.shape_cast %765 : vector<1x1x80xf32> to vector<1x80xf32>
    %c1_824 = arith.constant 1 : index
    %c3_825 = arith.constant 3 : index
    %c0_826 = arith.constant 0 : index
    %767 = vector.load %arg14[%c1_824, %c3_825, %c0_826] : memref<2x10x80xf32, #tpu.memory_space<vmem>>, vector<1x1x80xf32>
    %768 = vector.shape_cast %767 : vector<1x1x80xf32> to vector<1x80xf32>
    %769 = arith.maximumf %766, %768 : vector<1x80xf32>
    %770 = arith.maximumf %764, %769 : vector<1x80xf32>
    %771 = arith.addf %770, %1 : vector<1x80xf32>
    %cst_827 = arith.constant 0.000000e+00 : f32
    %772 = vector.broadcast %cst_827 : f32 to vector<1x80xf32>
    %773 = arith.maximumf %771, %772 : vector<1x80xf32>
    %c1_828 = arith.constant 1 : index
    %c1_829 = arith.constant 1 : index
    %c0_830 = arith.constant 0 : index
    %774 = vector.load %arg15[%c1_828, %c1_829, %c0_830] : memref<5x2x80xf32, #tpu.memory_space<vmem>>, vector<1x1x80xf32>
    %775 = vector.shape_cast %774 : vector<1x1x80xf32> to vector<1x80xf32>
    %776 = vector.shape_cast %773 : vector<1x80xf32> to vector<1x1x80xf32>
    tpu.vector_store %arg15[%c1_828, %c1_829, %c0_830], %776 {strides = array<i32>} : memref<5x2x80xf32, #tpu.memory_space<vmem>>, vector<1x1x80xf32>,
    %c0_831 = arith.constant 0 : index
    %c4_832 = arith.constant 4 : index
    %c0_833 = arith.constant 0 : index
    %777 = vector.load %arg14[%c0_831, %c4_832, %c0_833] : memref<2x10x80xf32, #tpu.memory_space<vmem>>, vector<1x1x80xf32>
    %778 = vector.shape_cast %777 : vector<1x1x80xf32> to vector<1x80xf32>
    %c0_834 = arith.constant 0 : index
    %c5_835 = arith.constant 5 : index
    %c0_836 = arith.constant 0 : index
    %779 = vector.load %arg14[%c0_834, %c5_835, %c0_836] : memref<2x10x80xf32, #tpu.memory_space<vmem>>, vector<1x1x80xf32>
    %780 = vector.shape_cast %779 : vector<1x1x80xf32> to vector<1x80xf32>
    %781 = arith.maximumf %778, %780 : vector<1x80xf32>
    %c1_837 = arith.constant 1 : index
    %c4_838 = arith.constant 4 : index
    %c0_839 = arith.constant 0 : index
    %782 = vector.load %arg14[%c1_837, %c4_838, %c0_839] : memref<2x10x80xf32, #tpu.memory_space<vmem>>, vector<1x1x80xf32>
    %783 = vector.shape_cast %782 : vector<1x1x80xf32> to vector<1x80xf32>
    %c1_840 = arith.constant 1 : index
    %c5_841 = arith.constant 5 : index
    %c0_842 = arith.constant 0 : index
    %784 = vector.load %arg14[%c1_840, %c5_841, %c0_842] : memref<2x10x80xf32, #tpu.memory_space<vmem>>, vector<1x1x80xf32>
    %785 = vector.shape_cast %784 : vector<1x1x80xf32> to vector<1x80xf32>
    %786 = arith.maximumf %783, %785 : vector<1x80xf32>
    %787 = arith.maximumf %781, %786 : vector<1x80xf32>
    %788 = arith.addf %787, %1 : vector<1x80xf32>
    %cst_843 = arith.constant 0.000000e+00 : f32
    %789 = vector.broadcast %cst_843 : f32 to vector<1x80xf32>
    %790 = arith.maximumf %788, %789 : vector<1x80xf32>
    %c2_844 = arith.constant 2 : index
    %c1_845 = arith.constant 1 : index
    %c0_846 = arith.constant 0 : index
    %791 = vector.load %arg15[%c2_844, %c1_845, %c0_846] : memref<5x2x80xf32, #tpu.memory_space<vmem>>, vector<1x1x80xf32>
    %792 = vector.shape_cast %791 : vector<1x1x80xf32> to vector<1x80xf32>
    %793 = vector.shape_cast %790 : vector<1x80xf32> to vector<1x1x80xf32>
    tpu.vector_store %arg15[%c2_844, %c1_845, %c0_846], %793 {strides = array<i32>} : memref<5x2x80xf32, #tpu.memory_space<vmem>>, vector<1x1x80xf32>,
    %c0_847 = arith.constant 0 : index
    %c6_848 = arith.constant 6 : index
    %c0_849 = arith.constant 0 : index
    %794 = vector.load %arg14[%c0_847, %c6_848, %c0_849] : memref<2x10x80xf32, #tpu.memory_space<vmem>>, vector<1x1x80xf32>
    %795 = vector.shape_cast %794 : vector<1x1x80xf32> to vector<1x80xf32>
    %c0_850 = arith.constant 0 : index
    %c7_851 = arith.constant 7 : index
    %c0_852 = arith.constant 0 : index
    %796 = vector.load %arg14[%c0_850, %c7_851, %c0_852] : memref<2x10x80xf32, #tpu.memory_space<vmem>>, vector<1x1x80xf32>
    %797 = vector.shape_cast %796 : vector<1x1x80xf32> to vector<1x80xf32>
    %798 = arith.maximumf %795, %797 : vector<1x80xf32>
    %c1_853 = arith.constant 1 : index
    %c6_854 = arith.constant 6 : index
    %c0_855 = arith.constant 0 : index
    %799 = vector.load %arg14[%c1_853, %c6_854, %c0_855] : memref<2x10x80xf32, #tpu.memory_space<vmem>>, vector<1x1x80xf32>
    %800 = vector.shape_cast %799 : vector<1x1x80xf32> to vector<1x80xf32>
    %c1_856 = arith.constant 1 : index
    %c7_857 = arith.constant 7 : index
    %c0_858 = arith.constant 0 : index
    %801 = vector.load %arg14[%c1_856, %c7_857, %c0_858] : memref<2x10x80xf32, #tpu.memory_space<vmem>>, vector<1x1x80xf32>
    %802 = vector.shape_cast %801 : vector<1x1x80xf32> to vector<1x80xf32>
    %803 = arith.maximumf %800, %802 : vector<1x80xf32>
    %804 = arith.maximumf %798, %803 : vector<1x80xf32>
    %805 = arith.addf %804, %1 : vector<1x80xf32>
    %cst_859 = arith.constant 0.000000e+00 : f32
    %806 = vector.broadcast %cst_859 : f32 to vector<1x80xf32>
    %807 = arith.maximumf %805, %806 : vector<1x80xf32>
    %c3_860 = arith.constant 3 : index
    %c1_861 = arith.constant 1 : index
    %c0_862 = arith.constant 0 : index
    %808 = vector.load %arg15[%c3_860, %c1_861, %c0_862] : memref<5x2x80xf32, #tpu.memory_space<vmem>>, vector<1x1x80xf32>
    %809 = vector.shape_cast %808 : vector<1x1x80xf32> to vector<1x80xf32>
    %810 = vector.shape_cast %807 : vector<1x80xf32> to vector<1x1x80xf32>
    tpu.vector_store %arg15[%c3_860, %c1_861, %c0_862], %810 {strides = array<i32>} : memref<5x2x80xf32, #tpu.memory_space<vmem>>, vector<1x1x80xf32>,
    %c0_863 = arith.constant 0 : index
    %c8_864 = arith.constant 8 : index
    %c0_865 = arith.constant 0 : index
    %811 = vector.load %arg14[%c0_863, %c8_864, %c0_865] : memref<2x10x80xf32, #tpu.memory_space<vmem>>, vector<1x1x80xf32>
    %812 = vector.shape_cast %811 : vector<1x1x80xf32> to vector<1x80xf32>
    %c0_866 = arith.constant 0 : index
    %c9_867 = arith.constant 9 : index
    %c0_868 = arith.constant 0 : index
    %813 = vector.load %arg14[%c0_866, %c9_867, %c0_868] : memref<2x10x80xf32, #tpu.memory_space<vmem>>, vector<1x1x80xf32>
    %814 = vector.shape_cast %813 : vector<1x1x80xf32> to vector<1x80xf32>
    %815 = arith.maximumf %812, %814 : vector<1x80xf32>
    %c1_869 = arith.constant 1 : index
    %c8_870 = arith.constant 8 : index
    %c0_871 = arith.constant 0 : index
    %816 = vector.load %arg14[%c1_869, %c8_870, %c0_871] : memref<2x10x80xf32, #tpu.memory_space<vmem>>, vector<1x1x80xf32>
    %817 = vector.shape_cast %816 : vector<1x1x80xf32> to vector<1x80xf32>
    %c1_872 = arith.constant 1 : index
    %c9_873 = arith.constant 9 : index
    %c0_874 = arith.constant 0 : index
    %818 = vector.load %arg14[%c1_872, %c9_873, %c0_874] : memref<2x10x80xf32, #tpu.memory_space<vmem>>, vector<1x1x80xf32>
    %819 = vector.shape_cast %818 : vector<1x1x80xf32> to vector<1x80xf32>
    %820 = arith.maximumf %817, %819 : vector<1x80xf32>
    %821 = arith.maximumf %815, %820 : vector<1x80xf32>
    %822 = arith.addf %821, %1 : vector<1x80xf32>
    %cst_875 = arith.constant 0.000000e+00 : f32
    %823 = vector.broadcast %cst_875 : f32 to vector<1x80xf32>
    %824 = arith.maximumf %822, %823 : vector<1x80xf32>
    %c4_876 = arith.constant 4 : index
    %c1_877 = arith.constant 1 : index
    %c0_878 = arith.constant 0 : index
    %825 = vector.load %arg15[%c4_876, %c1_877, %c0_878] : memref<5x2x80xf32, #tpu.memory_space<vmem>>, vector<1x1x80xf32>
    %826 = vector.shape_cast %825 : vector<1x1x80xf32> to vector<1x80xf32>
    %827 = vector.shape_cast %824 : vector<1x80xf32> to vector<1x1x80xf32>
    tpu.vector_store %arg15[%c4_876, %c1_877, %c0_878], %827 {strides = array<i32>} : memref<5x2x80xf32, #tpu.memory_space<vmem>>, vector<1x1x80xf32>,
    %c0_879 = arith.constant 0 : index
    %c0_880 = arith.constant 0 : index
    %c0_881 = arith.constant 0 : index
    %828 = vector.load %arg15[%c0_879, %c0_880, %c0_881] : memref<5x2x80xf32, #tpu.memory_space<vmem>>, vector<1x2x80xf32>
    %829 = vector.shape_cast %828 : vector<1x2x80xf32> to vector<2x80xf32>
    %c0_882 = arith.constant 0 : index
    %c0_883 = arith.constant 0 : index
    %c0_884 = arith.constant 0 : index
    %830 = vector.load %arg5[%c0_882, %c0_883, %c0_884] : memref<5x80x128xf32, #tpu.memory_space<vmem>>, vector<1x80x128xf32>
    %831 = vector.shape_cast %830 : vector<1x80x128xf32> to vector<80x128xf32>
    %cst_885 = arith.constant dense<0.000000e+00> : vector<2x128xf32>
    %832 = tpu.matmul %829, %831, %cst_885 {dimension_numbers = #tpu.dot_dimension_numbers<[1], [0], [0], [1], [0, 0, 1, 1], [], []>} : vector<2x80xf32>, vector<80x128xf32>, vector<2x128xf32> -> vector<2x128xf32>
    %c1_886 = arith.constant 1 : index
    %c0_887 = arith.constant 0 : index
    %c0_888 = arith.constant 0 : index
    %833 = vector.load %arg15[%c1_886, %c0_887, %c0_888] : memref<5x2x80xf32, #tpu.memory_space<vmem>>, vector<1x2x80xf32>
    %834 = vector.shape_cast %833 : vector<1x2x80xf32> to vector<2x80xf32>
    %c1_889 = arith.constant 1 : index
    %c0_890 = arith.constant 0 : index
    %c0_891 = arith.constant 0 : index
    %835 = vector.load %arg5[%c1_889, %c0_890, %c0_891] : memref<5x80x128xf32, #tpu.memory_space<vmem>>, vector<1x80x128xf32>
    %836 = vector.shape_cast %835 : vector<1x80x128xf32> to vector<80x128xf32>
    %cst_892 = arith.constant dense<0.000000e+00> : vector<2x128xf32>
    %837 = tpu.matmul %834, %836, %cst_892 {dimension_numbers = #tpu.dot_dimension_numbers<[1], [0], [0], [1], [0, 0, 1, 1], [], []>} : vector<2x80xf32>, vector<80x128xf32>, vector<2x128xf32> -> vector<2x128xf32>
    %838 = arith.addf %832, %837 : vector<2x128xf32>
    %c2_893 = arith.constant 2 : index
    %c0_894 = arith.constant 0 : index
    %c0_895 = arith.constant 0 : index
    %839 = vector.load %arg15[%c2_893, %c0_894, %c0_895] : memref<5x2x80xf32, #tpu.memory_space<vmem>>, vector<1x2x80xf32>
    %840 = vector.shape_cast %839 : vector<1x2x80xf32> to vector<2x80xf32>
    %c2_896 = arith.constant 2 : index
    %c0_897 = arith.constant 0 : index
    %c0_898 = arith.constant 0 : index
    %841 = vector.load %arg5[%c2_896, %c0_897, %c0_898] : memref<5x80x128xf32, #tpu.memory_space<vmem>>, vector<1x80x128xf32>
    %842 = vector.shape_cast %841 : vector<1x80x128xf32> to vector<80x128xf32>
    %cst_899 = arith.constant dense<0.000000e+00> : vector<2x128xf32>
    %843 = tpu.matmul %840, %842, %cst_899 {dimension_numbers = #tpu.dot_dimension_numbers<[1], [0], [0], [1], [0, 0, 1, 1], [], []>} : vector<2x80xf32>, vector<80x128xf32>, vector<2x128xf32> -> vector<2x128xf32>
    %844 = arith.addf %838, %843 : vector<2x128xf32>
    %c3_900 = arith.constant 3 : index
    %c0_901 = arith.constant 0 : index
    %c0_902 = arith.constant 0 : index
    %845 = vector.load %arg15[%c3_900, %c0_901, %c0_902] : memref<5x2x80xf32, #tpu.memory_space<vmem>>, vector<1x2x80xf32>
    %846 = vector.shape_cast %845 : vector<1x2x80xf32> to vector<2x80xf32>
    %c3_903 = arith.constant 3 : index
    %c0_904 = arith.constant 0 : index
    %c0_905 = arith.constant 0 : index
    %847 = vector.load %arg5[%c3_903, %c0_904, %c0_905] : memref<5x80x128xf32, #tpu.memory_space<vmem>>, vector<1x80x128xf32>
    %848 = vector.shape_cast %847 : vector<1x80x128xf32> to vector<80x128xf32>
    %cst_906 = arith.constant dense<0.000000e+00> : vector<2x128xf32>
    %849 = tpu.matmul %846, %848, %cst_906 {dimension_numbers = #tpu.dot_dimension_numbers<[1], [0], [0], [1], [0, 0, 1, 1], [], []>} : vector<2x80xf32>, vector<80x128xf32>, vector<2x128xf32> -> vector<2x128xf32>
    %850 = arith.addf %844, %849 : vector<2x128xf32>
    %c4_907 = arith.constant 4 : index
    %c0_908 = arith.constant 0 : index
    %c0_909 = arith.constant 0 : index
    %851 = vector.load %arg15[%c4_907, %c0_908, %c0_909] : memref<5x2x80xf32, #tpu.memory_space<vmem>>, vector<1x2x80xf32>
    %852 = vector.shape_cast %851 : vector<1x2x80xf32> to vector<2x80xf32>
    %c4_910 = arith.constant 4 : index
    %c0_911 = arith.constant 0 : index
    %c0_912 = arith.constant 0 : index
    %853 = vector.load %arg5[%c4_910, %c0_911, %c0_912] : memref<5x80x128xf32, #tpu.memory_space<vmem>>, vector<1x80x128xf32>
    %854 = vector.shape_cast %853 : vector<1x80x128xf32> to vector<80x128xf32>
    %cst_913 = arith.constant dense<0.000000e+00> : vector<2x128xf32>
    %855 = tpu.matmul %852, %854, %cst_913 {dimension_numbers = #tpu.dot_dimension_numbers<[1], [0], [0], [1], [0, 0, 1, 1], [], []>} : vector<2x80xf32>, vector<80x128xf32>, vector<2x128xf32> -> vector<2x128xf32>
    %856 = arith.addf %850, %855 : vector<2x128xf32>
    %c0_914 = arith.constant 0 : index
    %c0_915 = arith.constant 0 : index
    %857 = vector.load %arg6[%c0_914, %c0_915] : memref<1x128xf32, #tpu.memory_space<vmem>>, vector<1x128xf32>
    %858 = vector.broadcast %857 : vector<1x128xf32> to vector<2x128xf32>
    %859 = arith.addf %856, %858 : vector<2x128xf32>
    %cst_916 = arith.constant 0.000000e+00 : f32
    %860 = vector.broadcast %cst_916 : f32 to vector<2x128xf32>
    %861 = arith.maximumf %859, %860 : vector<2x128xf32>
    %c0_917 = arith.constant 0 : index
    %c0_918 = arith.constant 0 : index
    %862 = vector.load %arg7[%c0_917, %c0_918] : memref<128x128xf32, #tpu.memory_space<vmem>>, vector<128x128xf32>
    %cst_919 = arith.constant dense<0.000000e+00> : vector<2x128xf32>
    %863 = tpu.matmul %861, %862, %cst_919 {dimension_numbers = #tpu.dot_dimension_numbers<[1], [0], [0], [1], [0, 0, 1, 1], [], []>} : vector<2x128xf32>, vector<128x128xf32>, vector<2x128xf32> -> vector<2x128xf32>
    %c0_920 = arith.constant 0 : index
    %c0_921 = arith.constant 0 : index
    %864 = vector.load %arg8[%c0_920, %c0_921] : memref<1x128xf32, #tpu.memory_space<vmem>>, vector<1x128xf32>
    %865 = vector.broadcast %864 : vector<1x128xf32> to vector<2x128xf32>
    %866 = arith.addf %863, %865 : vector<2x128xf32>
    %cst_922 = arith.constant 0.000000e+00 : f32
    %867 = vector.broadcast %cst_922 : f32 to vector<2x128xf32>
    %868 = arith.maximumf %866, %867 : vector<2x128xf32>
    %c0_923 = arith.constant 0 : index
    %c0_924 = arith.constant 0 : index
    %869 = vector.load %arg9[%c0_923, %c0_924] : memref<128x128xf32, #tpu.memory_space<vmem>>, vector<128x128xf32>
    %cst_925 = arith.constant dense<0.000000e+00> : vector<2x128xf32>
    %870 = tpu.matmul %868, %869, %cst_925 {dimension_numbers = #tpu.dot_dimension_numbers<[1], [0], [0], [1], [0, 0, 1, 1], [], []>} : vector<2x128xf32>, vector<128x128xf32>, vector<2x128xf32> -> vector<2x128xf32>
    %c0_926 = arith.constant 0 : index
    %c0_927 = arith.constant 0 : index
    %871 = vector.load %arg10[%c0_926, %c0_927] : memref<1x128xf32, #tpu.memory_space<vmem>>, vector<1x128xf32>
    %872 = vector.broadcast %871 : vector<1x128xf32> to vector<2x128xf32>
    %873 = arith.addf %870, %872 : vector<2x128xf32>
    %c0_928 = arith.constant 0 : index
    %c0_929 = arith.constant 0 : index
    %874 = vector.load %arg11[%c0_928, %c0_929] : memref<2x128xf32, #tpu.memory_space<vmem>>, vector<2x128xf32>
    tpu.vector_store %arg11[%c0_928, %c0_929], %873 {strides = array<i32>} : memref<2x128xf32, #tpu.memory_space<vmem>>, vector<2x128xf32>,
    return
  }
}

</mosaic_0001>

<llo_original>
// kernel: lenet_forward.1
$region0: #{lenet_forward.1}
  #allocation0 [shape = 'u32[]', space=smem, size = 0x4, offset = 0x4, fixed_abs, tag = 'smem constant byte address 0x4 - core index']
  #allocation1 [shape = 'u32[72,128]{1,0:T(1,128)}', space=vmem, size = 0x9000, scoped, tag = 'internal scratch']
  #allocation2 [shape = 'f32[2,28,84]{2,1,0:T(8,128)}', space=vmem, size = 0x8000, scoped, tag = 'scratch operand']
  #allocation3 [shape = 'f32[14,84]{1,0:T(8,128)}', space=vmem, size = 0x2000, scoped, tag = 'scratch operand']
  #allocation4 [shape = 'f32[2,10,80]{2,1,0:T(8,128)}', space=vmem, size = 0x4000, scoped, tag = 'scratch operand']
  #allocation5 [shape = 'f32[5,2,80]{2,1,0:T(2,128)}', space=vmem, size = 0x1400, scoped, tag = 'scratch operand']
  %s0 = inlined_call_operand.vmem [shape: f32[2,32,32], index: 0, kind: input, shape index: {}]
  %s1 = inlined_call_operand.vmem [shape: f32[2,5,32,84], index: 1, kind: input, shape index: {}]
  %s2 = inlined_call_operand.vmem [shape: f32[1,84], index: 2, kind: input, shape index: {}]
  %s3 = inlined_call_operand.vmem [shape: f32[2,5,84,80], index: 3, kind: input, shape index: {}]
  %s4 = inlined_call_operand.vmem [shape: f32[1,80], index: 4, kind: input, shape index: {}]
  %s5 = inlined_call_operand.vmem [shape: f32[5,80,128], index: 5, kind: input, shape index: {}]
  %s6 = inlined_call_operand.vmem [shape: f32[1,128], index: 6, kind: input, shape index: {}]
  %s7 = inlined_call_operand.vmem [shape: f32[128,128], index: 7, kind: input, shape index: {}]
  %s8 = inlined_call_operand.vmem [shape: f32[1,128], index: 8, kind: input, shape index: {}]
  %s9 = inlined_call_operand.vmem [shape: f32[128,128], index: 9, kind: input, shape index: {}]
  %s10 = inlined_call_operand.vmem [shape: f32[1,128], index: 10, kind: input, shape index: {}]
  %s11 = inlined_call_operand.hbm [shape: f32[2,128], index: 11, kind: output, shape index: {}]
  %s12 = sld [smem:[#allocation0]]
  $region54: #{lenet_forward.1} parent=0
    _
  %s14 = ssub.s32 1, %s12
  %s15 = scalar_select 0, %s14, %s12
  $region1: #{lenet_forward.1} parent=0
    #allocation6 [shape = 'u8[1024]{0}', space=vmem, size = 0x400, scoped, tag = 'output window, operand 0, single buffered']
    #allocation7 [shape = 's32[1]{0}', space=sflag, size = 0x4, scoped, tag = 'scoped memory for lenet_forward.1']
    %16 = vsyncpa [#allocation7], 0
    // Predicated region
    $region2: #{lenet_forward.1} parent=1 // pred_check
      _
    $region3: #{lenet_forward.1} parent=1 // pred_check_branch
      %18 = sbr.rel (0) target = $region5
    $region4: #{lenet_forward.1} parent=1 // pred_region
      _
    $region5: #{lenet_forward.1} parent=1 // pred_fallthru
      _
    // Predicated region
    $region6: #{lenet_forward.1} parent=1 // pred_check
      _
    $region7: #{lenet_forward.1} parent=1 // pred_check_branch
      %20 = sbr.rel (0) target = $region9
    $region8: #{lenet_forward.1} parent=1 // pred_region
      _
    $region9: #{lenet_forward.1} parent=1 // pred_fallthru
      _
    // Predicated region
    $region10: #{lenet_forward.1} parent=1 // pred_check
      _
    $region11: #{lenet_forward.1} parent=1 // pred_check_branch
      %22 = sbr.rel (0) target = $region13
    $region12: #{lenet_forward.1} parent=1 // pred_region
      _
    $region13: #{lenet_forward.1} parent=1 // pred_fallthru
      _
    // Predicated region
    $region14: #{lenet_forward.1} parent=1 // pred_check
      _
    $region15: #{lenet_forward.1} parent=1 // pred_check_branch
      %24 = sbr.rel (0) target = $region17
    $region16: #{lenet_forward.1} parent=1 // pred_region
      _
    $region17: #{lenet_forward.1} parent=1 // pred_fallthru
      _
    // Predicated region
    $region18: #{lenet_forward.1} parent=1 // pred_check
      _
    $region19: #{lenet_forward.1} parent=1 // pred_check_branch
      %26 = sbr.rel (0) target = $region21
    $region20: #{lenet_forward.1} parent=1 // pred_region
      _
    $region21: #{lenet_forward.1} parent=1 // pred_fallthru
      _
    // Predicated region
    $region22: #{lenet_forward.1} parent=1 // pred_check
      _
    $region23: #{lenet_forward.1} parent=1 // pred_check_branch
      %28 = sbr.rel (0) target = $region25
    $region24: #{lenet_forward.1} parent=1 // pred_region
      _
    $region25: #{lenet_forward.1} parent=1 // pred_fallthru
      _
    // Predicated region
    $region26: #{lenet_forward.1} parent=1 // pred_check
      _
    $region27: #{lenet_forward.1} parent=1 // pred_check_branch
      %30 = sbr.rel (0) target = $region29
    $region28: #{lenet_forward.1} parent=1 // pred_region
      _
    $region29: #{lenet_forward.1} parent=1 // pred_fallthru
      _
    // Predicated region
    $region30: #{lenet_forward.1} parent=1 // pred_check
      _
    $region31: #{lenet_forward.1} parent=1 // pred_check_branch
      %32 = sbr.rel (0) target = $region33
    $region32: #{lenet_forward.1} parent=1 // pred_region
      _
    $region33: #{lenet_forward.1} parent=1 // pred_fallthru
      _
    // Predicated region
    $region34: #{lenet_forward.1} parent=1 // pred_check
      _
    $region35: #{lenet_forward.1} parent=1 // pred_check_branch
      %34 = sbr.rel (0) target = $region37
    $region36: #{lenet_forward.1} parent=1 // pred_region
      _
    $region37: #{lenet_forward.1} parent=1 // pred_fallthru
      _
    // Predicated region
    $region38: #{lenet_forward.1} parent=1 // pred_check
      _
    $region39: #{lenet_forward.1} parent=1 // pred_check_branch
      %36 = sbr.rel (0) target = $region41
    $region40: #{lenet_forward.1} parent=1 // pred_region
      _
    $region41: #{lenet_forward.1} parent=1 // pred_fallthru
      _
    // Predicated region
    $region42: #{lenet_forward.1} parent=1 // pred_check
      _
    $region43: #{lenet_forward.1} parent=1 // pred_check_branch
      %38 = sbr.rel (0) target = $region45
    $region44: #{lenet_forward.1} parent=1 // pred_region
      _
    $region45: #{lenet_forward.1} parent=1 // pred_fallthru
      _
    %v39 = vld [vmem:[%s2] sm:$0x1]
    %v40 = vld [vmem:[%s4] sm:$0x1]
    %v41 = vld [vmem:[%s0] sm:$0xff]
    %v42 = vld [vmem:[%s0 + $0x8] sm:$0xff]
    %v43 = vld [vmem:[%s0 + $0x10] sm:$0xff]
    %v44 = vld [vmem:[%s0 + $0x18] sm:$0xf]
    %v45 = vld [vmem:[%s1] sm:$0xff]
    %v46 = vld [vmem:[%s1 + $0x8] sm:$0xff]
    %v47 = vld [vmem:[%s1 + $0x10] sm:$0xff]
    %v48 = vld [vmem:[%s1 + $0x18] sm:$0xff]
    %v49 = vld [vmem:[%s0 + $0x1] sm:$0xff]
    %v50 = vld [vmem:[%s0 + $0x9] sm:$0xff]
    %v51 = vld [vmem:[%s0 + $0x11] sm:$0xff]
    %v52 = vld [vmem:[%s0 + $0x19] sm:$0xf]
    %s53 = scalar_lea.vmem %s1, 32
    %v54 = vld [vmem:[%s53] sm:$0xff]
    %v55 = vld [vmem:[%s53 + $0x8] sm:$0xff]
    %v56 = vld [vmem:[%s53 + $0x10] sm:$0xff]
    %v57 = vld [vmem:[%s53 + $0x18] sm:$0xff]
    %vm58 = vcmask 261120
    %v60 = vsel %vm58, %v49, 0
    %v63 = vsel %vm58, %v50, 0
    %v66 = vsel %vm58, %v51, 0
    %v69 = vsel %vm58, %v52, 0
    %71 = vmatpush.msra.mxu0 0.0
    %72 = vmatpush.msra.mxu0 0.0
    %73 = vmatpush.msra.mxu0 0.0
    %74 = vmatpush.msra.mxu0 0.0
    %75 = vmatpush.msra.mxu0 0.0
    %76 = vmatpush.msra.mxu0 0.0
    %77 = vmatpush.msra.mxu0 0.0
    %78 = vmatpush.msra.mxu0 0.0
    %79 = vmatpush.msra.mxu0 0.0
    %80 = vmatpush.msra.mxu0 0.0
    %81 = vmatpush.msra.mxu0 0.0
    %82 = vmatpush.msra.mxu0 0.0
    %83 = vmatpush.msra.mxu0 %v57
    %84 = vmatpush.msra.mxu0 %v56
    %85 = vmatpush.msra.mxu0 %v55
    %86 = vmatpush.msra.mxu0 %v54
    %87 = vmatmul.f32.gmra.mxu0 %v60
    %v88 = vpop.f32.mrf.mxu0
    %v89 = vadd.f32 0.0, %v88
    %90 = vmatmul.f32.gmra.mxu0 %v63
    %v91 = vpop.f32.mrf.mxu0
    %v92 = vadd.f32 0.0, %v91
    %93 = vmatmul.f32.gmra.mxu0 %v66
    %v94 = vpop.f32.mrf.mxu0
    %v95 = vadd.f32 0.0, %v94
    %96 = vmatmul.f32.gmra.mxu0 %v69
    %v97 = vpop.f32.mrf.mxu0
    %v98 = vadd.f32 0.0, %v97
    %99 = vdwg.mxu0
    %v101 = vsel %vm58, %v41, 0
    %v104 = vsel %vm58, %v42, 0
    %v107 = vsel %vm58, %v43, 0
    %v110 = vsel %vm58, %v44, 0
    %112 = vmatpush.msra.mxu0 0.0
    %113 = vmatpush.msra.mxu0 0.0
    %114 = vmatpush.msra.mxu0 0.0
    %115 = vmatpush.msra.mxu0 0.0
    %116 = vmatpush.msra.mxu0 0.0
    %117 = vmatpush.msra.mxu0 0.0
    %118 = vmatpush.msra.mxu0 0.0
    %119 = vmatpush.msra.mxu0 0.0
    %120 = vmatpush.msra.mxu0 0.0
    %121 = vmatpush.msra.mxu0 0.0
    %122 = vmatpush.msra.mxu0 0.0
    %123 = vmatpush.msra.mxu0 0.0
    %124 = vmatpush.msra.mxu0 %v48
    %125 = vmatpush.msra.mxu0 %v47
    %126 = vmatpush.msra.mxu0 %v46
    %127 = vmatpush.msra.mxu0 %v45
    %128 = vmatmul.f32.gmra.mxu0 %v101
    %v129 = vpop.f32.mrf.mxu0
    %v130 = vadd.f32 %v89, %v129
    %131 = vmatmul.f32.gmra.mxu0 %v104
    %v132 = vpop.f32.mrf.mxu0
    %v133 = vadd.f32 %v92, %v132
    %134 = vmatmul.f32.gmra.mxu0 %v107
    %v135 = vpop.f32.mrf.mxu0
    %v136 = vadd.f32 %v95, %v135
    %137 = vmatmul.f32.gmra.mxu0 %v110
    %v138 = vpop.f32.mrf.mxu0
    %v139 = vadd.f32 %v98, %v138
    %140 = vdwg.mxu0
    %v141 = vld [vmem:[%s0 + $0x2] sm:$0xff]
    %v142 = vld [vmem:[%s0 + $0xa] sm:$0xff]
    %v143 = vld [vmem:[%s0 + $0x12] sm:$0xff]
    %v144 = vld [vmem:[%s0 + $0x1a] sm:$0xf]
    %s145 = scalar_lea.vmem %s1, 64
    %v146 = vld [vmem:[%s145] sm:$0xff]
    %v147 = vld [vmem:[%s145 + $0x8] sm:$0xff]
    %v148 = vld [vmem:[%s145 + $0x10] sm:$0xff]
    %v149 = vld [vmem:[%s145 + $0x18] sm:$0xff]
    %v151 = vsel %vm58, %v141, 0
    %v154 = vsel %vm58, %v142, 0
    %v157 = vsel %vm58, %v143, 0
    %v160 = vsel %vm58, %v144, 0
    %162 = vmatpush.msra.mxu0 0.0
    %163 = vmatpush.msra.mxu0 0.0
    %164 = vmatpush.msra.mxu0 0.0
    %165 = vmatpush.msra.mxu0 0.0
    %166 = vmatpush.msra.mxu0 0.0
    %167 = vmatpush.msra.mxu0 0.0
    %168 = vmatpush.msra.mxu0 0.0
    %169 = vmatpush.msra.mxu0 0.0
    %170 = vmatpush.msra.mxu0 0.0
    %171 = vmatpush.msra.mxu0 0.0
    %172 = vmatpush.msra.mxu0 0.0
    %173 = vmatpush.msra.mxu0 0.0
    %174 = vmatpush.msra.mxu0 %v149
    %175 = vmatpush.msra.mxu0 %v148
    %176 = vmatpush.msra.mxu0 %v147
    %177 = vmatpush.msra.mxu0 %v146
    %178 = vmatmul.f32.gmra.mxu0 %v151
    %v179 = vpop.f32.mrf.mxu0
    %v180 = vadd.f32 0.0, %v179
    %181 = vmatmul.f32.gmra.mxu0 %v154
    %v182 = vpop.f32.mrf.mxu0
    %v183 = vadd.f32 0.0, %v182
    %184 = vmatmul.f32.gmra.mxu0 %v157
    %v185 = vpop.f32.mrf.mxu0
    %v186 = vadd.f32 0.0, %v185
    %187 = vmatmul.f32.gmra.mxu0 %v160
    %v188 = vpop.f32.mrf.mxu0
    %v189 = vadd.f32 0.0, %v188
    %190 = vdwg.mxu0
    %v191 = vadd.f32 %v130, %v180
    %v192 = vadd.f32 %v133, %v183
    %v193 = vadd.f32 %v136, %v186
    %v194 = vadd.f32 %v139, %v189
    %v195 = vld [vmem:[%s0 + $0x3] sm:$0xff]
    %v196 = vld [vmem:[%s0 + $0xb] sm:$0xff]
    %v197 = vld [vmem:[%s0 + $0x13] sm:$0xff]
    %v198 = vld [vmem:[%s0 + $0x1b] sm:$0xf]
    %s199 = scalar_lea.vmem %s1, 96
    %v200 = vld [vmem:[%s199] sm:$0xff]
    %v201 = vld [vmem:[%s199 + $0x8] sm:$0xff]
    %v202 = vld [vmem:[%s199 + $0x10] sm:$0xff]
    %v203 = vld [vmem:[%s199 + $0x18] sm:$0xff]
    %v205 = vsel %vm58, %v195, 0
    %v208 = vsel %vm58, %v196, 0
    %v211 = vsel %vm58, %v197, 0
    %v214 = vsel %vm58, %v198, 0
    %216 = vmatpush.msra.mxu0 0.0
    %217 = vmatpush.msra.mxu0 0.0
    %218 = vmatpush.msra.mxu0 0.0
    %219 = vmatpush.msra.mxu0 0.0
    %220 = vmatpush.msra.mxu0 0.0
    %221 = vmatpush.msra.mxu0 0.0
    %222 = vmatpush.msra.mxu0 0.0
    %223 = vmatpush.msra.mxu0 0.0
    %224 = vmatpush.msra.mxu0 0.0
    %225 = vmatpush.msra.mxu0 0.0
    %226 = vmatpush.msra.mxu0 0.0
    %227 = vmatpush.msra.mxu0 0.0
    %228 = vmatpush.msra.mxu0 %v203
    %229 = vmatpush.msra.mxu0 %v202
    %230 = vmatpush.msra.mxu0 %v201
    %231 = vmatpush.msra.mxu0 %v200
    %232 = vmatmul.f32.gmra.mxu0 %v205
    %v233 = vpop.f32.mrf.mxu0
    %v234 = vadd.f32 0.0, %v233
    %235 = vmatmul.f32.gmra.mxu0 %v208
    %v236 = vpop.f32.mrf.mxu0
    %v237 = vadd.f32 0.0, %v236
    %238 = vmatmul.f32.gmra.mxu0 %v211
    %v239 = vpop.f32.mrf.mxu0
    %v240 = vadd.f32 0.0, %v239
    %241 = vmatmul.f32.gmra.mxu0 %v214
    %v242 = vpop.f32.mrf.mxu0
    %v243 = vadd.f32 0.0, %v242
    %244 = vdwg.mxu0
    %v245 = vadd.f32 %v191, %v234
    %v246 = vadd.f32 %v192, %v237
    %v247 = vadd.f32 %v193, %v240
    %v248 = vadd.f32 %v194, %v243
    %v249 = vld [vmem:[%s0 + $0x4] sm:$0xff]
    %v250 = vld [vmem:[%s0 + $0xc] sm:$0xff]
    %v251 = vld [vmem:[%s0 + $0x14] sm:$0xff]
    %v252 = vld [vmem:[%s0 + $0x1c] sm:$0xf]
    %s253 = scalar_lea.vmem %s1, 128
    %v254 = vld [vmem:[%s253] sm:$0xff]
    %v255 = vld [vmem:[%s253 + $0x8] sm:$0xff]
    %v256 = vld [vmem:[%s253 + $0x10] sm:$0xff]
    %v257 = vld [vmem:[%s253 + $0x18] sm:$0xff]
    %v259 = vsel %vm58, %v249, 0
    %v262 = vsel %vm58, %v250, 0
    %v265 = vsel %vm58, %v251, 0
    %v268 = vsel %vm58, %v252, 0
    %270 = vmatpush.msra.mxu0 0.0
    %271 = vmatpush.msra.mxu0 0.0
    %272 = vmatpush.msra.mxu0 0.0
    %273 = vmatpush.msra.mxu0 0.0
    %274 = vmatpush.msra.mxu0 0.0
    %275 = vmatpush.msra.mxu0 0.0
    %276 = vmatpush.msra.mxu0 0.0
    %277 = vmatpush.msra.mxu0 0.0
    %278 = vmatpush.msra.mxu0 0.0
    %279 = vmatpush.msra.mxu0 0.0
    %280 = vmatpush.msra.mxu0 0.0
    %281 = vmatpush.msra.mxu0 0.0
    %282 = vmatpush.msra.mxu0 %v257
    %283 = vmatpush.msra.mxu0 %v256
    %284 = vmatpush.msra.mxu0 %v255
    %285 = vmatpush.msra.mxu0 %v254
    %286 = vmatmul.f32.gmra.mxu0 %v259
    %v287 = vpop.f32.mrf.mxu0
    %v288 = vadd.f32 0.0, %v287
    %289 = vmatmul.f32.gmra.mxu0 %v262
    %v290 = vpop.f32.mrf.mxu0
    %v291 = vadd.f32 0.0, %v290
    %292 = vmatmul.f32.gmra.mxu0 %v265
    %v293 = vpop.f32.mrf.mxu0
    %v294 = vadd.f32 0.0, %v293
    %295 = vmatmul.f32.gmra.mxu0 %v268
    %v296 = vpop.f32.mrf.mxu0
    %v297 = vadd.f32 0.0, %v296
    %298 = vdwg.mxu0
    %v299 = vadd.f32 %v245, %v288
    %v300 = vadd.f32 %v246, %v291
    %v301 = vadd.f32 %v247, %v294
    %v302 = vadd.f32 %v248, %v297
    %vm303 = vcmask 687104
    %304 = vst.msk [vmem:[#allocation2] sm:$0xff] %vm303, %v299
    %305 = vst.msk [vmem:[#allocation2 + $0x8] sm:$0xff] %vm303, %v300
    %306 = vst.msk [vmem:[#allocation2 + $0x10] sm:$0xff] %vm303, %v301
    %vm307 = vcmask 683008
    %308 = vst.msk [vmem:[#allocation2 + $0x18] sm:$0xf] %vm307, %v302
    %v309 = vld [vmem:[%s0] sm:$0xff]
    %v310 = vld [vmem:[%s0 + $0x8] sm:$0xff]
    %v311 = vld [vmem:[%s0 + $0x10] sm:$0xff]
    %v312 = vld [vmem:[%s0 + $0x18] sm:$0xf]
    %s313 = scalar_lea.vmem %s1, 160
    %v314 = vld [vmem:[%s313] sm:$0xff]
    %v315 = vld [vmem:[%s313 + $0x8] sm:$0xff]
    %v316 = vld [vmem:[%s313 + $0x10] sm:$0xff]
    %v317 = vld [vmem:[%s313 + $0x18] sm:$0xff]
    %v318 = vld [vmem:[%s0 + $0x1] sm:$0xff]
    %v319 = vld [vmem:[%s0 + $0x9] sm:$0xff]
    %v320 = vld [vmem:[%s0 + $0x11] sm:$0xff]
    %v321 = vld [vmem:[%s0 + $0x19] sm:$0xf]
    %s322 = scalar_lea.vmem %s1, 192
    %v323 = vld [vmem:[%s322] sm:$0xff]
    %v324 = vld [vmem:[%s322 + $0x8] sm:$0xff]
    %v325 = vld [vmem:[%s322 + $0x10] sm:$0xff]
    %v326 = vld [vmem:[%s322 + $0x18] sm:$0xff]
    %v328 = vsel %vm58, %v318, 0
    %v331 = vsel %vm58, %v319, 0
    %v334 = vsel %vm58, %v320, 0
    %v337 = vsel %vm58, %v321, 0
    %339 = vmatpush.msra.mxu0 0.0
    %340 = vmatpush.msra.mxu0 0.0
    %341 = vmatpush.msra.mxu0 0.0
    %342 = vmatpush.msra.mxu0 0.0
    %343 = vmatpush.msra.mxu0 0.0
    %344 = vmatpush.msra.mxu0 0.0
    %345 = vmatpush.msra.mxu0 0.0
    %346 = vmatpush.msra.mxu0 0.0
    %347 = vmatpush.msra.mxu0 0.0
    %348 = vmatpush.msra.mxu0 0.0
    %349 = vmatpush.msra.mxu0 0.0
    %350 = vmatpush.msra.mxu0 0.0
    %351 = vmatpush.msra.mxu0 %v326
    %352 = vmatpush.msra.mxu0 %v325
    %353 = vmatpush.msra.mxu0 %v324
    %354 = vmatpush.msra.mxu0 %v323
    %355 = vmatmul.f32.gmra.mxu0 %v328
    %v356 = vpop.f32.mrf.mxu0
    %v357 = vadd.f32 0.0, %v356
    %358 = vmatmul.f32.gmra.mxu0 %v331
    %v359 = vpop.f32.mrf.mxu0
    %v360 = vadd.f32 0.0, %v359
    %361 = vmatmul.f32.gmra.mxu0 %v334
    %v362 = vpop.f32.mrf.mxu0
    %v363 = vadd.f32 0.0, %v362
    %364 = vmatmul.f32.gmra.mxu0 %v337
    %v365 = vpop.f32.mrf.mxu0
    %v366 = vadd.f32 0.0, %v365
    %367 = vdwg.mxu0
    %v369 = vsel %vm58, %v309, 0
    %v372 = vsel %vm58, %v310, 0
    %v375 = vsel %vm58, %v311, 0
    %v378 = vsel %vm58, %v312, 0
    %380 = vmatpush.msra.mxu0 0.0
    %381 = vmatpush.msra.mxu0 0.0
    %382 = vmatpush.msra.mxu0 0.0
    %383 = vmatpush.msra.mxu0 0.0
    %384 = vmatpush.msra.mxu0 0.0
    %385 = vmatpush.msra.mxu0 0.0
    %386 = vmatpush.msra.mxu0 0.0
    %387 = vmatpush.msra.mxu0 0.0
    %388 = vmatpush.msra.mxu0 0.0
    %389 = vmatpush.msra.mxu0 0.0
    %390 = vmatpush.msra.mxu0 0.0
    %391 = vmatpush.msra.mxu0 0.0
    %392 = vmatpush.msra.mxu0 %v317
    %393 = vmatpush.msra.mxu0 %v316
    %394 = vmatpush.msra.mxu0 %v315
    %395 = vmatpush.msra.mxu0 %v314
    %396 = vmatmul.f32.gmra.mxu0 %v369
    %v397 = vpop.f32.mrf.mxu0
    %v398 = vadd.f32 %v357, %v397
    %399 = vmatmul.f32.gmra.mxu0 %v372
    %v400 = vpop.f32.mrf.mxu0
    %v401 = vadd.f32 %v360, %v400
    %402 = vmatmul.f32.gmra.mxu0 %v375
    %v403 = vpop.f32.mrf.mxu0
    %v404 = vadd.f32 %v363, %v403
    %405 = vmatmul.f32.gmra.mxu0 %v378
    %v406 = vpop.f32.mrf.mxu0
    %v407 = vadd.f32 %v366, %v406
    %408 = vdwg.mxu0
    %v409 = vld [vmem:[%s0 + $0x2] sm:$0xff]
    %v410 = vld [vmem:[%s0 + $0xa] sm:$0xff]
    %v411 = vld [vmem:[%s0 + $0x12] sm:$0xff]
    %v412 = vld [vmem:[%s0 + $0x1a] sm:$0xf]
    %s413 = scalar_lea.vmem %s1, 224
    %v414 = vld [vmem:[%s413] sm:$0xff]
    %v415 = vld [vmem:[%s413 + $0x8] sm:$0xff]
    %v416 = vld [vmem:[%s413 + $0x10] sm:$0xff]
    %v417 = vld [vmem:[%s413 + $0x18] sm:$0xff]
    %v419 = vsel %vm58, %v409, 0
    %v422 = vsel %vm58, %v410, 0
    %v425 = vsel %vm58, %v411, 0
    %v428 = vsel %vm58, %v412, 0
    %430 = vmatpush.msra.mxu0 0.0
    %431 = vmatpush.msra.mxu0 0.0
    %432 = vmatpush.msra.mxu0 0.0
    %433 = vmatpush.msra.mxu0 0.0
    %434 = vmatpush.msra.mxu0 0.0
    %435 = vmatpush.msra.mxu0 0.0
    %436 = vmatpush.msra.mxu0 0.0
    %437 = vmatpush.msra.mxu0 0.0
    %438 = vmatpush.msra.mxu0 0.0
    %439 = vmatpush.msra.mxu0 0.0
    %440 = vmatpush.msra.mxu0 0.0
    %441 = vmatpush.msra.mxu0 0.0
    %442 = vmatpush.msra.mxu0 %v417
    %443 = vmatpush.msra.mxu0 %v416
    %444 = vmatpush.msra.mxu0 %v415
    %445 = vmatpush.msra.mxu0 %v414
    %446 = vmatmul.f32.gmra.mxu0 %v419
    %v447 = vpop.f32.mrf.mxu0
    %v448 = vadd.f32 0.0, %v447
    %449 = vmatmul.f32.gmra.mxu0 %v422
    %v450 = vpop.f32.mrf.mxu0
    %v451 = vadd.f32 0.0, %v450
    %452 = vmatmul.f32.gmra.mxu0 %v425
    %v453 = vpop.f32.mrf.mxu0
    %v454 = vadd.f32 0.0, %v453
    %455 = vmatmul.f32.gmra.mxu0 %v428
    %v456 = vpop.f32.mrf.mxu0
    %v457 = vadd.f32 0.0, %v456
    %458 = vdwg.mxu0
    %v459 = vadd.f32 %v398, %v448
    %v460 = vadd.f32 %v401, %v451
    %v461 = vadd.f32 %v404, %v454
    %v462 = vadd.f32 %v407, %v457
    %v463 = vld [vmem:[%s0 + $0x3] sm:$0xff]
    %v464 = vld [vmem:[%s0 + $0xb] sm:$0xff]
    %v465 = vld [vmem:[%s0 + $0x13] sm:$0xff]
    %v466 = vld [vmem:[%s0 + $0x1b] sm:$0xf]
    %s467 = scalar_lea.vmem %s1, 256
    %v468 = vld [vmem:[%s467] sm:$0xff]
    %v469 = vld [vmem:[%s467 + $0x8] sm:$0xff]
    %v470 = vld [vmem:[%s467 + $0x10] sm:$0xff]
    %v471 = vld [vmem:[%s467 + $0x18] sm:$0xff]
    %v473 = vsel %vm58, %v463, 0
    %v476 = vsel %vm58, %v464, 0
    %v479 = vsel %vm58, %v465, 0
    %v482 = vsel %vm58, %v466, 0
    %484 = vmatpush.msra.mxu0 0.0
    %485 = vmatpush.msra.mxu0 0.0
    %486 = vmatpush.msra.mxu0 0.0
    %487 = vmatpush.msra.mxu0 0.0
    %488 = vmatpush.msra.mxu0 0.0
    %489 = vmatpush.msra.mxu0 0.0
    %490 = vmatpush.msra.mxu0 0.0
    %491 = vmatpush.msra.mxu0 0.0
    %492 = vmatpush.msra.mxu0 0.0
    %493 = vmatpush.msra.mxu0 0.0
    %494 = vmatpush.msra.mxu0 0.0
    %495 = vmatpush.msra.mxu0 0.0
    %496 = vmatpush.msra.mxu0 %v471
    %497 = vmatpush.msra.mxu0 %v470
    %498 = vmatpush.msra.mxu0 %v469
    %499 = vmatpush.msra.mxu0 %v468
    %500 = vmatmul.f32.gmra.mxu0 %v473
    %v501 = vpop.f32.mrf.mxu0
    %v502 = vadd.f32 0.0, %v501
    %503 = vmatmul.f32.gmra.mxu0 %v476
    %v504 = vpop.f32.mrf.mxu0
    %v505 = vadd.f32 0.0, %v504
    %506 = vmatmul.f32.gmra.mxu0 %v479
    %v507 = vpop.f32.mrf.mxu0
    %v508 = vadd.f32 0.0, %v507
    %509 = vmatmul.f32.gmra.mxu0 %v482
    %v510 = vpop.f32.mrf.mxu0
    %v511 = vadd.f32 0.0, %v510
    %512 = vdwg.mxu0
    %v513 = vadd.f32 %v459, %v502
    %v514 = vadd.f32 %v460, %v505
    %v515 = vadd.f32 %v461, %v508
    %v516 = vadd.f32 %v462, %v511
    %v517 = vld [vmem:[%s0 + $0x4] sm:$0xff]
    %v518 = vld [vmem:[%s0 + $0xc] sm:$0xff]
    %v519 = vld [vmem:[%s0 + $0x14] sm:$0xff]
    %v520 = vld [vmem:[%s0 + $0x1c] sm:$0xf]
    %s521 = scalar_lea.vmem %s1, 288
    %v522 = vld [vmem:[%s521] sm:$0xff]
    %v523 = vld [vmem:[%s521 + $0x8] sm:$0xff]
    %v524 = vld [vmem:[%s521 + $0x10] sm:$0xff]
    %v525 = vld [vmem:[%s521 + $0x18] sm:$0xff]
    %v527 = vsel %vm58, %v517, 0
    %v530 = vsel %vm58, %v518, 0
    %v533 = vsel %vm58, %v519, 0
    %v536 = vsel %vm58, %v520, 0
    %538 = vmatpush.msra.mxu0 0.0
    %539 = vmatpush.msra.mxu0 0.0
    %540 = vmatpush.msra.mxu0 0.0
    %541 = vmatpush.msra.mxu0 0.0
    %542 = vmatpush.msra.mxu0 0.0
    %543 = vmatpush.msra.mxu0 0.0
    %544 = vmatpush.msra.mxu0 0.0
    %545 = vmatpush.msra.mxu0 0.0
    %546 = vmatpush.msra.mxu0 0.0
    %547 = vmatpush.msra.mxu0 0.0
    %548 = vmatpush.msra.mxu0 0.0
    %549 = vmatpush.msra.mxu0 0.0
    %550 = vmatpush.msra.mxu0 %v525
    %551 = vmatpush.msra.mxu0 %v524
    %552 = vmatpush.msra.mxu0 %v523
    %553 = vmatpush.msra.mxu0 %v522
    %554 = vmatmul.f32.gmra.mxu0 %v527
    %v555 = vpop.f32.mrf.mxu0
    %v556 = vadd.f32 0.0, %v555
    %557 = vmatmul.f32.gmra.mxu0 %v530
    %v558 = vpop.f32.mrf.mxu0
    %v559 = vadd.f32 0.0, %v558
    %560 = vmatmul.f32.gmra.mxu0 %v533
    %v561 = vpop.f32.mrf.mxu0
    %v562 = vadd.f32 0.0, %v561
    %563 = vmatmul.f32.gmra.mxu0 %v536
    %v564 = vpop.f32.mrf.mxu0
    %v565 = vadd.f32 0.0, %v564
    %566 = vdwg.mxu0
    %v567 = vadd.f32 %v513, %v556
    %v568 = vadd.f32 %v514, %v559
    %v569 = vadd.f32 %v515, %v562
    %v570 = vadd.f32 %v516, %v565
    %s571 = scalar_lea.vmem [#allocation2], 32
    %572 = vst.msk [vmem:[%s571] sm:$0xff] %vm303, %v567
    %573 = vst.msk [vmem:[%s571 + $0x8] sm:$0xff] %vm303, %v568
    %574 = vst.msk [vmem:[%s571 + $0x10] sm:$0xff] %vm303, %v569
    %575 = vst.msk [vmem:[%s571 + $0x18] sm:$0xf] %vm307, %v570
    %v576 = vld [vmem:[#allocation2] sm:$0x1]
    %v577 = vld [vmem:[#allocation2 + $0x1] sm:$0x1]
    %v578 = vmax.f32 %v576, %v577
    %v579 = vld [vmem:[%s571] sm:$0x1]
    %v580 = vld [vmem:[%s571 + $0x1] sm:$0x1]
    %v581 = vmax.f32 %v579, %v580
    %v582 = vmax.f32 %v578, %v581
    %v583 = vadd.f32 %v582, %v39
    %v584 = vmax.f32 %v583, 0.0
    %vm585 = vcmask 679936
    %586 = vst.msk [vmem:[#allocation3] sm:$0x1] %vm585, %v584
    %v587 = vld [vmem:[#allocation2 + $0x2] sm:$0x1]
    %v588 = vld [vmem:[#allocation2 + $0x3] sm:$0x1]
    %v589 = vmax.f32 %v587, %v588
    %v590 = vld [vmem:[%s571 + $0x2] sm:$0x1]
    %v591 = vld [vmem:[%s571 + $0x3] sm:$0x1]
    %v592 = vmax.f32 %v590, %v591
    %v593 = vmax.f32 %v589, %v592
    %v594 = vadd.f32 %v593, %v39
    %v595 = vmax.f32 %v594, 0.0
    %596 = vst.msk [vmem:[#allocation3 + $0x1] sm:$0x1] %vm585, %v595
    %v597 = vld [vmem:[#allocation2 + $0x4] sm:$0x1]
    %v598 = vld [vmem:[#allocation2 + $0x5] sm:$0x1]
    %v599 = vmax.f32 %v597, %v598
    %v600 = vld [vmem:[%s571 + $0x4] sm:$0x1]
    %v601 = vld [vmem:[%s571 + $0x5] sm:$0x1]
    %v602 = vmax.f32 %v600, %v601
    %v603 = vmax.f32 %v599, %v602
    %v604 = vadd.f32 %v603, %v39
    %v605 = vmax.f32 %v604, 0.0
    %606 = vst.msk [vmem:[#allocation3 + $0x2] sm:$0x1] %vm585, %v605
    %v607 = vld [vmem:[#allocation2 + $0x6] sm:$0x1]
    %v608 = vld [vmem:[#allocation2 + $0x7] sm:$0x1]
    %v609 = vmax.f32 %v607, %v608
    %v610 = vld [vmem:[%s571 + $0x6] sm:$0x1]
    %v611 = vld [vmem:[%s571 + $0x7] sm:$0x1]
    %v612 = vmax.f32 %v610, %v611
    %v613 = vmax.f32 %v609, %v612
    %v614 = vadd.f32 %v613, %v39
    %v615 = vmax.f32 %v614, 0.0
    %616 = vst.msk [vmem:[#allocation3 + $0x3] sm:$0x1] %vm585, %v615
    %v617 = vld [vmem:[#allocation2 + $0x8] sm:$0x1]
    %v618 = vld [vmem:[#allocation2 + $0x9] sm:$0x1]
    %v619 = vmax.f32 %v617, %v618
    %v620 = vld [vmem:[%s571 + $0x8] sm:$0x1]
    %v621 = vld [vmem:[%s571 + $0x9] sm:$0x1]
    %v622 = vmax.f32 %v620, %v621
    %v623 = vmax.f32 %v619, %v622
    %v624 = vadd.f32 %v623, %v39
    %v625 = vmax.f32 %v624, 0.0
    %626 = vst.msk [vmem:[#allocation3 + $0x4] sm:$0x1] %vm585, %v625
    %v627 = vld [vmem:[#allocation2 + $0xa] sm:$0x1]
    %v628 = vld [vmem:[#allocation2 + $0xb] sm:$0x1]
    %v629 = vmax.f32 %v627, %v628
    %v630 = vld [vmem:[%s571 + $0xa] sm:$0x1]
    %v631 = vld [vmem:[%s571 + $0xb] sm:$0x1]
    %v632 = vmax.f32 %v630, %v631
    %v633 = vmax.f32 %v629, %v632
    %v634 = vadd.f32 %v633, %v39
    %v635 = vmax.f32 %v634, 0.0
    %636 = vst.msk [vmem:[#allocation3 + $0x5] sm:$0x1] %vm585, %v635
    %v637 = vld [vmem:[#allocation2 + $0xc] sm:$0x1]
    %v638 = vld [vmem:[#allocation2 + $0xd] sm:$0x1]
    %v639 = vmax.f32 %v637, %v638
    %v640 = vld [vmem:[%s571 + $0xc] sm:$0x1]
    %v641 = vld [vmem:[%s571 + $0xd] sm:$0x1]
    %v642 = vmax.f32 %v640, %v641
    %v643 = vmax.f32 %v639, %v642
    %v644 = vadd.f32 %v643, %v39
    %v645 = vmax.f32 %v644, 0.0
    %646 = vst.msk [vmem:[#allocation3 + $0x6] sm:$0x1] %vm585, %v645
    %v647 = vld [vmem:[#allocation2 + $0xe] sm:$0x1]
    %v648 = vld [vmem:[#allocation2 + $0xf] sm:$0x1]
    %v649 = vmax.f32 %v647, %v648
    %v650 = vld [vmem:[%s571 + $0xe] sm:$0x1]
    %v651 = vld [vmem:[%s571 + $0xf] sm:$0x1]
    %v652 = vmax.f32 %v650, %v651
    %v653 = vmax.f32 %v649, %v652
    %v654 = vadd.f32 %v653, %v39
    %v655 = vmax.f32 %v654, 0.0
    %656 = vst.msk [vmem:[#allocation3 + $0x7] sm:$0x1] %vm585, %v655
    %v657 = vld [vmem:[#allocation2 + $0x10] sm:$0x1]
    %v658 = vld [vmem:[#allocation2 + $0x11] sm:$0x1]
    %v659 = vmax.f32 %v657, %v658
    %v660 = vld [vmem:[%s571 + $0x10] sm:$0x1]
    %v661 = vld [vmem:[%s571 + $0x11] sm:$0x1]
    %v662 = vmax.f32 %v660, %v661
    %v663 = vmax.f32 %v659, %v662
    %v664 = vadd.f32 %v663, %v39
    %v665 = vmax.f32 %v664, 0.0
    %666 = vst.msk [vmem:[#allocation3 + $0x8] sm:$0x1] %vm585, %v665
    %v667 = vld [vmem:[#allocation2 + $0x12] sm:$0x1]
    %v668 = vld [vmem:[#allocation2 + $0x13] sm:$0x1]
    %v669 = vmax.f32 %v667, %v668
    %v670 = vld [vmem:[%s571 + $0x12] sm:$0x1]
    %v671 = vld [vmem:[%s571 + $0x13] sm:$0x1]
    %v672 = vmax.f32 %v670, %v671
    %v673 = vmax.f32 %v669, %v672
    %v674 = vadd.f32 %v673, %v39
    %v675 = vmax.f32 %v674, 0.0
    %676 = vst.msk [vmem:[#allocation3 + $0x9] sm:$0x1] %vm585, %v675
    %v677 = vld [vmem:[#allocation2 + $0x14] sm:$0x1]
    %v678 = vld [vmem:[#allocation2 + $0x15] sm:$0x1]
    %v679 = vmax.f32 %v677, %v678
    %v680 = vld [vmem:[%s571 + $0x14] sm:$0x1]
    %v681 = vld [vmem:[%s571 + $0x15] sm:$0x1]
    %v682 = vmax.f32 %v680, %v681
    %v683 = vmax.f32 %v679, %v682
    %v684 = vadd.f32 %v683, %v39
    %v685 = vmax.f32 %v684, 0.0
    %686 = vst.msk [vmem:[#allocation3 + $0xa] sm:$0x1] %vm585, %v685
    %v687 = vld [vmem:[#allocation2 + $0x16] sm:$0x1]
    %v688 = vld [vmem:[#allocation2 + $0x17] sm:$0x1]
    %v689 = vmax.f32 %v687, %v688
    %v690 = vld [vmem:[%s571 + $0x16] sm:$0x1]
    %v691 = vld [vmem:[%s571 + $0x17] sm:$0x1]
    %v692 = vmax.f32 %v690, %v691
    %v693 = vmax.f32 %v689, %v692
    %v694 = vadd.f32 %v693, %v39
    %v695 = vmax.f32 %v694, 0.0
    %696 = vst.msk [vmem:[#allocation3 + $0xb] sm:$0x1] %vm585, %v695
    %v697 = vld [vmem:[#allocation2 + $0x18] sm:$0x1]
    %v698 = vld [vmem:[#allocation2 + $0x19] sm:$0x1]
    %v699 = vmax.f32 %v697, %v698
    %v700 = vld [vmem:[%s571 + $0x18] sm:$0x1]
    %v701 = vld [vmem:[%s571 + $0x19] sm:$0x1]
    %v702 = vmax.f32 %v700, %v701
    %v703 = vmax.f32 %v699, %v702
    %v704 = vadd.f32 %v703, %v39
    %v705 = vmax.f32 %v704, 0.0
    %706 = vst.msk [vmem:[#allocation3 + $0xc] sm:$0x1] %vm585, %v705
    %v707 = vld [vmem:[#allocation2 + $0x1a] sm:$0x1]
    %v708 = vld [vmem:[#allocation2 + $0x1b] sm:$0x1]
    %v709 = vmax.f32 %v707, %v708
    %v710 = vld [vmem:[%s571 + $0x1a] sm:$0x1]
    %v711 = vld [vmem:[%s571 + $0x1b] sm:$0x1]
    %v712 = vmax.f32 %v710, %v711
    %v713 = vmax.f32 %v709, %v712
    %v714 = vadd.f32 %v713, %v39
    %v715 = vmax.f32 %v714, 0.0
    %716 = vst.msk [vmem:[#allocation3 + $0xd] sm:$0x1] %vm585, %v715
    %v717 = vld [vmem:[#allocation3] sm:$0xff]
    %v718 = vld [vmem:[#allocation3 + $0x8] sm:$0x3]
    %v719 = vld [vmem:[%s3] sm:$0xff]
    %v720 = vld [vmem:[%s3 + $0x8] sm:$0xff]
    %v721 = vld [vmem:[%s3 + $0x10] sm:$0xff]
    %v722 = vld [vmem:[%s3 + $0x18] sm:$0xff]
    %v723 = vld [vmem:[%s3 + $0x20] sm:$0xff]
    %v724 = vld [vmem:[%s3 + $0x28] sm:$0xff]
    %v725 = vld [vmem:[%s3 + $0x30] sm:$0xff]
    %v726 = vld [vmem:[%s3 + $0x38] sm:$0xff]
    %v727 = vld [vmem:[%s3 + $0x40] sm:$0xff]
    %v728 = vld [vmem:[%s3 + $0x48] sm:$0xff]
    %v729 = vld [vmem:[%s3 + $0x50] sm:$0xf]
    %v730 = vld [vmem:[#allocation3 + $0x1] sm:$0xff]
    %v731 = vld [vmem:[#allocation3 + $0x9] sm:$0x3]
    %s732 = scalar_lea.vmem %s3, 88
    %v733 = vld [vmem:[%s732] sm:$0xff]
    %v734 = vld [vmem:[%s732 + $0x8] sm:$0xff]
    %v735 = vld [vmem:[%s732 + $0x10] sm:$0xff]
    %v736 = vld [vmem:[%s732 + $0x18] sm:$0xff]
    %v737 = vld [vmem:[%s732 + $0x20] sm:$0xff]
    %v738 = vld [vmem:[%s732 + $0x28] sm:$0xff]
    %v739 = vld [vmem:[%s732 + $0x30] sm:$0xff]
    %v740 = vld [vmem:[%s732 + $0x38] sm:$0xff]
    %v741 = vld [vmem:[%s732 + $0x40] sm:$0xff]
    %v742 = vld [vmem:[%s732 + $0x48] sm:$0xff]
    %v743 = vld [vmem:[%s732 + $0x50] sm:$0xf]
    %v745 = vsel %vm303, %v730, 0
    %v748 = vsel %vm303, %v731, 0
    %vm750 = vcmask 1043456
    %v752 = vsel %vm750, %v743, 0
    %754 = vmatpush.msra.mxu0 0.0
    %755 = vmatpush.msra.mxu0 0.0
    %756 = vmatpush.msra.mxu0 0.0
    %757 = vmatpush.msra.mxu0 0.0
    %758 = vmatpush.msra.mxu0 0.0
    %759 = vmatpush.msra.mxu0 %v752
    %760 = vmatpush.msra.mxu0 %v742
    %761 = vmatpush.msra.mxu0 %v741
    %762 = vmatpush.msra.mxu0 %v740
    %763 = vmatpush.msra.mxu0 %v739
    %764 = vmatpush.msra.mxu0 %v738
    %765 = vmatpush.msra.mxu0 %v737
    %766 = vmatpush.msra.mxu0 %v736
    %767 = vmatpush.msra.mxu0 %v735
    %768 = vmatpush.msra.mxu0 %v734
    %769 = vmatpush.msra.mxu0 %v733
    %770 = vmatmul.f32.gmra.mxu0 %v745
    %v771 = vpop.f32.mrf.mxu0
    %v772 = vadd.f32 0.0, %v771
    %773 = vmatmul.f32.gmra.mxu0 %v748
    %v774 = vpop.f32.mrf.mxu0
    %v775 = vadd.f32 0.0, %v774
    %776 = vdwg.mxu0
    %v778 = vsel %vm303, %v717, 0
    %v781 = vsel %vm303, %v718, 0
    %v784 = vsel %vm750, %v729, 0
    %786 = vmatpush.msra.mxu0 0.0
    %787 = vmatpush.msra.mxu0 0.0
    %788 = vmatpush.msra.mxu0 0.0
    %789 = vmatpush.msra.mxu0 0.0
    %790 = vmatpush.msra.mxu0 0.0
    %791 = vmatpush.msra.mxu0 %v784
    %792 = vmatpush.msra.mxu0 %v728
    %793 = vmatpush.msra.mxu0 %v727
    %794 = vmatpush.msra.mxu0 %v726
    %795 = vmatpush.msra.mxu0 %v725
    %796 = vmatpush.msra.mxu0 %v724
    %797 = vmatpush.msra.mxu0 %v723
    %798 = vmatpush.msra.mxu0 %v722
    %799 = vmatpush.msra.mxu0 %v721
    %800 = vmatpush.msra.mxu0 %v720
    %801 = vmatpush.msra.mxu0 %v719
    %802 = vmatmul.f32.gmra.mxu0 %v778
    %v803 = vpop.f32.mrf.mxu0
    %v804 = vadd.f32 %v772, %v803
    %805 = vmatmul.f32.gmra.mxu0 %v781
    %v806 = vpop.f32.mrf.mxu0
    %v807 = vadd.f32 %v775, %v806
    %808 = vdwg.mxu0
    %v809 = vld [vmem:[#allocation3 + $0x2] sm:$0xff]
    %v810 = vld [vmem:[#allocation3 + $0xa] sm:$0x3]
    %s811 = scalar_lea.vmem %s3, 176
    %v812 = vld [vmem:[%s811] sm:$0xff]
    %v813 = vld [vmem:[%s811 + $0x8] sm:$0xff]
    %v814 = vld [vmem:[%s811 + $0x10] sm:$0xff]
    %v815 = vld [vmem:[%s811 + $0x18] sm:$0xff]
    %v816 = vld [vmem:[%s811 + $0x20] sm:$0xff]
    %v817 = vld [vmem:[%s811 + $0x28] sm:$0xff]
    %v818 = vld [vmem:[%s811 + $0x30] sm:$0xff]
    %v819 = vld [vmem:[%s811 + $0x38] sm:$0xff]
    %v820 = vld [vmem:[%s811 + $0x40] sm:$0xff]
    %v821 = vld [vmem:[%s811 + $0x48] sm:$0xff]
    %v822 = vld [vmem:[%s811 + $0x50] sm:$0xf]
    %v824 = vsel %vm303, %v809, 0
    %v827 = vsel %vm303, %v810, 0
    %v830 = vsel %vm750, %v822, 0
    %832 = vmatpush.msra.mxu0 0.0
    %833 = vmatpush.msra.mxu0 0.0
    %834 = vmatpush.msra.mxu0 0.0
    %835 = vmatpush.msra.mxu0 0.0
    %836 = vmatpush.msra.mxu0 0.0
    %837 = vmatpush.msra.mxu0 %v830
    %838 = vmatpush.msra.mxu0 %v821
    %839 = vmatpush.msra.mxu0 %v820
    %840 = vmatpush.msra.mxu0 %v819
    %841 = vmatpush.msra.mxu0 %v818
    %842 = vmatpush.msra.mxu0 %v817
    %843 = vmatpush.msra.mxu0 %v816
    %844 = vmatpush.msra.mxu0 %v815
    %845 = vmatpush.msra.mxu0 %v814
    %846 = vmatpush.msra.mxu0 %v813
    %847 = vmatpush.msra.mxu0 %v812
    %848 = vmatmul.f32.gmra.mxu0 %v824
    %v849 = vpop.f32.mrf.mxu0
    %v850 = vadd.f32 0.0, %v849
    %851 = vmatmul.f32.gmra.mxu0 %v827
    %v852 = vpop.f32.mrf.mxu0
    %v853 = vadd.f32 0.0, %v852
    %854 = vdwg.mxu0
    %v855 = vadd.f32 %v804, %v850
    %v856 = vadd.f32 %v807, %v853
    %v857 = vld [vmem:[#allocation3 + $0x3] sm:$0xff]
    %v858 = vld [vmem:[#allocation3 + $0xb] sm:$0x3]
    %s859 = scalar_lea.vmem %s3, 264
    %v860 = vld [vmem:[%s859] sm:$0xff]
    %v861 = vld [vmem:[%s859 + $0x8] sm:$0xff]
    %v862 = vld [vmem:[%s859 + $0x10] sm:$0xff]
    %v863 = vld [vmem:[%s859 + $0x18] sm:$0xff]
    %v864 = vld [vmem:[%s859 + $0x20] sm:$0xff]
    %v865 = vld [vmem:[%s859 + $0x28] sm:$0xff]
    %v866 = vld [vmem:[%s859 + $0x30] sm:$0xff]
    %v867 = vld [vmem:[%s859 + $0x38] sm:$0xff]
    %v868 = vld [vmem:[%s859 + $0x40] sm:$0xff]
    %v869 = vld [vmem:[%s859 + $0x48] sm:$0xff]
    %v870 = vld [vmem:[%s859 + $0x50] sm:$0xf]
    %v872 = vsel %vm303, %v857, 0
    %v875 = vsel %vm303, %v858, 0
    %v878 = vsel %vm750, %v870, 0
    %880 = vmatpush.msra.mxu0 0.0
    %881 = vmatpush.msra.mxu0 0.0
    %882 = vmatpush.msra.mxu0 0.0
    %883 = vmatpush.msra.mxu0 0.0
    %884 = vmatpush.msra.mxu0 0.0
    %885 = vmatpush.msra.mxu0 %v878
    %886 = vmatpush.msra.mxu0 %v869
    %887 = vmatpush.msra.mxu0 %v868
    %888 = vmatpush.msra.mxu0 %v867
    %889 = vmatpush.msra.mxu0 %v866
    %890 = vmatpush.msra.mxu0 %v865
    %891 = vmatpush.msra.mxu0 %v864
    %892 = vmatpush.msra.mxu0 %v863
    %893 = vmatpush.msra.mxu0 %v862
    %894 = vmatpush.msra.mxu0 %v861
    %895 = vmatpush.msra.mxu0 %v860
    %896 = vmatmul.f32.gmra.mxu0 %v872
    %v897 = vpop.f32.mrf.mxu0
    %v898 = vadd.f32 0.0, %v897
    %899 = vmatmul.f32.gmra.mxu0 %v875
    %v900 = vpop.f32.mrf.mxu0
    %v901 = vadd.f32 0.0, %v900
    %902 = vdwg.mxu0
    %v903 = vadd.f32 %v855, %v898
    %v904 = vadd.f32 %v856, %v901
    %v905 = vld [vmem:[#allocation3 + $0x4] sm:$0xff]
    %v906 = vld [vmem:[#allocation3 + $0xc] sm:$0x3]
    %s907 = scalar_lea.vmem %s3, 352
    %v908 = vld [vmem:[%s907] sm:$0xff]
    %v909 = vld [vmem:[%s907 + $0x8] sm:$0xff]
    %v910 = vld [vmem:[%s907 + $0x10] sm:$0xff]
    %v911 = vld [vmem:[%s907 + $0x18] sm:$0xff]
    %v912 = vld [vmem:[%s907 + $0x20] sm:$0xff]
    %v913 = vld [vmem:[%s907 + $0x28] sm:$0xff]
    %v914 = vld [vmem:[%s907 + $0x30] sm:$0xff]
    %v915 = vld [vmem:[%s907 + $0x38] sm:$0xff]
    %v916 = vld [vmem:[%s907 + $0x40] sm:$0xff]
    %v917 = vld [vmem:[%s907 + $0x48] sm:$0xff]
    %v918 = vld [vmem:[%s907 + $0x50] sm:$0xf]
    %v920 = vsel %vm303, %v905, 0
    %v923 = vsel %vm303, %v906, 0
    %v926 = vsel %vm750, %v918, 0
    %928 = vmatpush.msra.mxu0 0.0
    %929 = vmatpush.msra.mxu0 0.0
    %930 = vmatpush.msra.mxu0 0.0
    %931 = vmatpush.msra.mxu0 0.0
    %932 = vmatpush.msra.mxu0 0.0
    %933 = vmatpush.msra.mxu0 %v926
    %934 = vmatpush.msra.mxu0 %v917
    %935 = vmatpush.msra.mxu0 %v916
    %936 = vmatpush.msra.mxu0 %v915
    %937 = vmatpush.msra.mxu0 %v914
    %938 = vmatpush.msra.mxu0 %v913
    %939 = vmatpush.msra.mxu0 %v912
    %940 = vmatpush.msra.mxu0 %v911
    %941 = vmatpush.msra.mxu0 %v910
    %942 = vmatpush.msra.mxu0 %v909
    %943 = vmatpush.msra.mxu0 %v908
    %944 = vmatmul.f32.gmra.mxu0 %v920
    %v945 = vpop.f32.mrf.mxu0
    %v946 = vadd.f32 0.0, %v945
    %947 = vmatmul.f32.gmra.mxu0 %v923
    %v948 = vpop.f32.mrf.mxu0
    %v949 = vadd.f32 0.0, %v948
    %950 = vdwg.mxu0
    %v951 = vadd.f32 %v903, %v946
    %v952 = vadd.f32 %v904, %v949
    %vm953 = vcmask 654336
    %954 = vst.msk [vmem:[#allocation4] sm:$0xff] %vm953, %v951
    %vm955 = vcmask 648192
    %956 = vst.msk [vmem:[#allocation4 + $0x8] sm:$0x3] %vm955, %v952
    %v957 = vld [vmem:[#allocation3] sm:$0xff]
    %v958 = vld [vmem:[#allocation3 + $0x8] sm:$0x3]
    %s959 = scalar_lea.vmem %s3, 440
    %v960 = vld [vmem:[%s959] sm:$0xff]
    %v961 = vld [vmem:[%s959 + $0x8] sm:$0xff]
    %v962 = vld [vmem:[%s959 + $0x10] sm:$0xff]
    %v963 = vld [vmem:[%s959 + $0x18] sm:$0xff]
    %v964 = vld [vmem:[%s959 + $0x20] sm:$0xff]
    %v965 = vld [vmem:[%s959 + $0x28] sm:$0xff]
    %v966 = vld [vmem:[%s959 + $0x30] sm:$0xff]
    %v967 = vld [vmem:[%s959 + $0x38] sm:$0xff]
    %v968 = vld [vmem:[%s959 + $0x40] sm:$0xff]
    %v969 = vld [vmem:[%s959 + $0x48] sm:$0xff]
    %v970 = vld [vmem:[%s959 + $0x50] sm:$0xf]
    %v971 = vld [vmem:[#allocation3 + $0x1] sm:$0xff]
    %v972 = vld [vmem:[#allocation3 + $0x9] sm:$0x3]
    %s973 = scalar_lea.vmem %s3, 528
    %v974 = vld [vmem:[%s973] sm:$0xff]
    %v975 = vld [vmem:[%s973 + $0x8] sm:$0xff]
    %v976 = vld [vmem:[%s973 + $0x10] sm:$0xff]
    %v977 = vld [vmem:[%s973 + $0x18] sm:$0xff]
    %v978 = vld [vmem:[%s973 + $0x20] sm:$0xff]
    %v979 = vld [vmem:[%s973 + $0x28] sm:$0xff]
    %v980 = vld [vmem:[%s973 + $0x30] sm:$0xff]
    %v981 = vld [vmem:[%s973 + $0x38] sm:$0xff]
    %v982 = vld [vmem:[%s973 + $0x40] sm:$0xff]
    %v983 = vld [vmem:[%s973 + $0x48] sm:$0xff]
    %v984 = vld [vmem:[%s973 + $0x50] sm:$0xf]
    %v986 = vsel %vm303, %v971, 0
    %v989 = vsel %vm303, %v972, 0
    %v992 = vsel %vm750, %v984, 0
    %994 = vmatpush.msra.mxu0 0.0
    %995 = vmatpush.msra.mxu0 0.0
    %996 = vmatpush.msra.mxu0 0.0
    %997 = vmatpush.msra.mxu0 0.0
    %998 = vmatpush.msra.mxu0 0.0
    %999 = vmatpush.msra.mxu0 %v992
    %1000 = vmatpush.msra.mxu0 %v983
    %1001 = vmatpush.msra.mxu0 %v982
    %1002 = vmatpush.msra.mxu0 %v981
    %1003 = vmatpush.msra.mxu0 %v980
    %1004 = vmatpush.msra.mxu0 %v979
    %1005 = vmatpush.msra.mxu0 %v978
    %1006 = vmatpush.msra.mxu0 %v977
    %1007 = vmatpush.msra.mxu0 %v976
    %1008 = vmatpush.msra.mxu0 %v975
    %1009 = vmatpush.msra.mxu0 %v974
    %1010 = vmatmul.f32.gmra.mxu0 %v986
    %v1011 = vpop.f32.mrf.mxu0
    %v1012 = vadd.f32 0.0, %v1011
    %1013 = vmatmul.f32.gmra.mxu0 %v989
    %v1014 = vpop.f32.mrf.mxu0
    %v1015 = vadd.f32 0.0, %v1014
    %1016 = vdwg.mxu0
    %v1018 = vsel %vm303, %v957, 0
    %v1021 = vsel %vm303, %v958, 0
    %v1024 = vsel %vm750, %v970, 0
    %1026 = vmatpush.msra.mxu0 0.0
    %1027 = vmatpush.msra.mxu0 0.0
    %1028 = vmatpush.msra.mxu0 0.0
    %1029 = vmatpush.msra.mxu0 0.0
    %1030 = vmatpush.msra.mxu0 0.0
    %1031 = vmatpush.msra.mxu0 %v1024
    %1032 = vmatpush.msra.mxu0 %v969
    %1033 = vmatpush.msra.mxu0 %v968
    %1034 = vmatpush.msra.mxu0 %v967
    %1035 = vmatpush.msra.mxu0 %v966
    %1036 = vmatpush.msra.mxu0 %v965
    %1037 = vmatpush.msra.mxu0 %v964
    %1038 = vmatpush.msra.mxu0 %v963
    %1039 = vmatpush.msra.mxu0 %v962
    %1040 = vmatpush.msra.mxu0 %v961
    %1041 = vmatpush.msra.mxu0 %v960
    %1042 = vmatmul.f32.gmra.mxu0 %v1018
    %v1043 = vpop.f32.mrf.mxu0
    %v1044 = vadd.f32 %v1012, %v1043
    %1045 = vmatmul.f32.gmra.mxu0 %v1021
    %v1046 = vpop.f32.mrf.mxu0
    %v1047 = vadd.f32 %v1015, %v1046
    %1048 = vdwg.mxu0
    %v1049 = vld [vmem:[#allocation3 + $0x2] sm:$0xff]
    %v1050 = vld [vmem:[#allocation3 + $0xa] sm:$0x3]
    %s1051 = scalar_lea.vmem %s3, 616
    %v1052 = vld [vmem:[%s1051] sm:$0xff]
    %v1053 = vld [vmem:[%s1051 + $0x8] sm:$0xff]
    %v1054 = vld [vmem:[%s1051 + $0x10] sm:$0xff]
    %v1055 = vld [vmem:[%s1051 + $0x18] sm:$0xff]
    %v1056 = vld [vmem:[%s1051 + $0x20] sm:$0xff]
    %v1057 = vld [vmem:[%s1051 + $0x28] sm:$0xff]
    %v1058 = vld [vmem:[%s1051 + $0x30] sm:$0xff]
    %v1059 = vld [vmem:[%s1051 + $0x38] sm:$0xff]
    %v1060 = vld [vmem:[%s1051 + $0x40] sm:$0xff]
    %v1061 = vld [vmem:[%s1051 + $0x48] sm:$0xff]
    %v1062 = vld [vmem:[%s1051 + $0x50] sm:$0xf]
    %v1064 = vsel %vm303, %v1049, 0
    %v1067 = vsel %vm303, %v1050, 0
    %v1070 = vsel %vm750, %v1062, 0
    %1072 = vmatpush.msra.mxu0 0.0
    %1073 = vmatpush.msra.mxu0 0.0
    %1074 = vmatpush.msra.mxu0 0.0
    %1075 = vmatpush.msra.mxu0 0.0
    %1076 = vmatpush.msra.mxu0 0.0
    %1077 = vmatpush.msra.mxu0 %v1070
    %1078 = vmatpush.msra.mxu0 %v1061
    %1079 = vmatpush.msra.mxu0 %v1060
    %1080 = vmatpush.msra.mxu0 %v1059
    %1081 = vmatpush.msra.mxu0 %v1058
    %1082 = vmatpush.msra.mxu0 %v1057
    %1083 = vmatpush.msra.mxu0 %v1056
    %1084 = vmatpush.msra.mxu0 %v1055
    %1085 = vmatpush.msra.mxu0 %v1054
    %1086 = vmatpush.msra.mxu0 %v1053
    %1087 = vmatpush.msra.mxu0 %v1052
    %1088 = vmatmul.f32.gmra.mxu0 %v1064
    %v1089 = vpop.f32.mrf.mxu0
    %v1090 = vadd.f32 0.0, %v1089
    %1091 = vmatmul.f32.gmra.mxu0 %v1067
    %v1092 = vpop.f32.mrf.mxu0
    %v1093 = vadd.f32 0.0, %v1092
    %1094 = vdwg.mxu0
    %v1095 = vadd.f32 %v1044, %v1090
    %v1096 = vadd.f32 %v1047, %v1093
    %v1097 = vld [vmem:[#allocation3 + $0x3] sm:$0xff]
    %v1098 = vld [vmem:[#allocation3 + $0xb] sm:$0x3]
    %s1099 = scalar_lea.vmem %s3, 704
    %v1100 = vld [vmem:[%s1099] sm:$0xff]
    %v1101 = vld [vmem:[%s1099 + $0x8] sm:$0xff]
    %v1102 = vld [vmem:[%s1099 + $0x10] sm:$0xff]
    %v1103 = vld [vmem:[%s1099 + $0x18] sm:$0xff]
    %v1104 = vld [vmem:[%s1099 + $0x20] sm:$0xff]
    %v1105 = vld [vmem:[%s1099 + $0x28] sm:$0xff]
    %v1106 = vld [vmem:[%s1099 + $0x30] sm:$0xff]
    %v1107 = vld [vmem:[%s1099 + $0x38] sm:$0xff]
    %v1108 = vld [vmem:[%s1099 + $0x40] sm:$0xff]
    %v1109 = vld [vmem:[%s1099 + $0x48] sm:$0xff]
    %v1110 = vld [vmem:[%s1099 + $0x50] sm:$0xf]
    %v1112 = vsel %vm303, %v1097, 0
    %v1115 = vsel %vm303, %v1098, 0
    %v1118 = vsel %vm750, %v1110, 0
    %1120 = vmatpush.msra.mxu0 0.0
    %1121 = vmatpush.msra.mxu0 0.0
    %1122 = vmatpush.msra.mxu0 0.0
    %1123 = vmatpush.msra.mxu0 0.0
    %1124 = vmatpush.msra.mxu0 0.0
    %1125 = vmatpush.msra.mxu0 %v1118
    %1126 = vmatpush.msra.mxu0 %v1109
    %1127 = vmatpush.msra.mxu0 %v1108
    %1128 = vmatpush.msra.mxu0 %v1107
    %1129 = vmatpush.msra.mxu0 %v1106
    %1130 = vmatpush.msra.mxu0 %v1105
    %1131 = vmatpush.msra.mxu0 %v1104
    %1132 = vmatpush.msra.mxu0 %v1103
    %1133 = vmatpush.msra.mxu0 %v1102
    %1134 = vmatpush.msra.mxu0 %v1101
    %1135 = vmatpush.msra.mxu0 %v1100
    %1136 = vmatmul.f32.gmra.mxu0 %v1112
    %v1137 = vpop.f32.mrf.mxu0
    %v1138 = vadd.f32 0.0, %v1137
    %1139 = vmatmul.f32.gmra.mxu0 %v1115
    %v1140 = vpop.f32.mrf.mxu0
    %v1141 = vadd.f32 0.0, %v1140
    %1142 = vdwg.mxu0
    %v1143 = vadd.f32 %v1095, %v1138
    %v1144 = vadd.f32 %v1096, %v1141
    %v1145 = vld [vmem:[#allocation3 + $0x4] sm:$0xff]
    %v1146 = vld [vmem:[#allocation3 + $0xc] sm:$0x3]
    %s1147 = scalar_lea.vmem %s3, 792
    %v1148 = vld [vmem:[%s1147] sm:$0xff]
    %v1149 = vld [vmem:[%s1147 + $0x8] sm:$0xff]
    %v1150 = vld [vmem:[%s1147 + $0x10] sm:$0xff]
    %v1151 = vld [vmem:[%s1147 + $0x18] sm:$0xff]
    %v1152 = vld [vmem:[%s1147 + $0x20] sm:$0xff]
    %v1153 = vld [vmem:[%s1147 + $0x28] sm:$0xff]
    %v1154 = vld [vmem:[%s1147 + $0x30] sm:$0xff]
    %v1155 = vld [vmem:[%s1147 + $0x38] sm:$0xff]
    %v1156 = vld [vmem:[%s1147 + $0x40] sm:$0xff]
    %v1157 = vld [vmem:[%s1147 + $0x48] sm:$0xff]
    %v1158 = vld [vmem:[%s1147 + $0x50] sm:$0xf]
    %v1160 = vsel %vm303, %v1145, 0
    %v1163 = vsel %vm303, %v1146, 0
    %v1166 = vsel %vm750, %v1158, 0
    %1168 = vmatpush.msra.mxu0 0.0
    %1169 = vmatpush.msra.mxu0 0.0
    %1170 = vmatpush.msra.mxu0 0.0
    %1171 = vmatpush.msra.mxu0 0.0
    %1172 = vmatpush.msra.mxu0 0.0
    %1173 = vmatpush.msra.mxu0 %v1166
    %1174 = vmatpush.msra.mxu0 %v1157
    %1175 = vmatpush.msra.mxu0 %v1156
    %1176 = vmatpush.msra.mxu0 %v1155
    %1177 = vmatpush.msra.mxu0 %v1154
    %1178 = vmatpush.msra.mxu0 %v1153
    %1179 = vmatpush.msra.mxu0 %v1152
    %1180 = vmatpush.msra.mxu0 %v1151
    %1181 = vmatpush.msra.mxu0 %v1150
    %1182 = vmatpush.msra.mxu0 %v1149
    %1183 = vmatpush.msra.mxu0 %v1148
    %1184 = vmatmul.f32.gmra.mxu0 %v1160
    %v1185 = vpop.f32.mrf.mxu0
    %v1186 = vadd.f32 0.0, %v1185
    %1187 = vmatmul.f32.gmra.mxu0 %v1163
    %v1188 = vpop.f32.mrf.mxu0
    %v1189 = vadd.f32 0.0, %v1188
    %1190 = vdwg.mxu0
    %v1191 = vadd.f32 %v1143, %v1186
    %v1192 = vadd.f32 %v1144, %v1189
    %s1193 = scalar_lea.vmem [#allocation4], 16
    %1194 = vst.msk [vmem:[%s1193] sm:$0xff] %vm953, %v1191
    %1195 = vst.msk [vmem:[%s1193 + $0x8] sm:$0x3] %vm955, %v1192
    %v1196 = vld [vmem:[#allocation4] sm:$0x1]
    %v1197 = vld [vmem:[#allocation4 + $0x1] sm:$0x1]
    %v1198 = vmax.f32 %v1196, %v1197
    %v1199 = vld [vmem:[%s1193] sm:$0x1]
    %v1200 = vld [vmem:[%s1193 + $0x1] sm:$0x1]
    %v1201 = vmax.f32 %v1199, %v1200
    %v1202 = vmax.f32 %v1198, %v1201
    %v1203 = vadd.f32 %v1202, %v40
    %v1204 = vmax.f32 %v1203, 0.0
    %vm1205 = vcmask 647168
    %1206 = vst.msk [vmem:[#allocation5] sm:$0x1] %vm1205, %v1204
    %v1207 = vld [vmem:[#allocation4 + $0x2] sm:$0x1]
    %v1208 = vld [vmem:[#allocation4 + $0x3] sm:$0x1]
    %v1209 = vmax.f32 %v1207, %v1208
    %v1210 = vld [vmem:[%s1193 + $0x2] sm:$0x1]
    %v1211 = vld [vmem:[%s1193 + $0x3] sm:$0x1]
    %v1212 = vmax.f32 %v1210, %v1211
    %v1213 = vmax.f32 %v1209, %v1212
    %v1214 = vadd.f32 %v1213, %v40
    %v1215 = vmax.f32 %v1214, 0.0
    %s1216 = scalar_lea.vmem [#allocation5], 2
    %1217 = vst.msk [vmem:[%s1216] sm:$0x1] %vm1205, %v1215
    %v1218 = vld [vmem:[#allocation4 + $0x4] sm:$0x1]
    %v1219 = vld [vmem:[#allocation4 + $0x5] sm:$0x1]
    %v1220 = vmax.f32 %v1218, %v1219
    %v1221 = vld [vmem:[%s1193 + $0x4] sm:$0x1]
    %v1222 = vld [vmem:[%s1193 + $0x5] sm:$0x1]
    %v1223 = vmax.f32 %v1221, %v1222
    %v1224 = vmax.f32 %v1220, %v1223
    %v1225 = vadd.f32 %v1224, %v40
    %v1226 = vmax.f32 %v1225, 0.0
    %s1227 = scalar_lea.vmem [#allocation5], 4
    %1228 = vst.msk [vmem:[%s1227] sm:$0x1] %vm1205, %v1226
    %v1229 = vld [vmem:[#allocation4 + $0x6] sm:$0x1]
    %v1230 = vld [vmem:[#allocation4 + $0x7] sm:$0x1]
    %v1231 = vmax.f32 %v1229, %v1230
    %v1232 = vld [vmem:[%s1193 + $0x6] sm:$0x1]
    %v1233 = vld [vmem:[%s1193 + $0x7] sm:$0x1]
    %v1234 = vmax.f32 %v1232, %v1233
    %v1235 = vmax.f32 %v1231, %v1234
    %v1236 = vadd.f32 %v1235, %v40
    %v1237 = vmax.f32 %v1236, 0.0
    %s1238 = scalar_lea.vmem [#allocation5], 6
    %1239 = vst.msk [vmem:[%s1238] sm:$0x1] %vm1205, %v1237
    %v1240 = vld [vmem:[#allocation4 + $0x8] sm:$0x1]
    %v1241 = vld [vmem:[#allocation4 + $0x9] sm:$0x1]
    %v1242 = vmax.f32 %v1240, %v1241
    %v1243 = vld [vmem:[%s1193 + $0x8] sm:$0x1]
    %v1244 = vld [vmem:[%s1193 + $0x9] sm:$0x1]
    %v1245 = vmax.f32 %v1243, %v1244
    %v1246 = vmax.f32 %v1242, %v1245
    %v1247 = vadd.f32 %v1246, %v40
    %v1248 = vmax.f32 %v1247, 0.0
    %s1249 = scalar_lea.vmem [#allocation5], 8
    %1250 = vst.msk [vmem:[%s1249] sm:$0x1] %vm1205, %v1248
    %s1251 = scalar_lea.vmem %s0, 32
    %v1252 = vld [vmem:[%s1251] sm:$0xff]
    %v1253 = vld [vmem:[%s1251 + $0x8] sm:$0xff]
    %v1254 = vld [vmem:[%s1251 + $0x10] sm:$0xff]
    %v1255 = vld [vmem:[%s1251 + $0x18] sm:$0xf]
    %v1256 = vld [vmem:[%s1] sm:$0xff]
    %v1257 = vld [vmem:[%s1 + $0x8] sm:$0xff]
    %v1258 = vld [vmem:[%s1 + $0x10] sm:$0xff]
    %v1259 = vld [vmem:[%s1 + $0x18] sm:$0xff]
    %v1260 = vld [vmem:[%s1251 + $0x1] sm:$0xff]
    %v1261 = vld [vmem:[%s1251 + $0x9] sm:$0xff]
    %v1262 = vld [vmem:[%s1251 + $0x11] sm:$0xff]
    %v1263 = vld [vmem:[%s1251 + $0x19] sm:$0xf]
    %v1264 = vld [vmem:[%s53] sm:$0xff]
    %v1265 = vld [vmem:[%s53 + $0x8] sm:$0xff]
    %v1266 = vld [vmem:[%s53 + $0x10] sm:$0xff]
    %v1267 = vld [vmem:[%s53 + $0x18] sm:$0xff]
    %v1269 = vsel %vm58, %v1260, 0
    %v1272 = vsel %vm58, %v1261, 0
    %v1275 = vsel %vm58, %v1262, 0
    %v1278 = vsel %vm58, %v1263, 0
    %1280 = vmatpush.msra.mxu0 0.0
    %1281 = vmatpush.msra.mxu0 0.0
    %1282 = vmatpush.msra.mxu0 0.0
    %1283 = vmatpush.msra.mxu0 0.0
    %1284 = vmatpush.msra.mxu0 0.0
    %1285 = vmatpush.msra.mxu0 0.0
    %1286 = vmatpush.msra.mxu0 0.0
    %1287 = vmatpush.msra.mxu0 0.0
    %1288 = vmatpush.msra.mxu0 0.0
    %1289 = vmatpush.msra.mxu0 0.0
    %1290 = vmatpush.msra.mxu0 0.0
    %1291 = vmatpush.msra.mxu0 0.0
    %1292 = vmatpush.msra.mxu0 %v1267
    %1293 = vmatpush.msra.mxu0 %v1266
    %1294 = vmatpush.msra.mxu0 %v1265
    %1295 = vmatpush.msra.mxu0 %v1264
    %1296 = vmatmul.f32.gmra.mxu0 %v1269
    %v1297 = vpop.f32.mrf.mxu0
    %v1298 = vadd.f32 0.0, %v1297
    %1299 = vmatmul.f32.gmra.mxu0 %v1272
    %v1300 = vpop.f32.mrf.mxu0
    %v1301 = vadd.f32 0.0, %v1300
    %1302 = vmatmul.f32.gmra.mxu0 %v1275
    %v1303 = vpop.f32.mrf.mxu0
    %v1304 = vadd.f32 0.0, %v1303
    %1305 = vmatmul.f32.gmra.mxu0 %v1278
    %v1306 = vpop.f32.mrf.mxu0
    %v1307 = vadd.f32 0.0, %v1306
    %1308 = vdwg.mxu0
    %v1310 = vsel %vm58, %v1252, 0
    %v1313 = vsel %vm58, %v1253, 0
    %v1316 = vsel %vm58, %v1254, 0
    %v1319 = vsel %vm58, %v1255, 0
    %1321 = vmatpush.msra.mxu0 0.0
    %1322 = vmatpush.msra.mxu0 0.0
    %1323 = vmatpush.msra.mxu0 0.0
    %1324 = vmatpush.msra.mxu0 0.0
    %1325 = vmatpush.msra.mxu0 0.0
    %1326 = vmatpush.msra.mxu0 0.0
    %1327 = vmatpush.msra.mxu0 0.0
    %1328 = vmatpush.msra.mxu0 0.0
    %1329 = vmatpush.msra.mxu0 0.0
    %1330 = vmatpush.msra.mxu0 0.0
    %1331 = vmatpush.msra.mxu0 0.0
    %1332 = vmatpush.msra.mxu0 0.0
    %1333 = vmatpush.msra.mxu0 %v1259
    %1334 = vmatpush.msra.mxu0 %v1258
    %1335 = vmatpush.msra.mxu0 %v1257
    %1336 = vmatpush.msra.mxu0 %v1256
    %1337 = vmatmul.f32.gmra.mxu0 %v1310
    %v1338 = vpop.f32.mrf.mxu0
    %v1339 = vadd.f32 %v1298, %v1338
    %1340 = vmatmul.f32.gmra.mxu0 %v1313
    %v1341 = vpop.f32.mrf.mxu0
    %v1342 = vadd.f32 %v1301, %v1341
    %1343 = vmatmul.f32.gmra.mxu0 %v1316
    %v1344 = vpop.f32.mrf.mxu0
    %v1345 = vadd.f32 %v1304, %v1344
    %1346 = vmatmul.f32.gmra.mxu0 %v1319
    %v1347 = vpop.f32.mrf.mxu0
    %v1348 = vadd.f32 %v1307, %v1347
    %1349 = vdwg.mxu0
    %v1350 = vld [vmem:[%s1251 + $0x2] sm:$0xff]
    %v1351 = vld [vmem:[%s1251 + $0xa] sm:$0xff]
    %v1352 = vld [vmem:[%s1251 + $0x12] sm:$0xff]
    %v1353 = vld [vmem:[%s1251 + $0x1a] sm:$0xf]
    %v1354 = vld [vmem:[%s145] sm:$0xff]
    %v1355 = vld [vmem:[%s145 + $0x8] sm:$0xff]
    %v1356 = vld [vmem:[%s145 + $0x10] sm:$0xff]
    %v1357 = vld [vmem:[%s145 + $0x18] sm:$0xff]
    %v1359 = vsel %vm58, %v1350, 0
    %v1362 = vsel %vm58, %v1351, 0
    %v1365 = vsel %vm58, %v1352, 0
    %v1368 = vsel %vm58, %v1353, 0
    %1370 = vmatpush.msra.mxu0 0.0
    %1371 = vmatpush.msra.mxu0 0.0
    %1372 = vmatpush.msra.mxu0 0.0
    %1373 = vmatpush.msra.mxu0 0.0
    %1374 = vmatpush.msra.mxu0 0.0
    %1375 = vmatpush.msra.mxu0 0.0
    %1376 = vmatpush.msra.mxu0 0.0
    %1377 = vmatpush.msra.mxu0 0.0
    %1378 = vmatpush.msra.mxu0 0.0
    %1379 = vmatpush.msra.mxu0 0.0
    %1380 = vmatpush.msra.mxu0 0.0
    %1381 = vmatpush.msra.mxu0 0.0
    %1382 = vmatpush.msra.mxu0 %v1357
    %1383 = vmatpush.msra.mxu0 %v1356
    %1384 = vmatpush.msra.mxu0 %v1355
    %1385 = vmatpush.msra.mxu0 %v1354
    %1386 = vmatmul.f32.gmra.mxu0 %v1359
    %v1387 = vpop.f32.mrf.mxu0
    %v1388 = vadd.f32 0.0, %v1387
    %1389 = vmatmul.f32.gmra.mxu0 %v1362
    %v1390 = vpop.f32.mrf.mxu0
    %v1391 = vadd.f32 0.0, %v1390
    %1392 = vmatmul.f32.gmra.mxu0 %v1365
    %v1393 = vpop.f32.mrf.mxu0
    %v1394 = vadd.f32 0.0, %v1393
    %1395 = vmatmul.f32.gmra.mxu0 %v1368
    %v1396 = vpop.f32.mrf.mxu0
    %v1397 = vadd.f32 0.0, %v1396
    %1398 = vdwg.mxu0
    %v1399 = vadd.f32 %v1339, %v1388
    %v1400 = vadd.f32 %v1342, %v1391
    %v1401 = vadd.f32 %v1345, %v1394
    %v1402 = vadd.f32 %v1348, %v1397
    %v1403 = vld [vmem:[%s1251 + $0x3] sm:$0xff]
    %v1404 = vld [vmem:[%s1251 + $0xb] sm:$0xff]
    %v1405 = vld [vmem:[%s1251 + $0x13] sm:$0xff]
    %v1406 = vld [vmem:[%s1251 + $0x1b] sm:$0xf]
    %v1407 = vld [vmem:[%s199] sm:$0xff]
    %v1408 = vld [vmem:[%s199 + $0x8] sm:$0xff]
    %v1409 = vld [vmem:[%s199 + $0x10] sm:$0xff]
    %v1410 = vld [vmem:[%s199 + $0x18] sm:$0xff]
    %v1412 = vsel %vm58, %v1403, 0
    %v1415 = vsel %vm58, %v1404, 0
    %v1418 = vsel %vm58, %v1405, 0
    %v1421 = vsel %vm58, %v1406, 0
    %1423 = vmatpush.msra.mxu0 0.0
    %1424 = vmatpush.msra.mxu0 0.0
    %1425 = vmatpush.msra.mxu0 0.0
    %1426 = vmatpush.msra.mxu0 0.0
    %1427 = vmatpush.msra.mxu0 0.0
    %1428 = vmatpush.msra.mxu0 0.0
    %1429 = vmatpush.msra.mxu0 0.0
    %1430 = vmatpush.msra.mxu0 0.0
    %1431 = vmatpush.msra.mxu0 0.0
    %1432 = vmatpush.msra.mxu0 0.0
    %1433 = vmatpush.msra.mxu0 0.0
    %1434 = vmatpush.msra.mxu0 0.0
    %1435 = vmatpush.msra.mxu0 %v1410
    %1436 = vmatpush.msra.mxu0 %v1409
    %1437 = vmatpush.msra.mxu0 %v1408
    %1438 = vmatpush.msra.mxu0 %v1407
    %1439 = vmatmul.f32.gmra.mxu0 %v1412
    %v1440 = vpop.f32.mrf.mxu0
    %v1441 = vadd.f32 0.0, %v1440
    %1442 = vmatmul.f32.gmra.mxu0 %v1415
    %v1443 = vpop.f32.mrf.mxu0
    %v1444 = vadd.f32 0.0, %v1443
    %1445 = vmatmul.f32.gmra.mxu0 %v1418
    %v1446 = vpop.f32.mrf.mxu0
    %v1447 = vadd.f32 0.0, %v1446
    %1448 = vmatmul.f32.gmra.mxu0 %v1421
    %v1449 = vpop.f32.mrf.mxu0
    %v1450 = vadd.f32 0.0, %v1449
    %1451 = vdwg.mxu0
    %v1452 = vadd.f32 %v1399, %v1441
    %v1453 = vadd.f32 %v1400, %v1444
    %v1454 = vadd.f32 %v1401, %v1447
    %v1455 = vadd.f32 %v1402, %v1450
    %v1456 = vld [vmem:[%s1251 + $0x4] sm:$0xff]
    %v1457 = vld [vmem:[%s1251 + $0xc] sm:$0xff]
    %v1458 = vld [vmem:[%s1251 + $0x14] sm:$0xff]
    %v1459 = vld [vmem:[%s1251 + $0x1c] sm:$0xf]
    %v1460 = vld [vmem:[%s253] sm:$0xff]
    %v1461 = vld [vmem:[%s253 + $0x8] sm:$0xff]
    %v1462 = vld [vmem:[%s253 + $0x10] sm:$0xff]
    %v1463 = vld [vmem:[%s253 + $0x18] sm:$0xff]
    %v1465 = vsel %vm58, %v1456, 0
    %v1468 = vsel %vm58, %v1457, 0
    %v1471 = vsel %vm58, %v1458, 0
    %v1474 = vsel %vm58, %v1459, 0
    %1476 = vmatpush.msra.mxu0 0.0
    %1477 = vmatpush.msra.mxu0 0.0
    %1478 = vmatpush.msra.mxu0 0.0
    %1479 = vmatpush.msra.mxu0 0.0
    %1480 = vmatpush.msra.mxu0 0.0
    %1481 = vmatpush.msra.mxu0 0.0
    %1482 = vmatpush.msra.mxu0 0.0
    %1483 = vmatpush.msra.mxu0 0.0
    %1484 = vmatpush.msra.mxu0 0.0
    %1485 = vmatpush.msra.mxu0 0.0
    %1486 = vmatpush.msra.mxu0 0.0
    %1487 = vmatpush.msra.mxu0 0.0
    %1488 = vmatpush.msra.mxu0 %v1463
    %1489 = vmatpush.msra.mxu0 %v1462
    %1490 = vmatpush.msra.mxu0 %v1461
    %1491 = vmatpush.msra.mxu0 %v1460
    %1492 = vmatmul.f32.gmra.mxu0 %v1465
    %v1493 = vpop.f32.mrf.mxu0
    %v1494 = vadd.f32 0.0, %v1493
    %1495 = vmatmul.f32.gmra.mxu0 %v1468
    %v1496 = vpop.f32.mrf.mxu0
    %v1497 = vadd.f32 0.0, %v1496
    %1498 = vmatmul.f32.gmra.mxu0 %v1471
    %v1499 = vpop.f32.mrf.mxu0
    %v1500 = vadd.f32 0.0, %v1499
    %1501 = vmatmul.f32.gmra.mxu0 %v1474
    %v1502 = vpop.f32.mrf.mxu0
    %v1503 = vadd.f32 0.0, %v1502
    %1504 = vdwg.mxu0
    %v1505 = vadd.f32 %v1452, %v1494
    %v1506 = vadd.f32 %v1453, %v1497
    %v1507 = vadd.f32 %v1454, %v1500
    %v1508 = vadd.f32 %v1455, %v1503
    %1509 = vst.msk [vmem:[#allocation2] sm:$0xff] %vm303, %v1505
    %1510 = vst.msk [vmem:[#allocation2 + $0x8] sm:$0xff] %vm303, %v1506
    %1511 = vst.msk [vmem:[#allocation2 + $0x10] sm:$0xff] %vm303, %v1507
    %1512 = vst.msk [vmem:[#allocation2 + $0x18] sm:$0xf] %vm307, %v1508
    %v1513 = vld [vmem:[%s1251] sm:$0xff]
    %v1514 = vld [vmem:[%s1251 + $0x8] sm:$0xff]
    %v1515 = vld [vmem:[%s1251 + $0x10] sm:$0xff]
    %v1516 = vld [vmem:[%s1251 + $0x18] sm:$0xf]
    %v1517 = vld [vmem:[%s313] sm:$0xff]
    %v1518 = vld [vmem:[%s313 + $0x8] sm:$0xff]
    %v1519 = vld [vmem:[%s313 + $0x10] sm:$0xff]
    %v1520 = vld [vmem:[%s313 + $0x18] sm:$0xff]
    %v1521 = vld [vmem:[%s1251 + $0x1] sm:$0xff]
    %v1522 = vld [vmem:[%s1251 + $0x9] sm:$0xff]
    %v1523 = vld [vmem:[%s1251 + $0x11] sm:$0xff]
    %v1524 = vld [vmem:[%s1251 + $0x19] sm:$0xf]
    %v1525 = vld [vmem:[%s322] sm:$0xff]
    %v1526 = vld [vmem:[%s322 + $0x8] sm:$0xff]
    %v1527 = vld [vmem:[%s322 + $0x10] sm:$0xff]
    %v1528 = vld [vmem:[%s322 + $0x18] sm:$0xff]
    %v1530 = vsel %vm58, %v1521, 0
    %v1533 = vsel %vm58, %v1522, 0
    %v1536 = vsel %vm58, %v1523, 0
    %v1539 = vsel %vm58, %v1524, 0
    %1541 = vmatpush.msra.mxu0 0.0
    %1542 = vmatpush.msra.mxu0 0.0
    %1543 = vmatpush.msra.mxu0 0.0
    %1544 = vmatpush.msra.mxu0 0.0
    %1545 = vmatpush.msra.mxu0 0.0
    %1546 = vmatpush.msra.mxu0 0.0
    %1547 = vmatpush.msra.mxu0 0.0
    %1548 = vmatpush.msra.mxu0 0.0
    %1549 = vmatpush.msra.mxu0 0.0
    %1550 = vmatpush.msra.mxu0 0.0
    %1551 = vmatpush.msra.mxu0 0.0
    %1552 = vmatpush.msra.mxu0 0.0
    %1553 = vmatpush.msra.mxu0 %v1528
    %1554 = vmatpush.msra.mxu0 %v1527
    %1555 = vmatpush.msra.mxu0 %v1526
    %1556 = vmatpush.msra.mxu0 %v1525
    %1557 = vmatmul.f32.gmra.mxu0 %v1530
    %v1558 = vpop.f32.mrf.mxu0
    %v1559 = vadd.f32 0.0, %v1558
    %1560 = vmatmul.f32.gmra.mxu0 %v1533
    %v1561 = vpop.f32.mrf.mxu0
    %v1562 = vadd.f32 0.0, %v1561
    %1563 = vmatmul.f32.gmra.mxu0 %v1536
    %v1564 = vpop.f32.mrf.mxu0
    %v1565 = vadd.f32 0.0, %v1564
    %1566 = vmatmul.f32.gmra.mxu0 %v1539
    %v1567 = vpop.f32.mrf.mxu0
    %v1568 = vadd.f32 0.0, %v1567
    %1569 = vdwg.mxu0
    %v1571 = vsel %vm58, %v1513, 0
    %v1574 = vsel %vm58, %v1514, 0
    %v1577 = vsel %vm58, %v1515, 0
    %v1580 = vsel %vm58, %v1516, 0
    %1582 = vmatpush.msra.mxu0 0.0
    %1583 = vmatpush.msra.mxu0 0.0
    %1584 = vmatpush.msra.mxu0 0.0
    %1585 = vmatpush.msra.mxu0 0.0
    %1586 = vmatpush.msra.mxu0 0.0
    %1587 = vmatpush.msra.mxu0 0.0
    %1588 = vmatpush.msra.mxu0 0.0
    %1589 = vmatpush.msra.mxu0 0.0
    %1590 = vmatpush.msra.mxu0 0.0
    %1591 = vmatpush.msra.mxu0 0.0
    %1592 = vmatpush.msra.mxu0 0.0
    %1593 = vmatpush.msra.mxu0 0.0
    %1594 = vmatpush.msra.mxu0 %v1520
    %1595 = vmatpush.msra.mxu0 %v1519
    %1596 = vmatpush.msra.mxu0 %v1518
    %1597 = vmatpush.msra.mxu0 %v1517
    %1598 = vmatmul.f32.gmra.mxu0 %v1571
    %v1599 = vpop.f32.mrf.mxu0
    %v1600 = vadd.f32 %v1559, %v1599
    %1601 = vmatmul.f32.gmra.mxu0 %v1574
    %v1602 = vpop.f32.mrf.mxu0
    %v1603 = vadd.f32 %v1562, %v1602
    %1604 = vmatmul.f32.gmra.mxu0 %v1577
    %v1605 = vpop.f32.mrf.mxu0
    %v1606 = vadd.f32 %v1565, %v1605
    %1607 = vmatmul.f32.gmra.mxu0 %v1580
    %v1608 = vpop.f32.mrf.mxu0
    %v1609 = vadd.f32 %v1568, %v1608
    %1610 = vdwg.mxu0
    %v1611 = vld [vmem:[%s1251 + $0x2] sm:$0xff]
    %v1612 = vld [vmem:[%s1251 + $0xa] sm:$0xff]
    %v1613 = vld [vmem:[%s1251 + $0x12] sm:$0xff]
    %v1614 = vld [vmem:[%s1251 + $0x1a] sm:$0xf]
    %v1615 = vld [vmem:[%s413] sm:$0xff]
    %v1616 = vld [vmem:[%s413 + $0x8] sm:$0xff]
    %v1617 = vld [vmem:[%s413 + $0x10] sm:$0xff]
    %v1618 = vld [vmem:[%s413 + $0x18] sm:$0xff]
    %v1620 = vsel %vm58, %v1611, 0
    %v1623 = vsel %vm58, %v1612, 0
    %v1626 = vsel %vm58, %v1613, 0
    %v1629 = vsel %vm58, %v1614, 0
    %1631 = vmatpush.msra.mxu0 0.0
    %1632 = vmatpush.msra.mxu0 0.0
    %1633 = vmatpush.msra.mxu0 0.0
    %1634 = vmatpush.msra.mxu0 0.0
    %1635 = vmatpush.msra.mxu0 0.0
    %1636 = vmatpush.msra.mxu0 0.0
    %1637 = vmatpush.msra.mxu0 0.0
    %1638 = vmatpush.msra.mxu0 0.0
    %1639 = vmatpush.msra.mxu0 0.0
    %1640 = vmatpush.msra.mxu0 0.0
    %1641 = vmatpush.msra.mxu0 0.0
    %1642 = vmatpush.msra.mxu0 0.0
    %1643 = vmatpush.msra.mxu0 %v1618
    %1644 = vmatpush.msra.mxu0 %v1617
    %1645 = vmatpush.msra.mxu0 %v1616
    %1646 = vmatpush.msra.mxu0 %v1615
    %1647 = vmatmul.f32.gmra.mxu0 %v1620
    %v1648 = vpop.f32.mrf.mxu0
    %v1649 = vadd.f32 0.0, %v1648
    %1650 = vmatmul.f32.gmra.mxu0 %v1623
    %v1651 = vpop.f32.mrf.mxu0
    %v1652 = vadd.f32 0.0, %v1651
    %1653 = vmatmul.f32.gmra.mxu0 %v1626
    %v1654 = vpop.f32.mrf.mxu0
    %v1655 = vadd.f32 0.0, %v1654
    %1656 = vmatmul.f32.gmra.mxu0 %v1629
    %v1657 = vpop.f32.mrf.mxu0
    %v1658 = vadd.f32 0.0, %v1657
    %1659 = vdwg.mxu0
    %v1660 = vadd.f32 %v1600, %v1649
    %v1661 = vadd.f32 %v1603, %v1652
    %v1662 = vadd.f32 %v1606, %v1655
    %v1663 = vadd.f32 %v1609, %v1658
    %v1664 = vld [vmem:[%s1251 + $0x3] sm:$0xff]
    %v1665 = vld [vmem:[%s1251 + $0xb] sm:$0xff]
    %v1666 = vld [vmem:[%s1251 + $0x13] sm:$0xff]
    %v1667 = vld [vmem:[%s1251 + $0x1b] sm:$0xf]
    %v1668 = vld [vmem:[%s467] sm:$0xff]
    %v1669 = vld [vmem:[%s467 + $0x8] sm:$0xff]
    %v1670 = vld [vmem:[%s467 + $0x10] sm:$0xff]
    %v1671 = vld [vmem:[%s467 + $0x18] sm:$0xff]
    %v1673 = vsel %vm58, %v1664, 0
    %v1676 = vsel %vm58, %v1665, 0
    %v1679 = vsel %vm58, %v1666, 0
    %v1682 = vsel %vm58, %v1667, 0
    %1684 = vmatpush.msra.mxu0 0.0
    %1685 = vmatpush.msra.mxu0 0.0
    %1686 = vmatpush.msra.mxu0 0.0
    %1687 = vmatpush.msra.mxu0 0.0
    %1688 = vmatpush.msra.mxu0 0.0
    %1689 = vmatpush.msra.mxu0 0.0
    %1690 = vmatpush.msra.mxu0 0.0
    %1691 = vmatpush.msra.mxu0 0.0
    %1692 = vmatpush.msra.mxu0 0.0
    %1693 = vmatpush.msra.mxu0 0.0
    %1694 = vmatpush.msra.mxu0 0.0
    %1695 = vmatpush.msra.mxu0 0.0
    %1696 = vmatpush.msra.mxu0 %v1671
    %1697 = vmatpush.msra.mxu0 %v1670
    %1698 = vmatpush.msra.mxu0 %v1669
    %1699 = vmatpush.msra.mxu0 %v1668
    %1700 = vmatmul.f32.gmra.mxu0 %v1673
    %v1701 = vpop.f32.mrf.mxu0
    %v1702 = vadd.f32 0.0, %v1701
    %1703 = vmatmul.f32.gmra.mxu0 %v1676
    %v1704 = vpop.f32.mrf.mxu0
    %v1705 = vadd.f32 0.0, %v1704
    %1706 = vmatmul.f32.gmra.mxu0 %v1679
    %v1707 = vpop.f32.mrf.mxu0
    %v1708 = vadd.f32 0.0, %v1707
    %1709 = vmatmul.f32.gmra.mxu0 %v1682
    %v1710 = vpop.f32.mrf.mxu0
    %v1711 = vadd.f32 0.0, %v1710
    %1712 = vdwg.mxu0
    %v1713 = vadd.f32 %v1660, %v1702
    %v1714 = vadd.f32 %v1661, %v1705
    %v1715 = vadd.f32 %v1662, %v1708
    %v1716 = vadd.f32 %v1663, %v1711
    %v1717 = vld [vmem:[%s1251 + $0x4] sm:$0xff]
    %v1718 = vld [vmem:[%s1251 + $0xc] sm:$0xff]
    %v1719 = vld [vmem:[%s1251 + $0x14] sm:$0xff]
    %v1720 = vld [vmem:[%s1251 + $0x1c] sm:$0xf]
    %v1721 = vld [vmem:[%s521] sm:$0xff]
    %v1722 = vld [vmem:[%s521 + $0x8] sm:$0xff]
    %v1723 = vld [vmem:[%s521 + $0x10] sm:$0xff]
    %v1724 = vld [vmem:[%s521 + $0x18] sm:$0xff]
    %v1726 = vsel %vm58, %v1717, 0
    %v1729 = vsel %vm58, %v1718, 0
    %v1732 = vsel %vm58, %v1719, 0
    %v1735 = vsel %vm58, %v1720, 0
    %1737 = vmatpush.msra.mxu0 0.0
    %1738 = vmatpush.msra.mxu0 0.0
    %1739 = vmatpush.msra.mxu0 0.0
    %1740 = vmatpush.msra.mxu0 0.0
    %1741 = vmatpush.msra.mxu0 0.0
    %1742 = vmatpush.msra.mxu0 0.0
    %1743 = vmatpush.msra.mxu0 0.0
    %1744 = vmatpush.msra.mxu0 0.0
    %1745 = vmatpush.msra.mxu0 0.0
    %1746 = vmatpush.msra.mxu0 0.0
    %1747 = vmatpush.msra.mxu0 0.0
    %1748 = vmatpush.msra.mxu0 0.0
    %1749 = vmatpush.msra.mxu0 %v1724
    %1750 = vmatpush.msra.mxu0 %v1723
    %1751 = vmatpush.msra.mxu0 %v1722
    %1752 = vmatpush.msra.mxu0 %v1721
    %1753 = vmatmul.f32.gmra.mxu0 %v1726
    %v1754 = vpop.f32.mrf.mxu0
    %v1755 = vadd.f32 0.0, %v1754
    %1756 = vmatmul.f32.gmra.mxu0 %v1729
    %v1757 = vpop.f32.mrf.mxu0
    %v1758 = vadd.f32 0.0, %v1757
    %1759 = vmatmul.f32.gmra.mxu0 %v1732
    %v1760 = vpop.f32.mrf.mxu0
    %v1761 = vadd.f32 0.0, %v1760
    %1762 = vmatmul.f32.gmra.mxu0 %v1735
    %v1763 = vpop.f32.mrf.mxu0
    %v1764 = vadd.f32 0.0, %v1763
    %1765 = vdwg.mxu0
    %v1766 = vadd.f32 %v1713, %v1755
    %v1767 = vadd.f32 %v1714, %v1758
    %v1768 = vadd.f32 %v1715, %v1761
    %v1769 = vadd.f32 %v1716, %v1764
    %1770 = vst.msk [vmem:[%s571] sm:$0xff] %vm303, %v1766
    %1771 = vst.msk [vmem:[%s571 + $0x8] sm:$0xff] %vm303, %v1767
    %1772 = vst.msk [vmem:[%s571 + $0x10] sm:$0xff] %vm303, %v1768
    %1773 = vst.msk [vmem:[%s571 + $0x18] sm:$0xf] %vm307, %v1769
    %v1774 = vld [vmem:[#allocation2] sm:$0x1]
    %v1775 = vld [vmem:[#allocation2 + $0x1] sm:$0x1]
    %v1776 = vmax.f32 %v1774, %v1775
    %v1777 = vld [vmem:[%s571] sm:$0x1]
    %v1778 = vld [vmem:[%s571 + $0x1] sm:$0x1]
    %v1779 = vmax.f32 %v1777, %v1778
    %v1780 = vmax.f32 %v1776, %v1779
    %v1781 = vadd.f32 %v1780, %v39
    %v1782 = vmax.f32 %v1781, 0.0
    %1783 = vst.msk [vmem:[#allocation3] sm:$0x1] %vm585, %v1782
    %v1784 = vld [vmem:[#allocation2 + $0x2] sm:$0x1]
    %v1785 = vld [vmem:[#allocation2 + $0x3] sm:$0x1]
    %v1786 = vmax.f32 %v1784, %v1785
    %v1787 = vld [vmem:[%s571 + $0x2] sm:$0x1]
    %v1788 = vld [vmem:[%s571 + $0x3] sm:$0x1]
    %v1789 = vmax.f32 %v1787, %v1788
    %v1790 = vmax.f32 %v1786, %v1789
    %v1791 = vadd.f32 %v1790, %v39
    %v1792 = vmax.f32 %v1791, 0.0
    %1793 = vst.msk [vmem:[#allocation3 + $0x1] sm:$0x1] %vm585, %v1792
    %v1794 = vld [vmem:[#allocation2 + $0x4] sm:$0x1]
    %v1795 = vld [vmem:[#allocation2 + $0x5] sm:$0x1]
    %v1796 = vmax.f32 %v1794, %v1795
    %v1797 = vld [vmem:[%s571 + $0x4] sm:$0x1]
    %v1798 = vld [vmem:[%s571 + $0x5] sm:$0x1]
    %v1799 = vmax.f32 %v1797, %v1798
    %v1800 = vmax.f32 %v1796, %v1799
    %v1801 = vadd.f32 %v1800, %v39
    %v1802 = vmax.f32 %v1801, 0.0
    %1803 = vst.msk [vmem:[#allocation3 + $0x2] sm:$0x1] %vm585, %v1802
    %v1804 = vld [vmem:[#allocation2 + $0x6] sm:$0x1]
    %v1805 = vld [vmem:[#allocation2 + $0x7] sm:$0x1]
    %v1806 = vmax.f32 %v1804, %v1805
    %v1807 = vld [vmem:[%s571 + $0x6] sm:$0x1]
    %v1808 = vld [vmem:[%s571 + $0x7] sm:$0x1]
    %v1809 = vmax.f32 %v1807, %v1808
    %v1810 = vmax.f32 %v1806, %v1809
    %v1811 = vadd.f32 %v1810, %v39
    %v1812 = vmax.f32 %v1811, 0.0
    %1813 = vst.msk [vmem:[#allocation3 + $0x3] sm:$0x1] %vm585, %v1812
    %v1814 = vld [vmem:[#allocation2 + $0x8] sm:$0x1]
    %v1815 = vld [vmem:[#allocation2 + $0x9] sm:$0x1]
    %v1816 = vmax.f32 %v1814, %v1815
    %v1817 = vld [vmem:[%s571 + $0x8] sm:$0x1]
    %v1818 = vld [vmem:[%s571 + $0x9] sm:$0x1]
    %v1819 = vmax.f32 %v1817, %v1818
    %v1820 = vmax.f32 %v1816, %v1819
    %v1821 = vadd.f32 %v1820, %v39
    %v1822 = vmax.f32 %v1821, 0.0
    %1823 = vst.msk [vmem:[#allocation3 + $0x4] sm:$0x1] %vm585, %v1822
    %v1824 = vld [vmem:[#allocation2 + $0xa] sm:$0x1]
    %v1825 = vld [vmem:[#allocation2 + $0xb] sm:$0x1]
    %v1826 = vmax.f32 %v1824, %v1825
    %v1827 = vld [vmem:[%s571 + $0xa] sm:$0x1]
    %v1828 = vld [vmem:[%s571 + $0xb] sm:$0x1]
    %v1829 = vmax.f32 %v1827, %v1828
    %v1830 = vmax.f32 %v1826, %v1829
    %v1831 = vadd.f32 %v1830, %v39
    %v1832 = vmax.f32 %v1831, 0.0
    %1833 = vst.msk [vmem:[#allocation3 + $0x5] sm:$0x1] %vm585, %v1832
    %v1834 = vld [vmem:[#allocation2 + $0xc] sm:$0x1]
    %v1835 = vld [vmem:[#allocation2 + $0xd] sm:$0x1]
    %v1836 = vmax.f32 %v1834, %v1835
    %v1837 = vld [vmem:[%s571 + $0xc] sm:$0x1]
    %v1838 = vld [vmem:[%s571 + $0xd] sm:$0x1]
    %v1839 = vmax.f32 %v1837, %v1838
    %v1840 = vmax.f32 %v1836, %v1839
    %v1841 = vadd.f32 %v1840, %v39
    %v1842 = vmax.f32 %v1841, 0.0
    %1843 = vst.msk [vmem:[#allocation3 + $0x6] sm:$0x1] %vm585, %v1842
    %v1844 = vld [vmem:[#allocation2 + $0xe] sm:$0x1]
    %v1845 = vld [vmem:[#allocation2 + $0xf] sm:$0x1]
    %v1846 = vmax.f32 %v1844, %v1845
    %v1847 = vld [vmem:[%s571 + $0xe] sm:$0x1]
    %v1848 = vld [vmem:[%s571 + $0xf] sm:$0x1]
    %v1849 = vmax.f32 %v1847, %v1848
    %v1850 = vmax.f32 %v1846, %v1849
    %v1851 = vadd.f32 %v1850, %v39
    %v1852 = vmax.f32 %v1851, 0.0
    %1853 = vst.msk [vmem:[#allocation3 + $0x7] sm:$0x1] %vm585, %v1852
    %v1854 = vld [vmem:[#allocation2 + $0x10] sm:$0x1]
    %v1855 = vld [vmem:[#allocation2 + $0x11] sm:$0x1]
    %v1856 = vmax.f32 %v1854, %v1855
    %v1857 = vld [vmem:[%s571 + $0x10] sm:$0x1]
    %v1858 = vld [vmem:[%s571 + $0x11] sm:$0x1]
    %v1859 = vmax.f32 %v1857, %v1858
    %v1860 = vmax.f32 %v1856, %v1859
    %v1861 = vadd.f32 %v1860, %v39
    %v1862 = vmax.f32 %v1861, 0.0
    %1863 = vst.msk [vmem:[#allocation3 + $0x8] sm:$0x1] %vm585, %v1862
    %v1864 = vld [vmem:[#allocation2 + $0x12] sm:$0x1]
    %v1865 = vld [vmem:[#allocation2 + $0x13] sm:$0x1]
    %v1866 = vmax.f32 %v1864, %v1865
    %v1867 = vld [vmem:[%s571 + $0x12] sm:$0x1]
    %v1868 = vld [vmem:[%s571 + $0x13] sm:$0x1]
    %v1869 = vmax.f32 %v1867, %v1868
    %v1870 = vmax.f32 %v1866, %v1869
    %v1871 = vadd.f32 %v1870, %v39
    %v1872 = vmax.f32 %v1871, 0.0
    %1873 = vst.msk [vmem:[#allocation3 + $0x9] sm:$0x1] %vm585, %v1872
    %v1874 = vld [vmem:[#allocation2 + $0x14] sm:$0x1]
    %v1875 = vld [vmem:[#allocation2 + $0x15] sm:$0x1]
    %v1876 = vmax.f32 %v1874, %v1875
    %v1877 = vld [vmem:[%s571 + $0x14] sm:$0x1]
    %v1878 = vld [vmem:[%s571 + $0x15] sm:$0x1]
    %v1879 = vmax.f32 %v1877, %v1878
    %v1880 = vmax.f32 %v1876, %v1879
    %v1881 = vadd.f32 %v1880, %v39
    %v1882 = vmax.f32 %v1881, 0.0
    %1883 = vst.msk [vmem:[#allocation3 + $0xa] sm:$0x1] %vm585, %v1882
    %v1884 = vld [vmem:[#allocation2 + $0x16] sm:$0x1]
    %v1885 = vld [vmem:[#allocation2 + $0x17] sm:$0x1]
    %v1886 = vmax.f32 %v1884, %v1885
    %v1887 = vld [vmem:[%s571 + $0x16] sm:$0x1]
    %v1888 = vld [vmem:[%s571 + $0x17] sm:$0x1]
    %v1889 = vmax.f32 %v1887, %v1888
    %v1890 = vmax.f32 %v1886, %v1889
    %v1891 = vadd.f32 %v1890, %v39
    %v1892 = vmax.f32 %v1891, 0.0
    %1893 = vst.msk [vmem:[#allocation3 + $0xb] sm:$0x1] %vm585, %v1892
    %v1894 = vld [vmem:[#allocation2 + $0x18] sm:$0x1]
    %v1895 = vld [vmem:[#allocation2 + $0x19] sm:$0x1]
    %v1896 = vmax.f32 %v1894, %v1895
    %v1897 = vld [vmem:[%s571 + $0x18] sm:$0x1]
    %v1898 = vld [vmem:[%s571 + $0x19] sm:$0x1]
    %v1899 = vmax.f32 %v1897, %v1898
    %v1900 = vmax.f32 %v1896, %v1899
    %v1901 = vadd.f32 %v1900, %v39
    %v1902 = vmax.f32 %v1901, 0.0
    %1903 = vst.msk [vmem:[#allocation3 + $0xc] sm:$0x1] %vm585, %v1902
    %v1904 = vld [vmem:[#allocation2 + $0x1a] sm:$0x1]
    %v1905 = vld [vmem:[#allocation2 + $0x1b] sm:$0x1]
    %v1906 = vmax.f32 %v1904, %v1905
    %v1907 = vld [vmem:[%s571 + $0x1a] sm:$0x1]
    %v1908 = vld [vmem:[%s571 + $0x1b] sm:$0x1]
    %v1909 = vmax.f32 %v1907, %v1908
    %v1910 = vmax.f32 %v1906, %v1909
    %v1911 = vadd.f32 %v1910, %v39
    %v1912 = vmax.f32 %v1911, 0.0
    %1913 = vst.msk [vmem:[#allocation3 + $0xd] sm:$0x1] %vm585, %v1912
    %v1914 = vld [vmem:[#allocation3] sm:$0xff]
    %v1915 = vld [vmem:[#allocation3 + $0x8] sm:$0x3]
    %v1916 = vld [vmem:[%s3] sm:$0xff]
    %v1917 = vld [vmem:[%s3 + $0x8] sm:$0xff]
    %v1918 = vld [vmem:[%s3 + $0x10] sm:$0xff]
    %v1919 = vld [vmem:[%s3 + $0x18] sm:$0xff]
    %v1920 = vld [vmem:[%s3 + $0x20] sm:$0xff]
    %v1921 = vld [vmem:[%s3 + $0x28] sm:$0xff]
    %v1922 = vld [vmem:[%s3 + $0x30] sm:$0xff]
    %v1923 = vld [vmem:[%s3 + $0x38] sm:$0xff]
    %v1924 = vld [vmem:[%s3 + $0x40] sm:$0xff]
    %v1925 = vld [vmem:[%s3 + $0x48] sm:$0xff]
    %v1926 = vld [vmem:[%s3 + $0x50] sm:$0xf]
    %v1927 = vld [vmem:[#allocation3 + $0x1] sm:$0xff]
    %v1928 = vld [vmem:[#allocation3 + $0x9] sm:$0x3]
    %v1929 = vld [vmem:[%s732] sm:$0xff]
    %v1930 = vld [vmem:[%s732 + $0x8] sm:$0xff]
    %v1931 = vld [vmem:[%s732 + $0x10] sm:$0xff]
    %v1932 = vld [vmem:[%s732 + $0x18] sm:$0xff]
    %v1933 = vld [vmem:[%s732 + $0x20] sm:$0xff]
    %v1934 = vld [vmem:[%s732 + $0x28] sm:$0xff]
    %v1935 = vld [vmem:[%s732 + $0x30] sm:$0xff]
    %v1936 = vld [vmem:[%s732 + $0x38] sm:$0xff]
    %v1937 = vld [vmem:[%s732 + $0x40] sm:$0xff]
    %v1938 = vld [vmem:[%s732 + $0x48] sm:$0xff]
    %v1939 = vld [vmem:[%s732 + $0x50] sm:$0xf]
    %v1941 = vsel %vm303, %v1927, 0
    %v1944 = vsel %vm303, %v1928, 0
    %v1947 = vsel %vm750, %v1939, 0
    %1949 = vmatpush.msra.mxu0 0.0
    %1950 = vmatpush.msra.mxu0 0.0
    %1951 = vmatpush.msra.mxu0 0.0
    %1952 = vmatpush.msra.mxu0 0.0
    %1953 = vmatpush.msra.mxu0 0.0
    %1954 = vmatpush.msra.mxu0 %v1947
    %1955 = vmatpush.msra.mxu0 %v1938
    %1956 = vmatpush.msra.mxu0 %v1937
    %1957 = vmatpush.msra.mxu0 %v1936
    %1958 = vmatpush.msra.mxu0 %v1935
    %1959 = vmatpush.msra.mxu0 %v1934
    %1960 = vmatpush.msra.mxu0 %v1933
    %1961 = vmatpush.msra.mxu0 %v1932
    %1962 = vmatpush.msra.mxu0 %v1931
    %1963 = vmatpush.msra.mxu0 %v1930
    %1964 = vmatpush.msra.mxu0 %v1929
    %1965 = vmatmul.f32.gmra.mxu0 %v1941
    %v1966 = vpop.f32.mrf.mxu0
    %v1967 = vadd.f32 0.0, %v1966
    %1968 = vmatmul.f32.gmra.mxu0 %v1944
    %v1969 = vpop.f32.mrf.mxu0
    %v1970 = vadd.f32 0.0, %v1969
    %1971 = vdwg.mxu0
    %v1973 = vsel %vm303, %v1914, 0
    %v1976 = vsel %vm303, %v1915, 0
    %v1979 = vsel %vm750, %v1926, 0
    %1981 = vmatpush.msra.mxu0 0.0
    %1982 = vmatpush.msra.mxu0 0.0
    %1983 = vmatpush.msra.mxu0 0.0
    %1984 = vmatpush.msra.mxu0 0.0
    %1985 = vmatpush.msra.mxu0 0.0
    %1986 = vmatpush.msra.mxu0 %v1979
    %1987 = vmatpush.msra.mxu0 %v1925
    %1988 = vmatpush.msra.mxu0 %v1924
    %1989 = vmatpush.msra.mxu0 %v1923
    %1990 = vmatpush.msra.mxu0 %v1922
    %1991 = vmatpush.msra.mxu0 %v1921
    %1992 = vmatpush.msra.mxu0 %v1920
    %1993 = vmatpush.msra.mxu0 %v1919
    %1994 = vmatpush.msra.mxu0 %v1918
    %1995 = vmatpush.msra.mxu0 %v1917
    %1996 = vmatpush.msra.mxu0 %v1916
    %1997 = vmatmul.f32.gmra.mxu0 %v1973
    %v1998 = vpop.f32.mrf.mxu0
    %v1999 = vadd.f32 %v1967, %v1998
    %2000 = vmatmul.f32.gmra.mxu0 %v1976
    %v2001 = vpop.f32.mrf.mxu0
    %v2002 = vadd.f32 %v1970, %v2001
    %2003 = vdwg.mxu0
    %v2004 = vld [vmem:[#allocation3 + $0x2] sm:$0xff]
    %v2005 = vld [vmem:[#allocation3 + $0xa] sm:$0x3]
    %v2006 = vld [vmem:[%s811] sm:$0xff]
    %v2007 = vld [vmem:[%s811 + $0x8] sm:$0xff]
    %v2008 = vld [vmem:[%s811 + $0x10] sm:$0xff]
    %v2009 = vld [vmem:[%s811 + $0x18] sm:$0xff]
    %v2010 = vld [vmem:[%s811 + $0x20] sm:$0xff]
    %v2011 = vld [vmem:[%s811 + $0x28] sm:$0xff]
    %v2012 = vld [vmem:[%s811 + $0x30] sm:$0xff]
    %v2013 = vld [vmem:[%s811 + $0x38] sm:$0xff]
    %v2014 = vld [vmem:[%s811 + $0x40] sm:$0xff]
    %v2015 = vld [vmem:[%s811 + $0x48] sm:$0xff]
    %v2016 = vld [vmem:[%s811 + $0x50] sm:$0xf]
    %v2018 = vsel %vm303, %v2004, 0
    %v2021 = vsel %vm303, %v2005, 0
    %v2024 = vsel %vm750, %v2016, 0
    %2026 = vmatpush.msra.mxu0 0.0
    %2027 = vmatpush.msra.mxu0 0.0
    %2028 = vmatpush.msra.mxu0 0.0
    %2029 = vmatpush.msra.mxu0 0.0
    %2030 = vmatpush.msra.mxu0 0.0
    %2031 = vmatpush.msra.mxu0 %v2024
    %2032 = vmatpush.msra.mxu0 %v2015
    %2033 = vmatpush.msra.mxu0 %v2014
    %2034 = vmatpush.msra.mxu0 %v2013
    %2035 = vmatpush.msra.mxu0 %v2012
    %2036 = vmatpush.msra.mxu0 %v2011
    %2037 = vmatpush.msra.mxu0 %v2010
    %2038 = vmatpush.msra.mxu0 %v2009
    %2039 = vmatpush.msra.mxu0 %v2008
    %2040 = vmatpush.msra.mxu0 %v2007
    %2041 = vmatpush.msra.mxu0 %v2006
    %2042 = vmatmul.f32.gmra.mxu0 %v2018
    %v2043 = vpop.f32.mrf.mxu0
    %v2044 = vadd.f32 0.0, %v2043
    %2045 = vmatmul.f32.gmra.mxu0 %v2021
    %v2046 = vpop.f32.mrf.mxu0
    %v2047 = vadd.f32 0.0, %v2046
    %2048 = vdwg.mxu0
    %v2049 = vadd.f32 %v1999, %v2044
    %v2050 = vadd.f32 %v2002, %v2047
    %v2051 = vld [vmem:[#allocation3 + $0x3] sm:$0xff]
    %v2052 = vld [vmem:[#allocation3 + $0xb] sm:$0x3]
    %v2053 = vld [vmem:[%s859] sm:$0xff]
    %v2054 = vld [vmem:[%s859 + $0x8] sm:$0xff]
    %v2055 = vld [vmem:[%s859 + $0x10] sm:$0xff]
    %v2056 = vld [vmem:[%s859 + $0x18] sm:$0xff]
    %v2057 = vld [vmem:[%s859 + $0x20] sm:$0xff]
    %v2058 = vld [vmem:[%s859 + $0x28] sm:$0xff]
    %v2059 = vld [vmem:[%s859 + $0x30] sm:$0xff]
    %v2060 = vld [vmem:[%s859 + $0x38] sm:$0xff]
    %v2061 = vld [vmem:[%s859 + $0x40] sm:$0xff]
    %v2062 = vld [vmem:[%s859 + $0x48] sm:$0xff]
    %v2063 = vld [vmem:[%s859 + $0x50] sm:$0xf]
    %v2065 = vsel %vm303, %v2051, 0
    %v2068 = vsel %vm303, %v2052, 0
    %v2071 = vsel %vm750, %v2063, 0
    %2073 = vmatpush.msra.mxu0 0.0
    %2074 = vmatpush.msra.mxu0 0.0
    %2075 = vmatpush.msra.mxu0 0.0
    %2076 = vmatpush.msra.mxu0 0.0
    %2077 = vmatpush.msra.mxu0 0.0
    %2078 = vmatpush.msra.mxu0 %v2071
    %2079 = vmatpush.msra.mxu0 %v2062
    %2080 = vmatpush.msra.mxu0 %v2061
    %2081 = vmatpush.msra.mxu0 %v2060
    %2082 = vmatpush.msra.mxu0 %v2059
    %2083 = vmatpush.msra.mxu0 %v2058
    %2084 = vmatpush.msra.mxu0 %v2057
    %2085 = vmatpush.msra.mxu0 %v2056
    %2086 = vmatpush.msra.mxu0 %v2055
    %2087 = vmatpush.msra.mxu0 %v2054
    %2088 = vmatpush.msra.mxu0 %v2053
    %2089 = vmatmul.f32.gmra.mxu0 %v2065
    %v2090 = vpop.f32.mrf.mxu0
    %v2091 = vadd.f32 0.0, %v2090
    %2092 = vmatmul.f32.gmra.mxu0 %v2068
    %v2093 = vpop.f32.mrf.mxu0
    %v2094 = vadd.f32 0.0, %v2093
    %2095 = vdwg.mxu0
    %v2096 = vadd.f32 %v2049, %v2091
    %v2097 = vadd.f32 %v2050, %v2094
    %v2098 = vld [vmem:[#allocation3 + $0x4] sm:$0xff]
    %v2099 = vld [vmem:[#allocation3 + $0xc] sm:$0x3]
    %v2100 = vld [vmem:[%s907] sm:$0xff]
    %v2101 = vld [vmem:[%s907 + $0x8] sm:$0xff]
    %v2102 = vld [vmem:[%s907 + $0x10] sm:$0xff]
    %v2103 = vld [vmem:[%s907 + $0x18] sm:$0xff]
    %v2104 = vld [vmem:[%s907 + $0x20] sm:$0xff]
    %v2105 = vld [vmem:[%s907 + $0x28] sm:$0xff]
    %v2106 = vld [vmem:[%s907 + $0x30] sm:$0xff]
    %v2107 = vld [vmem:[%s907 + $0x38] sm:$0xff]
    %v2108 = vld [vmem:[%s907 + $0x40] sm:$0xff]
    %v2109 = vld [vmem:[%s907 + $0x48] sm:$0xff]
    %v2110 = vld [vmem:[%s907 + $0x50] sm:$0xf]
    %v2112 = vsel %vm303, %v2098, 0
    %v2115 = vsel %vm303, %v2099, 0
    %v2118 = vsel %vm750, %v2110, 0
    %2120 = vmatpush.msra.mxu0 0.0
    %2121 = vmatpush.msra.mxu0 0.0
    %2122 = vmatpush.msra.mxu0 0.0
    %2123 = vmatpush.msra.mxu0 0.0
    %2124 = vmatpush.msra.mxu0 0.0
    %2125 = vmatpush.msra.mxu0 %v2118
    %2126 = vmatpush.msra.mxu0 %v2109
    %2127 = vmatpush.msra.mxu0 %v2108
    %2128 = vmatpush.msra.mxu0 %v2107
    %2129 = vmatpush.msra.mxu0 %v2106
    %2130 = vmatpush.msra.mxu0 %v2105
    %2131 = vmatpush.msra.mxu0 %v2104
    %2132 = vmatpush.msra.mxu0 %v2103
    %2133 = vmatpush.msra.mxu0 %v2102
    %2134 = vmatpush.msra.mxu0 %v2101
    %2135 = vmatpush.msra.mxu0 %v2100
    %2136 = vmatmul.f32.gmra.mxu0 %v2112
    %v2137 = vpop.f32.mrf.mxu0
    %v2138 = vadd.f32 0.0, %v2137
    %2139 = vmatmul.f32.gmra.mxu0 %v2115
    %v2140 = vpop.f32.mrf.mxu0
    %v2141 = vadd.f32 0.0, %v2140
    %2142 = vdwg.mxu0
    %v2143 = vadd.f32 %v2096, %v2138
    %v2144 = vadd.f32 %v2097, %v2141
    %2145 = vst.msk [vmem:[#allocation4] sm:$0xff] %vm953, %v2143
    %2146 = vst.msk [vmem:[#allocation4 + $0x8] sm:$0x3] %vm955, %v2144
    %v2147 = vld [vmem:[#allocation3] sm:$0xff]
    %v2148 = vld [vmem:[#allocation3 + $0x8] sm:$0x3]
    %v2149 = vld [vmem:[%s959] sm:$0xff]
    %v2150 = vld [vmem:[%s959 + $0x8] sm:$0xff]
    %v2151 = vld [vmem:[%s959 + $0x10] sm:$0xff]
    %v2152 = vld [vmem:[%s959 + $0x18] sm:$0xff]
    %v2153 = vld [vmem:[%s959 + $0x20] sm:$0xff]
    %v2154 = vld [vmem:[%s959 + $0x28] sm:$0xff]
    %v2155 = vld [vmem:[%s959 + $0x30] sm:$0xff]
    %v2156 = vld [vmem:[%s959 + $0x38] sm:$0xff]
    %v2157 = vld [vmem:[%s959 + $0x40] sm:$0xff]
    %v2158 = vld [vmem:[%s959 + $0x48] sm:$0xff]
    %v2159 = vld [vmem:[%s959 + $0x50] sm:$0xf]
    %v2160 = vld [vmem:[#allocation3 + $0x1] sm:$0xff]
    %v2161 = vld [vmem:[#allocation3 + $0x9] sm:$0x3]
    %v2162 = vld [vmem:[%s973] sm:$0xff]
    %v2163 = vld [vmem:[%s973 + $0x8] sm:$0xff]
    %v2164 = vld [vmem:[%s973 + $0x10] sm:$0xff]
    %v2165 = vld [vmem:[%s973 + $0x18] sm:$0xff]
    %v2166 = vld [vmem:[%s973 + $0x20] sm:$0xff]
    %v2167 = vld [vmem:[%s973 + $0x28] sm:$0xff]
    %v2168 = vld [vmem:[%s973 + $0x30] sm:$0xff]
    %v2169 = vld [vmem:[%s973 + $0x38] sm:$0xff]
    %v2170 = vld [vmem:[%s973 + $0x40] sm:$0xff]
    %v2171 = vld [vmem:[%s973 + $0x48] sm:$0xff]
    %v2172 = vld [vmem:[%s973 + $0x50] sm:$0xf]
    %v2174 = vsel %vm303, %v2160, 0
    %v2177 = vsel %vm303, %v2161, 0
    %v2180 = vsel %vm750, %v2172, 0
    %2182 = vmatpush.msra.mxu0 0.0
    %2183 = vmatpush.msra.mxu0 0.0
    %2184 = vmatpush.msra.mxu0 0.0
    %2185 = vmatpush.msra.mxu0 0.0
    %2186 = vmatpush.msra.mxu0 0.0
    %2187 = vmatpush.msra.mxu0 %v2180
    %2188 = vmatpush.msra.mxu0 %v2171
    %2189 = vmatpush.msra.mxu0 %v2170
    %2190 = vmatpush.msra.mxu0 %v2169
    %2191 = vmatpush.msra.mxu0 %v2168
    %2192 = vmatpush.msra.mxu0 %v2167
    %2193 = vmatpush.msra.mxu0 %v2166
    %2194 = vmatpush.msra.mxu0 %v2165
    %2195 = vmatpush.msra.mxu0 %v2164
    %2196 = vmatpush.msra.mxu0 %v2163
    %2197 = vmatpush.msra.mxu0 %v2162
    %2198 = vmatmul.f32.gmra.mxu0 %v2174
    %v2199 = vpop.f32.mrf.mxu0
    %v2200 = vadd.f32 0.0, %v2199
    %2201 = vmatmul.f32.gmra.mxu0 %v2177
    %v2202 = vpop.f32.mrf.mxu0
    %v2203 = vadd.f32 0.0, %v2202
    %2204 = vdwg.mxu0
    %v2206 = vsel %vm303, %v2147, 0
    %v2209 = vsel %vm303, %v2148, 0
    %v2212 = vsel %vm750, %v2159, 0
    %2214 = vmatpush.msra.mxu0 0.0
    %2215 = vmatpush.msra.mxu0 0.0
    %2216 = vmatpush.msra.mxu0 0.0
    %2217 = vmatpush.msra.mxu0 0.0
    %2218 = vmatpush.msra.mxu0 0.0
    %2219 = vmatpush.msra.mxu0 %v2212
    %2220 = vmatpush.msra.mxu0 %v2158
    %2221 = vmatpush.msra.mxu0 %v2157
    %2222 = vmatpush.msra.mxu0 %v2156
    %2223 = vmatpush.msra.mxu0 %v2155
    %2224 = vmatpush.msra.mxu0 %v2154
    %2225 = vmatpush.msra.mxu0 %v2153
    %2226 = vmatpush.msra.mxu0 %v2152
    %2227 = vmatpush.msra.mxu0 %v2151
    %2228 = vmatpush.msra.mxu0 %v2150
    %2229 = vmatpush.msra.mxu0 %v2149
    %2230 = vmatmul.f32.gmra.mxu0 %v2206
    %v2231 = vpop.f32.mrf.mxu0
    %v2232 = vadd.f32 %v2200, %v2231
    %2233 = vmatmul.f32.gmra.mxu0 %v2209
    %v2234 = vpop.f32.mrf.mxu0
    %v2235 = vadd.f32 %v2203, %v2234
    %2236 = vdwg.mxu0
    %v2237 = vld [vmem:[#allocation3 + $0x2] sm:$0xff]
    %v2238 = vld [vmem:[#allocation3 + $0xa] sm:$0x3]
    %v2239 = vld [vmem:[%s1051] sm:$0xff]
    %v2240 = vld [vmem:[%s1051 + $0x8] sm:$0xff]
    %v2241 = vld [vmem:[%s1051 + $0x10] sm:$0xff]
    %v2242 = vld [vmem:[%s1051 + $0x18] sm:$0xff]
    %v2243 = vld [vmem:[%s1051 + $0x20] sm:$0xff]
    %v2244 = vld [vmem:[%s1051 + $0x28] sm:$0xff]
    %v2245 = vld [vmem:[%s1051 + $0x30] sm:$0xff]
    %v2246 = vld [vmem:[%s1051 + $0x38] sm:$0xff]
    %v2247 = vld [vmem:[%s1051 + $0x40] sm:$0xff]
    %v2248 = vld [vmem:[%s1051 + $0x48] sm:$0xff]
    %v2249 = vld [vmem:[%s1051 + $0x50] sm:$0xf]
    %v2251 = vsel %vm303, %v2237, 0
    %v2254 = vsel %vm303, %v2238, 0
    %v2257 = vsel %vm750, %v2249, 0
    %2259 = vmatpush.msra.mxu0 0.0
    %2260 = vmatpush.msra.mxu0 0.0
    %2261 = vmatpush.msra.mxu0 0.0
    %2262 = vmatpush.msra.mxu0 0.0
    %2263 = vmatpush.msra.mxu0 0.0
    %2264 = vmatpush.msra.mxu0 %v2257
    %2265 = vmatpush.msra.mxu0 %v2248
    %2266 = vmatpush.msra.mxu0 %v2247
    %2267 = vmatpush.msra.mxu0 %v2246
    %2268 = vmatpush.msra.mxu0 %v2245
    %2269 = vmatpush.msra.mxu0 %v2244
    %2270 = vmatpush.msra.mxu0 %v2243
    %2271 = vmatpush.msra.mxu0 %v2242
    %2272 = vmatpush.msra.mxu0 %v2241
    %2273 = vmatpush.msra.mxu0 %v2240
    %2274 = vmatpush.msra.mxu0 %v2239
    %2275 = vmatmul.f32.gmra.mxu0 %v2251
    %v2276 = vpop.f32.mrf.mxu0
    %v2277 = vadd.f32 0.0, %v2276
    %2278 = vmatmul.f32.gmra.mxu0 %v2254
    %v2279 = vpop.f32.mrf.mxu0
    %v2280 = vadd.f32 0.0, %v2279
    %2281 = vdwg.mxu0
    %v2282 = vadd.f32 %v2232, %v2277
    %v2283 = vadd.f32 %v2235, %v2280
    %v2284 = vld [vmem:[#allocation3 + $0x3] sm:$0xff]
    %v2285 = vld [vmem:[#allocation3 + $0xb] sm:$0x3]
    %v2286 = vld [vmem:[%s1099] sm:$0xff]
    %v2287 = vld [vmem:[%s1099 + $0x8] sm:$0xff]
    %v2288 = vld [vmem:[%s1099 + $0x10] sm:$0xff]
    %v2289 = vld [vmem:[%s1099 + $0x18] sm:$0xff]
    %v2290 = vld [vmem:[%s1099 + $0x20] sm:$0xff]
    %v2291 = vld [vmem:[%s1099 + $0x28] sm:$0xff]
    %v2292 = vld [vmem:[%s1099 + $0x30] sm:$0xff]
    %v2293 = vld [vmem:[%s1099 + $0x38] sm:$0xff]
    %v2294 = vld [vmem:[%s1099 + $0x40] sm:$0xff]
    %v2295 = vld [vmem:[%s1099 + $0x48] sm:$0xff]
    %v2296 = vld [vmem:[%s1099 + $0x50] sm:$0xf]
    %v2298 = vsel %vm303, %v2284, 0
    %v2301 = vsel %vm303, %v2285, 0
    %v2304 = vsel %vm750, %v2296, 0
    %2306 = vmatpush.msra.mxu0 0.0
    %2307 = vmatpush.msra.mxu0 0.0
    %2308 = vmatpush.msra.mxu0 0.0
    %2309 = vmatpush.msra.mxu0 0.0
    %2310 = vmatpush.msra.mxu0 0.0
    %2311 = vmatpush.msra.mxu0 %v2304
    %2312 = vmatpush.msra.mxu0 %v2295
    %2313 = vmatpush.msra.mxu0 %v2294
    %2314 = vmatpush.msra.mxu0 %v2293
    %2315 = vmatpush.msra.mxu0 %v2292
    %2316 = vmatpush.msra.mxu0 %v2291
    %2317 = vmatpush.msra.mxu0 %v2290
    %2318 = vmatpush.msra.mxu0 %v2289
    %2319 = vmatpush.msra.mxu0 %v2288
    %2320 = vmatpush.msra.mxu0 %v2287
    %2321 = vmatpush.msra.mxu0 %v2286
    %2322 = vmatmul.f32.gmra.mxu0 %v2298
    %v2323 = vpop.f32.mrf.mxu0
    %v2324 = vadd.f32 0.0, %v2323
    %2325 = vmatmul.f32.gmra.mxu0 %v2301
    %v2326 = vpop.f32.mrf.mxu0
    %v2327 = vadd.f32 0.0, %v2326
    %2328 = vdwg.mxu0
    %v2329 = vadd.f32 %v2282, %v2324
    %v2330 = vadd.f32 %v2283, %v2327
    %v2331 = vld [vmem:[#allocation3 + $0x4] sm:$0xff]
    %v2332 = vld [vmem:[#allocation3 + $0xc] sm:$0x3]
    %v2333 = vld [vmem:[%s1147] sm:$0xff]
    %v2334 = vld [vmem:[%s1147 + $0x8] sm:$0xff]
    %v2335 = vld [vmem:[%s1147 + $0x10] sm:$0xff]
    %v2336 = vld [vmem:[%s1147 + $0x18] sm:$0xff]
    %v2337 = vld [vmem:[%s1147 + $0x20] sm:$0xff]
    %v2338 = vld [vmem:[%s1147 + $0x28] sm:$0xff]
    %v2339 = vld [vmem:[%s1147 + $0x30] sm:$0xff]
    %v2340 = vld [vmem:[%s1147 + $0x38] sm:$0xff]
    %v2341 = vld [vmem:[%s1147 + $0x40] sm:$0xff]
    %v2342 = vld [vmem:[%s1147 + $0x48] sm:$0xff]
    %v2343 = vld [vmem:[%s1147 + $0x50] sm:$0xf]
    %v2345 = vsel %vm303, %v2331, 0
    %v2348 = vsel %vm303, %v2332, 0
    %v2351 = vsel %vm750, %v2343, 0
    %2353 = vmatpush.msra.mxu0 0.0
    %2354 = vmatpush.msra.mxu0 0.0
    %2355 = vmatpush.msra.mxu0 0.0
    %2356 = vmatpush.msra.mxu0 0.0
    %2357 = vmatpush.msra.mxu0 0.0
    %2358 = vmatpush.msra.mxu0 %v2351
    %2359 = vmatpush.msra.mxu0 %v2342
    %2360 = vmatpush.msra.mxu0 %v2341
    %2361 = vmatpush.msra.mxu0 %v2340
    %2362 = vmatpush.msra.mxu0 %v2339
    %2363 = vmatpush.msra.mxu0 %v2338
    %2364 = vmatpush.msra.mxu0 %v2337
    %2365 = vmatpush.msra.mxu0 %v2336
    %2366 = vmatpush.msra.mxu0 %v2335
    %2367 = vmatpush.msra.mxu0 %v2334
    %2368 = vmatpush.msra.mxu0 %v2333
    %2369 = vmatmul.f32.gmra.mxu0 %v2345
    %v2370 = vpop.f32.mrf.mxu0
    %v2371 = vadd.f32 0.0, %v2370
    %2372 = vmatmul.f32.gmra.mxu0 %v2348
    %v2373 = vpop.f32.mrf.mxu0
    %v2374 = vadd.f32 0.0, %v2373
    %2375 = vdwg.mxu0
    %v2376 = vadd.f32 %v2329, %v2371
    %v2377 = vadd.f32 %v2330, %v2374
    %2378 = vst.msk [vmem:[%s1193] sm:$0xff] %vm953, %v2376
    %2379 = vst.msk [vmem:[%s1193 + $0x8] sm:$0x3] %vm955, %v2377
    %v2380 = vld [vmem:[#allocation4] sm:$0x1]
    %v2381 = vld [vmem:[#allocation4 + $0x1] sm:$0x1]
    %v2382 = vmax.f32 %v2380, %v2381
    %v2383 = vld [vmem:[%s1193] sm:$0x1]
    %v2384 = vld [vmem:[%s1193 + $0x1] sm:$0x1]
    %v2385 = vmax.f32 %v2383, %v2384
    %v2386 = vmax.f32 %v2382, %v2385
    %v2387 = vadd.f32 %v2386, %v40
    %v2388 = vmax.f32 %v2387, 0.0
    %2389 = vst.msk [vmem:[#allocation5 + $0x1] sm:$0x1] %vm1205, %v2388
    %v2390 = vld [vmem:[#allocation4 + $0x2] sm:$0x1]
    %v2391 = vld [vmem:[#allocation4 + $0x3] sm:$0x1]
    %v2392 = vmax.f32 %v2390, %v2391
    %v2393 = vld [vmem:[%s1193 + $0x2] sm:$0x1]
    %v2394 = vld [vmem:[%s1193 + $0x3] sm:$0x1]
    %v2395 = vmax.f32 %v2393, %v2394
    %v2396 = vmax.f32 %v2392, %v2395
    %v2397 = vadd.f32 %v2396, %v40
    %v2398 = vmax.f32 %v2397, 0.0
    %2399 = vst.msk [vmem:[%s1216 + $0x1] sm:$0x1] %vm1205, %v2398
    %v2400 = vld [vmem:[#allocation4 + $0x4] sm:$0x1]
    %v2401 = vld [vmem:[#allocation4 + $0x5] sm:$0x1]
    %v2402 = vmax.f32 %v2400, %v2401
    %v2403 = vld [vmem:[%s1193 + $0x4] sm:$0x1]
    %v2404 = vld [vmem:[%s1193 + $0x5] sm:$0x1]
    %v2405 = vmax.f32 %v2403, %v2404
    %v2406 = vmax.f32 %v2402, %v2405
    %v2407 = vadd.f32 %v2406, %v40
    %v2408 = vmax.f32 %v2407, 0.0
    %2409 = vst.msk [vmem:[%s1227 + $0x1] sm:$0x1] %vm1205, %v2408
    %v2410 = vld [vmem:[#allocation4 + $0x6] sm:$0x1]
    %v2411 = vld [vmem:[#allocation4 + $0x7] sm:$0x1]
    %v2412 = vmax.f32 %v2410, %v2411
    %v2413 = vld [vmem:[%s1193 + $0x6] sm:$0x1]
    %v2414 = vld [vmem:[%s1193 + $0x7] sm:$0x1]
    %v2415 = vmax.f32 %v2413, %v2414
    %v2416 = vmax.f32 %v2412, %v2415
    %v2417 = vadd.f32 %v2416, %v40
    %v2418 = vmax.f32 %v2417, 0.0
    %2419 = vst.msk [vmem:[%s1238 + $0x1] sm:$0x1] %vm1205, %v2418
    %v2420 = vld [vmem:[#allocation4 + $0x8] sm:$0x1]
    %v2421 = vld [vmem:[#allocation4 + $0x9] sm:$0x1]
    %v2422 = vmax.f32 %v2420, %v2421
    %v2423 = vld [vmem:[%s1193 + $0x8] sm:$0x1]
    %v2424 = vld [vmem:[%s1193 + $0x9] sm:$0x1]
    %v2425 = vmax.f32 %v2423, %v2424
    %v2426 = vmax.f32 %v2422, %v2425
    %v2427 = vadd.f32 %v2426, %v40
    %v2428 = vmax.f32 %v2427, 0.0
    %2429 = vst.msk [vmem:[%s1249 + $0x1] sm:$0x1] %vm1205, %v2428
    %v2430 = vld [vmem:[#allocation5] sm:$0x3]
    %v2431 = vld [vmem:[%s5] sm:$0xff]
    %v2432 = vld [vmem:[%s5 + $0x8] sm:$0xff]
    %v2433 = vld [vmem:[%s5 + $0x10] sm:$0xff]
    %v2434 = vld [vmem:[%s5 + $0x18] sm:$0xff]
    %v2435 = vld [vmem:[%s5 + $0x20] sm:$0xff]
    %v2436 = vld [vmem:[%s5 + $0x28] sm:$0xff]
    %v2437 = vld [vmem:[%s5 + $0x30] sm:$0xff]
    %v2438 = vld [vmem:[%s5 + $0x38] sm:$0xff]
    %v2439 = vld [vmem:[%s5 + $0x40] sm:$0xff]
    %v2440 = vld [vmem:[%s5 + $0x48] sm:$0xff]
    %v2441 = vld [vmem:[%s1216] sm:$0x3]
    %s2442 = scalar_lea.vmem %s5, 80
    %v2443 = vld [vmem:[%s2442] sm:$0xff]
    %v2444 = vld [vmem:[%s2442 + $0x8] sm:$0xff]
    %v2445 = vld [vmem:[%s2442 + $0x10] sm:$0xff]
    %v2446 = vld [vmem:[%s2442 + $0x18] sm:$0xff]
    %v2447 = vld [vmem:[%s2442 + $0x20] sm:$0xff]
    %v2448 = vld [vmem:[%s2442 + $0x28] sm:$0xff]
    %v2449 = vld [vmem:[%s2442 + $0x30] sm:$0xff]
    %v2450 = vld [vmem:[%s2442 + $0x38] sm:$0xff]
    %v2451 = vld [vmem:[%s2442 + $0x40] sm:$0xff]
    %v2452 = vld [vmem:[%s2442 + $0x48] sm:$0xff]
    %v2454 = vsel %vm953, %v2441, 0
    %2456 = vmatpush.msra.mxu0 0.0
    %2457 = vmatpush.msra.mxu0 0.0
    %2458 = vmatpush.msra.mxu0 0.0
    %2459 = vmatpush.msra.mxu0 0.0
    %2460 = vmatpush.msra.mxu0 0.0
    %2461 = vmatpush.msra.mxu0 0.0
    %2462 = vmatpush.msra.mxu0 %v2452
    %2463 = vmatpush.msra.mxu0 %v2451
    %2464 = vmatpush.msra.mxu0 %v2450
    %2465 = vmatpush.msra.mxu0 %v2449
    %2466 = vmatpush.msra.mxu0 %v2448
    %2467 = vmatpush.msra.mxu0 %v2447
    %2468 = vmatpush.msra.mxu0 %v2446
    %2469 = vmatpush.msra.mxu0 %v2445
    %2470 = vmatpush.msra.mxu0 %v2444
    %2471 = vmatpush.msra.mxu0 %v2443
    %2472 = vmatmul.f32.gmra.mxu0 %v2454
    %v2473 = vpop.f32.mrf.mxu0
    %v2474 = vadd.f32 0.0, %v2473
    %2475 = vdwg.mxu0
    %v2477 = vsel %vm953, %v2430, 0
    %2479 = vmatpush.msra.mxu0 0.0
    %2480 = vmatpush.msra.mxu0 0.0
    %2481 = vmatpush.msra.mxu0 0.0
    %2482 = vmatpush.msra.mxu0 0.0
    %2483 = vmatpush.msra.mxu0 0.0
    %2484 = vmatpush.msra.mxu0 0.0
    %2485 = vmatpush.msra.mxu0 %v2440
    %2486 = vmatpush.msra.mxu0 %v2439
    %2487 = vmatpush.msra.mxu0 %v2438
    %2488 = vmatpush.msra.mxu0 %v2437
    %2489 = vmatpush.msra.mxu0 %v2436
    %2490 = vmatpush.msra.mxu0 %v2435
    %2491 = vmatpush.msra.mxu0 %v2434
    %2492 = vmatpush.msra.mxu0 %v2433
    %2493 = vmatpush.msra.mxu0 %v2432
    %2494 = vmatpush.msra.mxu0 %v2431
    %2495 = vmatmul.f32.gmra.mxu0 %v2477
    %v2496 = vpop.f32.mrf.mxu0
    %v2497 = vadd.f32 %v2474, %v2496
    %2498 = vdwg.mxu0
    %v2499 = vld [vmem:[%s1227] sm:$0x3]
    %s2500 = scalar_lea.vmem %s5, 160
    %v2501 = vld [vmem:[%s2500] sm:$0xff]
    %v2502 = vld [vmem:[%s2500 + $0x8] sm:$0xff]
    %v2503 = vld [vmem:[%s2500 + $0x10] sm:$0xff]
    %v2504 = vld [vmem:[%s2500 + $0x18] sm:$0xff]
    %v2505 = vld [vmem:[%s2500 + $0x20] sm:$0xff]
    %v2506 = vld [vmem:[%s2500 + $0x28] sm:$0xff]
    %v2507 = vld [vmem:[%s2500 + $0x30] sm:$0xff]
    %v2508 = vld [vmem:[%s2500 + $0x38] sm:$0xff]
    %v2509 = vld [vmem:[%s2500 + $0x40] sm:$0xff]
    %v2510 = vld [vmem:[%s2500 + $0x48] sm:$0xff]
    %v2512 = vsel %vm953, %v2499, 0
    %2514 = vmatpush.msra.mxu0 0.0
    %2515 = vmatpush.msra.mxu0 0.0
    %2516 = vmatpush.msra.mxu0 0.0
    %2517 = vmatpush.msra.mxu0 0.0
    %2518 = vmatpush.msra.mxu0 0.0
    %2519 = vmatpush.msra.mxu0 0.0
    %2520 = vmatpush.msra.mxu0 %v2510
    %2521 = vmatpush.msra.mxu0 %v2509
    %2522 = vmatpush.msra.mxu0 %v2508
    %2523 = vmatpush.msra.mxu0 %v2507
    %2524 = vmatpush.msra.mxu0 %v2506
    %2525 = vmatpush.msra.mxu0 %v2505
    %2526 = vmatpush.msra.mxu0 %v2504
    %2527 = vmatpush.msra.mxu0 %v2503
    %2528 = vmatpush.msra.mxu0 %v2502
    %2529 = vmatpush.msra.mxu0 %v2501
    %2530 = vmatmul.f32.gmra.mxu0 %v2512
    %v2531 = vpop.f32.mrf.mxu0
    %v2532 = vadd.f32 0.0, %v2531
    %2533 = vdwg.mxu0
    %v2534 = vadd.f32 %v2497, %v2532
    %v2535 = vld [vmem:[%s1238] sm:$0x3]
    %s2536 = scalar_lea.vmem %s5, 240
    %v2537 = vld [vmem:[%s2536] sm:$0xff]
    %v2538 = vld [vmem:[%s2536 + $0x8] sm:$0xff]
    %v2539 = vld [vmem:[%s2536 + $0x10] sm:$0xff]
    %v2540 = vld [vmem:[%s2536 + $0x18] sm:$0xff]
    %v2541 = vld [vmem:[%s2536 + $0x20] sm:$0xff]
    %v2542 = vld [vmem:[%s2536 + $0x28] sm:$0xff]
    %v2543 = vld [vmem:[%s2536 + $0x30] sm:$0xff]
    %v2544 = vld [vmem:[%s2536 + $0x38] sm:$0xff]
    %v2545 = vld [vmem:[%s2536 + $0x40] sm:$0xff]
    %v2546 = vld [vmem:[%s2536 + $0x48] sm:$0xff]
    %v2548 = vsel %vm953, %v2535, 0
    %2550 = vmatpush.msra.mxu0 0.0
    %2551 = vmatpush.msra.mxu0 0.0
    %2552 = vmatpush.msra.mxu0 0.0
    %2553 = vmatpush.msra.mxu0 0.0
    %2554 = vmatpush.msra.mxu0 0.0
    %2555 = vmatpush.msra.mxu0 0.0
    %2556 = vmatpush.msra.mxu0 %v2546
    %2557 = vmatpush.msra.mxu0 %v2545
    %2558 = vmatpush.msra.mxu0 %v2544
    %2559 = vmatpush.msra.mxu0 %v2543
    %2560 = vmatpush.msra.mxu0 %v2542
    %2561 = vmatpush.msra.mxu0 %v2541
    %2562 = vmatpush.msra.mxu0 %v2540
    %2563 = vmatpush.msra.mxu0 %v2539
    %2564 = vmatpush.msra.mxu0 %v2538
    %2565 = vmatpush.msra.mxu0 %v2537
    %2566 = vmatmul.f32.gmra.mxu0 %v2548
    %v2567 = vpop.f32.mrf.mxu0
    %v2568 = vadd.f32 0.0, %v2567
    %2569 = vdwg.mxu0
    %v2570 = vadd.f32 %v2534, %v2568
    %v2571 = vld [vmem:[%s1249] sm:$0x3]
    %s2572 = scalar_lea.vmem %s5, 320
    %v2573 = vld [vmem:[%s2572] sm:$0xff]
    %v2574 = vld [vmem:[%s2572 + $0x8] sm:$0xff]
    %v2575 = vld [vmem:[%s2572 + $0x10] sm:$0xff]
    %v2576 = vld [vmem:[%s2572 + $0x18] sm:$0xff]
    %v2577 = vld [vmem:[%s2572 + $0x20] sm:$0xff]
    %v2578 = vld [vmem:[%s2572 + $0x28] sm:$0xff]
    %v2579 = vld [vmem:[%s2572 + $0x30] sm:$0xff]
    %v2580 = vld [vmem:[%s2572 + $0x38] sm:$0xff]
    %v2581 = vld [vmem:[%s2572 + $0x40] sm:$0xff]
    %v2582 = vld [vmem:[%s2572 + $0x48] sm:$0xff]
    %v2584 = vsel %vm953, %v2571, 0
    %2586 = vmatpush.msra.mxu0 0.0
    %2587 = vmatpush.msra.mxu0 0.0
    %2588 = vmatpush.msra.mxu0 0.0
    %2589 = vmatpush.msra.mxu0 0.0
    %2590 = vmatpush.msra.mxu0 0.0
    %2591 = vmatpush.msra.mxu0 0.0
    %2592 = vmatpush.msra.mxu0 %v2582
    %2593 = vmatpush.msra.mxu0 %v2581
    %2594 = vmatpush.msra.mxu0 %v2580
    %2595 = vmatpush.msra.mxu0 %v2579
    %2596 = vmatpush.msra.mxu0 %v2578
    %2597 = vmatpush.msra.mxu0 %v2577
    %2598 = vmatpush.msra.mxu0 %v2576
    %2599 = vmatpush.msra.mxu0 %v2575
    %2600 = vmatpush.msra.mxu0 %v2574
    %2601 = vmatpush.msra.mxu0 %v2573
    %2602 = vmatmul.f32.gmra.mxu0 %v2584
    %v2603 = vpop.f32.mrf.mxu0
    %v2604 = vadd.f32 0.0, %v2603
    %2605 = vdwg.mxu0
    %v2606 = vadd.f32 %v2570, %v2604
    %v2607 = vld [vmem:[%s6] sm:$0x1]
    %v2609 = vperm.slane %v2607, 0
    %v2611 = vadd.f32 %v2606, %v2609
    %v2612 = vmax.f32 %v2611, 0.0
    %v2613 = vld [vmem:[%s7] sm:$0xff]
    %v2614 = vld [vmem:[%s7 + $0x8] sm:$0xff]
    %v2615 = vld [vmem:[%s7 + $0x10] sm:$0xff]
    %v2616 = vld [vmem:[%s7 + $0x18] sm:$0xff]
    %v2617 = vld [vmem:[%s7 + $0x20] sm:$0xff]
    %v2618 = vld [vmem:[%s7 + $0x28] sm:$0xff]
    %v2619 = vld [vmem:[%s7 + $0x30] sm:$0xff]
    %v2620 = vld [vmem:[%s7 + $0x38] sm:$0xff]
    %v2621 = vld [vmem:[%s7 + $0x40] sm:$0xff]
    %v2622 = vld [vmem:[%s7 + $0x48] sm:$0xff]
    %v2623 = vld [vmem:[%s7 + $0x50] sm:$0xff]
    %v2624 = vld [vmem:[%s7 + $0x58] sm:$0xff]
    %v2625 = vld [vmem:[%s7 + $0x60] sm:$0xff]
    %v2626 = vld [vmem:[%s7 + $0x68] sm:$0xff]
    %v2627 = vld [vmem:[%s7 + $0x70] sm:$0xff]
    %v2628 = vld [vmem:[%s7 + $0x78] sm:$0xff]
    %v2629 = vld [vmem:[%s8] sm:$0x1]
    %v2631 = vperm.slane %v2629, 0
    %2633 = vmatpush.msra.mxu0 %v2628
    %2634 = vmatpush.msra.mxu0 %v2627
    %2635 = vmatpush.msra.mxu0 %v2626
    %2636 = vmatpush.msra.mxu0 %v2625
    %2637 = vmatpush.msra.mxu0 %v2624
    %2638 = vmatpush.msra.mxu0 %v2623
    %2639 = vmatpush.msra.mxu0 %v2622
    %2640 = vmatpush.msra.mxu0 %v2621
    %2641 = vmatpush.msra.mxu0 %v2620
    %2642 = vmatpush.msra.mxu0 %v2619
    %2643 = vmatpush.msra.mxu0 %v2618
    %2644 = vmatpush.msra.mxu0 %v2617
    %2645 = vmatpush.msra.mxu0 %v2616
    %2646 = vmatpush.msra.mxu0 %v2615
    %2647 = vmatpush.msra.mxu0 %v2614
    %2648 = vmatpush.msra.mxu0 %v2613
    %2649 = vmatmul.f32.gmra.mxu0 %v2612
    %v2650 = vpop.f32.mrf.mxu0
    %v2651 = vadd.f32 %v2631, %v2650
    %2652 = vdwg.mxu0
    %v2653 = vmax.f32 %v2651, 0.0
    %v2654 = vld [vmem:[%s9] sm:$0xff]
    %v2655 = vld [vmem:[%s9 + $0x8] sm:$0xff]
    %v2656 = vld [vmem:[%s9 + $0x10] sm:$0xff]
    %v2657 = vld [vmem:[%s9 + $0x18] sm:$0xff]
    %v2658 = vld [vmem:[%s9 + $0x20] sm:$0xff]
    %v2659 = vld [vmem:[%s9 + $0x28] sm:$0xff]
    %v2660 = vld [vmem:[%s9 + $0x30] sm:$0xff]
    %v2661 = vld [vmem:[%s9 + $0x38] sm:$0xff]
    %v2662 = vld [vmem:[%s9 + $0x40] sm:$0xff]
    %v2663 = vld [vmem:[%s9 + $0x48] sm:$0xff]
    %v2664 = vld [vmem:[%s9 + $0x50] sm:$0xff]
    %v2665 = vld [vmem:[%s9 + $0x58] sm:$0xff]
    %v2666 = vld [vmem:[%s9 + $0x60] sm:$0xff]
    %v2667 = vld [vmem:[%s9 + $0x68] sm:$0xff]
    %v2668 = vld [vmem:[%s9 + $0x70] sm:$0xff]
    %v2669 = vld [vmem:[%s9 + $0x78] sm:$0xff]
    %v2670 = vld [vmem:[%s10] sm:$0x1]
    %v2672 = vperm.slane %v2670, 0
    %2674 = vmatpush.msra.mxu0 %v2669
    %2675 = vmatpush.msra.mxu0 %v2668
    %2676 = vmatpush.msra.mxu0 %v2667
    %2677 = vmatpush.msra.mxu0 %v2666
    %2678 = vmatpush.msra.mxu0 %v2665
    %2679 = vmatpush.msra.mxu0 %v2664
    %2680 = vmatpush.msra.mxu0 %v2663
    %2681 = vmatpush.msra.mxu0 %v2662
    %2682 = vmatpush.msra.mxu0 %v2661
    %2683 = vmatpush.msra.mxu0 %v2660
    %2684 = vmatpush.msra.mxu0 %v2659
    %2685 = vmatpush.msra.mxu0 %v2658
    %2686 = vmatpush.msra.mxu0 %v2657
    %2687 = vmatpush.msra.mxu0 %v2656
    %2688 = vmatpush.msra.mxu0 %v2655
    %2689 = vmatpush.msra.mxu0 %v2654
    %2690 = vmatmul.f32.gmra.mxu0 %v2653
    %v2691 = vpop.f32.mrf.mxu0
    %v2692 = vadd.f32 %v2672, %v2691
    %2693 = vdwg.mxu0
    %2694 = vst [vmem:[#allocation6] sm:$0x3] %v2692
    // Predicated region
    $region46: #{lenet_forward.1} parent=1 // pred_check
      _
    $region47: #{lenet_forward.1} parent=1 // pred_check_branch
      %2696 = sbr.rel (0) target = $region49
    $region48: #{lenet_forward.1} parent=1 // pred_region
      %2698 = vsyncadd [#allocation7], 0
      %s2700 = sshll.u32 [#allocation6], 4
      %s2701 = int_to_ptr.vmem [resolvable:$true] %s2700
      %s2702 = sshll.u32 %s11, 4
      %s2703 = int_to_ptr.hbm [resolvable:$true] %s2702
      %2705 = dma.vmem_to_hbm [thread:$0]  %s2701, 32, %s2703, [#allocation7]
    $region49: #{lenet_forward.1} parent=1 // pred_fallthru
      _
    // Predicated region
    $region50: #{lenet_forward.1} parent=1 // pred_check
      _
    $region51: #{lenet_forward.1} parent=1 // pred_check_branch
      %2707 = sbr.rel (0) target = $region53
    $region52: #{lenet_forward.1} parent=1 // pred_region
      %2709 = dma.done [#allocation7], 32
    $region53: #{lenet_forward.1} parent=1 // pred_fallthru
      _
    %2710 = vsyncpa [#allocation7], 1

</llo_original>
